<compile_context>
chip_gen: v7x
topology: tpu7x:2x2x1
jax: 0.10.0
libtpu: 0.0.40
codegen_flags: <defaults>
</compile_context>

<pallas_src>
import jax
import jax.numpy as jnp
from jax.experimental import pallas as pl
from jax.experimental.pallas import tpu as pltpu

D_IN = 8              # critic input features
H    = 64             # true hidden width
HP   = 128            # packed hidden width: two 64-wide examples per row
LANE = 128
ROW_TILE = 8 * LANE   # packed-row tile granularity (output block rows % 8 == 0)


def _round_up(x, m):
    return ((x + m - 1) // m) * m


def _critic_kernel(x_ref, w1_ref, wh_ref, aux_ref, out_ref):
    """Full 4-layer MLP for one tile of 2-packed examples, lane-dense output.

    x_ref  : (tbp, 16)        bf16  packed rows: [example j | example j+half]
    w1_ref : (16, 128)        bf16  block-diagonal lnn1 weight
    wh_ref : (2, 128, 128)    bf16  block-diagonal [lnn1a, lnn1b] weights
    aux_ref: (8, 128)         f32   rows: b1|b1, b1a|b1a, b1b|b1b, w2|w2,
                                    b2 broadcast, 0, 0, 0
    out_ref: (2, tbp//128, 128) f32 out[0,r,l] = value(example r*128+l)
                                    out[1,r,l] = value(example half + r*128+l)
    """
    x = x_ref[...]                                    # (tbp, 16) bf16

    # Hoist the aux rows into locals once.
    b1  = aux_ref[0:1, :]
    b1a = aux_ref[1:2, :]
    b1b = aux_ref[2:3, :]
    w2r = aux_ref[3:4, :]
    b2  = aux_ref[4:5, :]

    # lnn1 (block-diagonal, 2 examples per 128-lane row) + relu
    h = jnp.dot(x, w1_ref[...], preferred_element_type=jnp.float32)
    h = jnp.maximum(h + b1, 0.0)

    # lnn1a + relu
    h = jnp.dot(h.astype(jnp.bfloat16), wh_ref[0],
                preferred_element_type=jnp.float32)
    h = jnp.maximum(h + b1a, 0.0)

    # lnn1b + relu
    h = jnp.dot(h.astype(jnp.bfloat16), wh_ref[1],
                preferred_element_type=jnp.float32)
    h = jnp.maximum(h + b1b, 0.0)

    # lnn2: per-example dot with w2 over the 64 real lanes of each half,
    # written as two lane-dense slabs (one value per lane).
    tbp = x_ref.shape[0]
    rows = tbp // LANE
    hw = (h * w2r).reshape(rows, LANE, HP)            # leading-dim split only
    y_lo = jnp.sum(hw[..., :H], axis=-1)              # (rows, 128)
    y_hi = jnp.sum(hw[..., H:], axis=-1)              # (rows, 128)
    out_ref[0, :, :] = y_lo + b2
    out_ref[1, :, :] = y_hi + b2


def init_params(key):
    """Deterministic init matching the torch module's layer shapes.

    Weights stored as (in_features, out_features); biases as (1, out_features).
    """
    ks = jax.random.split(key, 8)

    def lin(kw, kb, fan_in, fan_out):
        bound = 1.0 / jnp.sqrt(fan_in)
        w = jax.random.uniform(kw, (fan_in, fan_out), jnp.float32, -bound, bound)
        b = jax.random.uniform(kb, (1, fan_out), jnp.float32, -bound, bound)
        return w, b

    w1,  b1  = lin(ks[0], ks[1], D_IN, H)
    w1a, b1a = lin(ks[2], ks[3], H, H)
    w1b, b1b = lin(ks[4], ks[5], H, H)
    w2,  b2  = lin(ks[6], ks[7], H, 1)
    return (w1, b1, w1a, b1a, w1b, b1b, w2, b2)


def pack_params(params):
    """2-pack block-diagonal weight layout.

    Two examples occupy one 128-lane row; the hidden weights are placed as two
    64x64 blocks on the diagonal of a 128x128 tile, so each example's math is
    exactly the unpacked 64-wide math (off-diagonal zeros contribute exactly 0
    to the f32 accumulation).
    """
    w1, b1, w1a, b1a, w1b, b1b, w2, b2 = params

    w1p = jnp.zeros((2 * D_IN, HP), jnp.float32)
    w1p = w1p.at[:D_IN, :H].set(w1).at[D_IN:, H:].set(w1)
    w1p = w1p.astype(jnp.bfloat16)                          # (16, 128)

    def bd(w):
        out = jnp.zeros((HP, HP), jnp.float32)
        return out.at[:H, :H].set(w).at[H:, H:].set(w)

    whp = jnp.stack([bd(w1a), bd(w1b)]).astype(jnp.bfloat16)  # (2, 128, 128)

    def dup(v):
        v = v.reshape(-1)
        return jnp.concatenate([v, v])

    aux = jnp.zeros((8, HP), jnp.float32)
    aux = aux.at[0].set(dup(b1))
    aux = aux.at[1].set(dup(b1a))
    aux = aux.at[2].set(dup(b1b))
    aux = aux.at[3].set(dup(w2))                 # w2 as a duplicated row vector
    aux = aux.at[4].set(b2.reshape(-1)[0])       # b2 broadcast over all lanes
    return w1p, whp, aux


def critic_forward(state, packed_params, *, tile_examples=8192):
    """Run the critic MLP. state: (B, 8) float. Returns (B, 1) float32."""
    B, d = state.shape
    assert d == D_IN, "CriticNetwork expects 8 input features"
    w1p, whp, aux = packed_params

    # --- tile selection (in packed rows; 1 packed row = 2 examples) ---------
    rows_needed = _round_up(-(-B // 2), ROW_TILE)          # whole batch, packed

    tbp = max(ROW_TILE, _round_up(max(tile_examples // 2, 1), ROW_TILE))
    tbp = min(tbp, rows_needed)

    # v7x has 2 TensorCores: when the batch spans more than one minimal tile,
    # cap the tile so the "parallel" grid has >= 2 steps (no-op otherwise).
    if rows_needed > ROW_TILE:
        tbp = min(tbp, _round_up(-(-rows_needed // 2), ROW_TILE))

    rows_pad = _round_up(rows_needed, tbp)
    num_tiles = rows_pad // tbp
    blk_rows = tbp // LANE
    B_half_pad = rows_pad
    B_pad = 2 * B_half_pad

    # --- pack the batch: row j = [example j | example j + B_half_pad] -------
    x = jnp.pad(state.astype(jnp.bfloat16), ((0, B_pad - B), (0, 0)))
    xp = jnp.concatenate([x[:B_half_pad], x[B_half_pad:]], axis=1)  # (rows, 16)

    grid_spec = pltpu.PrefetchScalarGridSpec(
        num_scalar_prefetch=0,
        grid=(num_tiles,),
        in_specs=[
            pl.BlockSpec((tbp, 2 * D_IN), lambda i: (i, 0)),   # packed batch tile
            pl.BlockSpec((2 * D_IN, HP), lambda i: (0, 0)),    # lnn1 weight
            pl.BlockSpec((2, HP, HP), lambda i: (0, 0, 0)),    # hidden weights
            pl.BlockSpec((8, HP), lambda i: (0, 0)),           # biases + w2 row
        ],
        out_specs=pl.BlockSpec((2, blk_rows, LANE), lambda i: (0, i, 0)),
    )

    out = pl.pallas_call(
        _critic_kernel,
        out_shape=jax.ShapeDtypeStruct((2, rows_pad // LANE, LANE), jnp.float32),
        grid_spec=grid_spec,
        compiler_params=pltpu.CompilerParams(
            dimension_semantics=("parallel",)),
    )(xp, w1p, whp, aux)

    # Lane-dense slab -> (B, 1) in original example order:
    # out[0] covers examples [0, B_half_pad), out[1] covers the rest.
    return out.reshape(B_pad, 1)[:B]


def reference_forward(state, params):
    """Pure-JAX reference mirroring the kernel's bf16-matmul / f32-accumulate
    numerics (block-diagonal zero padding contributes exactly zero)."""
    w1, b1, w1a, b1a, w1b, b1b, w2, b2 = params
    bf = jnp.bfloat16
    h = jnp.maximum(jnp.dot(state.astype(bf), w1.astype(bf),
                            preferred_element_type=jnp.float32) + b1, 0.0)
    h = jnp.maximum(jnp.dot(h.astype(bf), w1a.astype(bf),
                            preferred_element_type=jnp.float32) + b1a, 0.0)
    h = jnp.maximum(jnp.dot(h.astype(bf), w1b.astype(bf),
                            preferred_element_type=jnp.float32) + b1b, 0.0)
    return jnp.dot(h, w2) + b2


if __name__ == "__main__":
    key = jax.random.PRNGKey(0)
    kp, kx1, kx2 = jax.random.split(key, 3)

    params = init_params(kp)
    packed = pack_params(params)

    # Small batch, deliberately not a multiple of any tile -> single grid step.
    B1 = 200
    s1 = jax.random.normal(kx1, (B1, D_IN), jnp.float32)
    out1 = jax.block_until_ready(critic_forward(s1, packed))
    ref1 = reference_forward(s1, params)
    assert out1.shape == (B1, 1)
    assert jnp.allclose(out1, ref1, atol=2e-3, rtol=2e-3), "mismatch (single tile)"

    # Slightly larger batch with a small tile -> exercises the multi-step
    # "parallel" grid path (the one that shards across v7x's two TensorCores).
    B2 = 2500
    s2 = jax.random.normal(kx2, (B2, D_IN), jnp.float32)
    out2 = jax.block_until_ready(critic_forward(s2, packed, tile_examples=2048))
    ref2 = reference_forward(s2, params)
    assert out2.shape == (B2, 1)
    assert jnp.allclose(out2, ref2, atol=2e-3, rtol=2e-3), "mismatch (multi tile)"

    # TODO(synk): Adam optimizer / checkpoint save-load are training-side and
    # intentionally not implemented in the kernel.
    print("KERNEL_OK")
</pallas_src>

<mosaic_0001>
module attributes {stable_mosaic.version = 11 : i64} {
  func.func @_critic_kernel(%arg0: i32, %arg1: memref<1024x16xbf16, #tpu.memory_space<vmem>>, %arg2: memref<16x128xbf16, #tpu.memory_space<vmem>>, %arg3: memref<2x128x128xbf16, #tpu.memory_space<vmem>>, %arg4: memref<8x128xf32, #tpu.memory_space<vmem>>, %arg5: memref<2x8x128xf32, #tpu.memory_space<vmem>>) attributes {dimension_semantics = [#tpu.dimension_semantics<parallel>], iteration_bounds = array<i64: 1>, scalar_prefetch = 0 : i64, scratch_operands = 0 : i64, tpu.core_type = #tpu.core_type<tc>, window_params = [{transform_indices = @transform_0, window_bounds = array<i64: 1024, 16>}, {pipeline_mode = #tpu.pipeline_mode<synchronous>, transform_indices = @transform_1, window_bounds = array<i64: 16, 128>}, {pipeline_mode = #tpu.pipeline_mode<synchronous>, transform_indices = @transform_2, window_bounds = array<i64: 2, 128, 128>}, {pipeline_mode = #tpu.pipeline_mode<synchronous>, transform_indices = @transform_3, window_bounds = array<i64: 8, 128>}, {transform_indices = @transform_4, window_bounds = array<i64: 2, 8, 128>}]} {
    %c0 = arith.constant 0 : index
    %c0_0 = arith.constant 0 : index
    %0 = vector.load %arg1[%c0, %c0_0] : memref<1024x16xbf16, #tpu.memory_space<vmem>>, vector<1024x16xbf16>
    %c0_1 = arith.constant 0 : index
    %c0_2 = arith.constant 0 : index
    %1 = vector.load %arg4[%c0_1, %c0_2] : memref<8x128xf32, #tpu.memory_space<vmem>>, vector<1x128xf32>
    %c1 = arith.constant 1 : index
    %c0_3 = arith.constant 0 : index
    %2 = vector.load %arg4[%c1, %c0_3] : memref<8x128xf32, #tpu.memory_space<vmem>>, vector<1x128xf32>
    %c2 = arith.constant 2 : index
    %c0_4 = arith.constant 0 : index
    %3 = vector.load %arg4[%c2, %c0_4] : memref<8x128xf32, #tpu.memory_space<vmem>>, vector<1x128xf32>
    %c3 = arith.constant 3 : index
    %c0_5 = arith.constant 0 : index
    %4 = vector.load %arg4[%c3, %c0_5] : memref<8x128xf32, #tpu.memory_space<vmem>>, vector<1x128xf32>
    %c4 = arith.constant 4 : index
    %c0_6 = arith.constant 0 : index
    %5 = vector.load %arg4[%c4, %c0_6] : memref<8x128xf32, #tpu.memory_space<vmem>>, vector<1x128xf32>
    %c0_7 = arith.constant 0 : index
    %c0_8 = arith.constant 0 : index
    %6 = vector.load %arg2[%c0_7, %c0_8] : memref<16x128xbf16, #tpu.memory_space<vmem>>, vector<16x128xbf16>
    %cst = arith.constant dense<0.000000e+00> : vector<1024x128xf32>
    %7 = tpu.matmul %0, %6, %cst {dimension_numbers = #tpu.dot_dimension_numbers<[1], [0], [0], [1], [0, 0, 1, 1], [], []>} : vector<1024x16xbf16>, vector<16x128xbf16>, vector<1024x128xf32> -> vector<1024x128xf32>
    %8 = vector.broadcast %1 : vector<1x128xf32> to vector<1024x128xf32>
    %9 = arith.addf %7, %8 : vector<1024x128xf32>
    %cst_9 = arith.constant 0.000000e+00 : f32
    %10 = vector.broadcast %cst_9 : f32 to vector<1024x128xf32>
    %11 = arith.maximumf %9, %10 : vector<1024x128xf32>
    %12 = arith.truncf %11 : vector<1024x128xf32> to vector<1024x128xbf16>
    %c0_10 = arith.constant 0 : index
    %c0_11 = arith.constant 0 : index
    %c0_12 = arith.constant 0 : index
    %13 = vector.load %arg3[%c0_10, %c0_11, %c0_12] : memref<2x128x128xbf16, #tpu.memory_space<vmem>>, vector<1x128x128xbf16>
    %14 = vector.shape_cast %13 : vector<1x128x128xbf16> to vector<128x128xbf16>
    %cst_13 = arith.constant dense<0.000000e+00> : vector<1024x128xf32>
    %15 = tpu.matmul %12, %14, %cst_13 {dimension_numbers = #tpu.dot_dimension_numbers<[1], [0], [0], [1], [0, 0, 1, 1], [], []>} : vector<1024x128xbf16>, vector<128x128xbf16>, vector<1024x128xf32> -> vector<1024x128xf32>
    %16 = vector.broadcast %2 : vector<1x128xf32> to vector<1024x128xf32>
    %17 = arith.addf %15, %16 : vector<1024x128xf32>
    %cst_14 = arith.constant 0.000000e+00 : f32
    %18 = vector.broadcast %cst_14 : f32 to vector<1024x128xf32>
    %19 = arith.maximumf %17, %18 : vector<1024x128xf32>
    %20 = arith.truncf %19 : vector<1024x128xf32> to vector<1024x128xbf16>
    %c1_15 = arith.constant 1 : index
    %c0_16 = arith.constant 0 : index
    %c0_17 = arith.constant 0 : index
    %21 = vector.load %arg3[%c1_15, %c0_16, %c0_17] : memref<2x128x128xbf16, #tpu.memory_space<vmem>>, vector<1x128x128xbf16>
    %22 = vector.shape_cast %21 : vector<1x128x128xbf16> to vector<128x128xbf16>
    %cst_18 = arith.constant dense<0.000000e+00> : vector<1024x128xf32>
    %23 = tpu.matmul %20, %22, %cst_18 {dimension_numbers = #tpu.dot_dimension_numbers<[1], [0], [0], [1], [0, 0, 1, 1], [], []>} : vector<1024x128xbf16>, vector<128x128xbf16>, vector<1024x128xf32> -> vector<1024x128xf32>
    %24 = vector.broadcast %3 : vector<1x128xf32> to vector<1024x128xf32>
    %25 = arith.addf %23, %24 : vector<1024x128xf32>
    %cst_19 = arith.constant 0.000000e+00 : f32
    %26 = vector.broadcast %cst_19 : f32 to vector<1024x128xf32>
    %27 = arith.maximumf %25, %26 : vector<1024x128xf32>
    %28 = vector.broadcast %4 : vector<1x128xf32> to vector<1024x128xf32>
    %29 = arith.mulf %27, %28 : vector<1024x128xf32>
    %30 = vector.shape_cast %29 : vector<1024x128xf32> to vector<8x128x128xf32>
    %31 = vector.extract_strided_slice %30 {offsets = [0, 0, 0], sizes = [8, 128, 64], strides = [1, 1, 1]} : vector<8x128x128xf32> to vector<8x128x64xf32>
    %cst_20 = arith.constant dense<0.000000e+00> : vector<8x128xf32>
    %32 = vector.multi_reduction <add>, %31, %cst_20 [2] : vector<8x128x64xf32> to vector<8x128xf32>
    %33 = vector.extract_strided_slice %30 {offsets = [0, 0, 64], sizes = [8, 128, 64], strides = [1, 1, 1]} : vector<8x128x128xf32> to vector<8x128x64xf32>
    %cst_21 = arith.constant dense<0.000000e+00> : vector<8x128xf32>
    %34 = vector.multi_reduction <add>, %33, %cst_21 [2] : vector<8x128x64xf32> to vector<8x128xf32>
    %35 = vector.broadcast %5 : vector<1x128xf32> to vector<8x128xf32>
    %36 = arith.addf %32, %35 : vector<8x128xf32>
    %c0_22 = arith.constant 0 : index
    %c0_23 = arith.constant 0 : index
    %c0_24 = arith.constant 0 : index
    %37 = vector.load %arg5[%c0_22, %c0_23, %c0_24] : memref<2x8x128xf32, #tpu.memory_space<vmem>>, vector<1x8x128xf32>
    %38 = vector.shape_cast %37 : vector<1x8x128xf32> to vector<8x128xf32>
    %39 = vector.shape_cast %36 : vector<8x128xf32> to vector<1x8x128xf32>
    tpu.vector_store %arg5[%c0_22, %c0_23, %c0_24], %39 {strides = array<i32>} : memref<2x8x128xf32, #tpu.memory_space<vmem>>, vector<1x8x128xf32>,
    %40 = vector.broadcast %5 : vector<1x128xf32> to vector<8x128xf32>
    %41 = arith.addf %34, %40 : vector<8x128xf32>
    %c1_25 = arith.constant 1 : index
    %c0_26 = arith.constant 0 : index
    %c0_27 = arith.constant 0 : index
    %42 = vector.load %arg5[%c1_25, %c0_26, %c0_27] : memref<2x8x128xf32, #tpu.memory_space<vmem>>, vector<1x8x128xf32>
    %43 = vector.shape_cast %42 : vector<1x8x128xf32> to vector<8x128xf32>
    %44 = vector.shape_cast %41 : vector<8x128xf32> to vector<1x8x128xf32>
    tpu.vector_store %arg5[%c1_25, %c0_26, %c0_27], %44 {strides = array<i32>} : memref<2x8x128xf32, #tpu.memory_space<vmem>>, vector<1x8x128xf32>,
    return
  }
  func.func @transform_0(%arg0: i32) -> (i32, i32) {
    %c0_i32 = arith.constant 0 : i32
    %c0_i32_0 = arith.constant 0 : i32
    return %arg0, %c0_i32 : i32, i32
  }
  func.func @transform_1(%arg0: i32) -> (i32, i32) {
    %c0_i32 = arith.constant 0 : i32
    %c0_i32_0 = arith.constant 0 : i32
    %c0_i32_1 = arith.constant 0 : i32
    return %c0_i32, %c0_i32_0 : i32, i32
  }
  func.func @transform_2(%arg0: i32) -> (i32, i32, i32) {
    %c0_i32 = arith.constant 0 : i32
    %c0_i32_0 = arith.constant 0 : i32
    %c0_i32_1 = arith.constant 0 : i32
    %c0_i32_2 = arith.constant 0 : i32
    return %c0_i32, %c0_i32_0, %c0_i32_1 : i32, i32, i32
  }
  func.func @transform_3(%arg0: i32) -> (i32, i32) {
    %c0_i32 = arith.constant 0 : i32
    %c0_i32_0 = arith.constant 0 : i32
    %c0_i32_1 = arith.constant 0 : i32
    return %c0_i32, %c0_i32_0 : i32, i32
  }
  func.func @transform_4(%arg0: i32) -> (i32, i32, i32) {
    %c0_i32 = arith.constant 0 : i32
    %c0_i32_0 = arith.constant 0 : i32
    %c0_i32_1 = arith.constant 0 : i32
    return %c0_i32, %arg0, %c0_i32_0 : i32, i32, i32
  }
}

</mosaic_0001>

<llo_original>
// kernel: tpu_custom_call.1
$region0: #{tpu_custom_call.1}
  #allocation0 [shape = 'u32[]', space=smem, size = 0x4, offset = 0x4, fixed_abs, tag = 'smem constant byte address 0x4 - core index']
  #allocation1 [shape = 'u32[144,128]{1,0:T(1,128)}', space=vmem, size = 0x12000, scoped, tag = 'internal scratch']
  %s0 = inlined_call_operand.vmem [shape: bf16[1024,16], index: 0, kind: input, shape index: {}]
  %s1 = inlined_call_operand.vmem [shape: bf16[16,128], index: 1, kind: input, shape index: {}]
  %s2 = inlined_call_operand.vmem [shape: bf16[2,128,128], index: 2, kind: input, shape index: {}]
  %s3 = inlined_call_operand.vmem [shape: f32[8,128], index: 3, kind: input, shape index: {}]
  %s4 = inlined_call_operand.hbm [shape: f32[2,8,128], index: 4, kind: output, shape index: {}]
  %s5 = sld [smem:[#allocation0]]
  $region26: #{tpu_custom_call.1} parent=0
    _
  %s7 = ssub.s32 1, %s5
  %s8 = scalar_select 0, %s7, %s5
  $region1: #{tpu_custom_call.1} parent=0
    #allocation2 [shape = 'u8[8192]{0}', space=vmem, size = 0x2000, scoped, tag = 'output window, operand 0, single buffered']
    #allocation3 [shape = 's32[1]{0}', space=sflag, size = 0x4, scoped, tag = 'scoped memory for tpu_custom_call.1']
    %9 = vsyncpa [#allocation3], 0
    // Predicated region
    $region2: #{tpu_custom_call.1} parent=1 // pred_check
      _
    $region3: #{tpu_custom_call.1} parent=1 // pred_check_branch
      %11 = sbr.rel (0) target = $region5
    $region4: #{tpu_custom_call.1} parent=1 // pred_region
      _
    $region5: #{tpu_custom_call.1} parent=1 // pred_fallthru
      _
    // Predicated region
    $region6: #{tpu_custom_call.1} parent=1 // pred_check
      _
    $region7: #{tpu_custom_call.1} parent=1 // pred_check_branch
      %13 = sbr.rel (0) target = $region9
    $region8: #{tpu_custom_call.1} parent=1 // pred_region
      _
    $region9: #{tpu_custom_call.1} parent=1 // pred_fallthru
      _
    // Predicated region
    $region10: #{tpu_custom_call.1} parent=1 // pred_check
      _
    $region11: #{tpu_custom_call.1} parent=1 // pred_check_branch
      %15 = sbr.rel (0) target = $region13
    $region12: #{tpu_custom_call.1} parent=1 // pred_region
      _
    $region13: #{tpu_custom_call.1} parent=1 // pred_fallthru
      _
    // Predicated region
    $region14: #{tpu_custom_call.1} parent=1 // pred_check
      _
    $region15: #{tpu_custom_call.1} parent=1 // pred_check_branch
      %17 = sbr.rel (0) target = $region17
    $region16: #{tpu_custom_call.1} parent=1 // pred_region
      _
    $region17: #{tpu_custom_call.1} parent=1 // pred_fallthru
      _
    %v19 = vld [vmem:[%s0] sm:$0xf]
    %v20 = vld [vmem:[%s0 + $0x4] sm:$0xf]
    %v21 = vld [vmem:[%s0 + $0x8] sm:$0xf]
    %v22 = vld [vmem:[%s0 + $0xc] sm:$0xf]
    %v23 = vld [vmem:[%s0 + $0x10] sm:$0xf]
    %v24 = vld [vmem:[%s0 + $0x14] sm:$0xf]
    %v25 = vld [vmem:[%s0 + $0x18] sm:$0xf]
    %v26 = vld [vmem:[%s0 + $0x1c] sm:$0xf]
    %v27 = vld [vmem:[%s0 + $0x20] sm:$0xf]
    %v28 = vld [vmem:[%s0 + $0x24] sm:$0xf]
    %v29 = vld [vmem:[%s0 + $0x28] sm:$0xf]
    %v30 = vld [vmem:[%s0 + $0x2c] sm:$0xf]
    %v31 = vld [vmem:[%s0 + $0x30] sm:$0xf]
    %v32 = vld [vmem:[%s0 + $0x34] sm:$0xf]
    %v33 = vld [vmem:[%s0 + $0x38] sm:$0xf]
    %v34 = vld [vmem:[%s0 + $0x3c] sm:$0xf]
    %v35 = vld [vmem:[%s0 + $0x40] sm:$0xf]
    %v36 = vld [vmem:[%s0 + $0x44] sm:$0xf]
    %v37 = vld [vmem:[%s0 + $0x48] sm:$0xf]
    %v38 = vld [vmem:[%s0 + $0x4c] sm:$0xf]
    %v39 = vld [vmem:[%s0 + $0x50] sm:$0xf]
    %v40 = vld [vmem:[%s0 + $0x54] sm:$0xf]
    %v41 = vld [vmem:[%s0 + $0x58] sm:$0xf]
    %v42 = vld [vmem:[%s0 + $0x5c] sm:$0xf]
    %v43 = vld [vmem:[%s0 + $0x60] sm:$0xf]
    %v44 = vld [vmem:[%s0 + $0x64] sm:$0xf]
    %v45 = vld [vmem:[%s0 + $0x68] sm:$0xf]
    %v46 = vld [vmem:[%s0 + $0x6c] sm:$0xf]
    %v47 = vld [vmem:[%s0 + $0x70] sm:$0xf]
    %v48 = vld [vmem:[%s0 + $0x74] sm:$0xf]
    %v49 = vld [vmem:[%s0 + $0x78] sm:$0xf]
    %v50 = vld [vmem:[%s0 + $0x7c] sm:$0xf]
    %v51 = vld [vmem:[%s0 + $0x80] sm:$0xf]
    %v52 = vld [vmem:[%s0 + $0x84] sm:$0xf]
    %v53 = vld [vmem:[%s0 + $0x88] sm:$0xf]
    %v54 = vld [vmem:[%s0 + $0x8c] sm:$0xf]
    %v55 = vld [vmem:[%s0 + $0x90] sm:$0xf]
    %v56 = vld [vmem:[%s0 + $0x94] sm:$0xf]
    %v57 = vld [vmem:[%s0 + $0x98] sm:$0xf]
    %v58 = vld [vmem:[%s0 + $0x9c] sm:$0xf]
    %v59 = vld [vmem:[%s0 + $0xa0] sm:$0xf]
    %v60 = vld [vmem:[%s0 + $0xa4] sm:$0xf]
    %v61 = vld [vmem:[%s0 + $0xa8] sm:$0xf]
    %v62 = vld [vmem:[%s0 + $0xac] sm:$0xf]
    %v63 = vld [vmem:[%s0 + $0xb0] sm:$0xf]
    %v64 = vld [vmem:[%s0 + $0xb4] sm:$0xf]
    %v65 = vld [vmem:[%s0 + $0xb8] sm:$0xf]
    %v66 = vld [vmem:[%s0 + $0xbc] sm:$0xf]
    %v67 = vld [vmem:[%s0 + $0xc0] sm:$0xf]
    %v68 = vld [vmem:[%s0 + $0xc4] sm:$0xf]
    %v69 = vld [vmem:[%s0 + $0xc8] sm:$0xf]
    %v70 = vld [vmem:[%s0 + $0xcc] sm:$0xf]
    %v71 = vld [vmem:[%s0 + $0xd0] sm:$0xf]
    %v72 = vld [vmem:[%s0 + $0xd4] sm:$0xf]
    %v73 = vld [vmem:[%s0 + $0xd8] sm:$0xf]
    %v74 = vld [vmem:[%s0 + $0xdc] sm:$0xf]
    %v75 = vld [vmem:[%s0 + $0xe0] sm:$0xf]
    %v76 = vld [vmem:[%s0 + $0xe4] sm:$0xf]
    %v77 = vld [vmem:[%s0 + $0xe8] sm:$0xf]
    %v78 = vld [vmem:[%s0 + $0xec] sm:$0xf]
    %v79 = vld [vmem:[%s0 + $0xf0] sm:$0xf]
    %v80 = vld [vmem:[%s0 + $0xf4] sm:$0xf]
    %v81 = vld [vmem:[%s0 + $0xf8] sm:$0xf]
    %v82 = vld [vmem:[%s0 + $0xfc] sm:$0xf]
    %v83 = vld [vmem:[%s0 + $0x100] sm:$0xf]
    %v84 = vld [vmem:[%s0 + $0x104] sm:$0xf]
    %v85 = vld [vmem:[%s0 + $0x108] sm:$0xf]
    %v86 = vld [vmem:[%s0 + $0x10c] sm:$0xf]
    %v87 = vld [vmem:[%s0 + $0x110] sm:$0xf]
    %v88 = vld [vmem:[%s0 + $0x114] sm:$0xf]
    %v89 = vld [vmem:[%s0 + $0x118] sm:$0xf]
    %v90 = vld [vmem:[%s0 + $0x11c] sm:$0xf]
    %v91 = vld [vmem:[%s0 + $0x120] sm:$0xf]
    %v92 = vld [vmem:[%s0 + $0x124] sm:$0xf]
    %v93 = vld [vmem:[%s0 + $0x128] sm:$0xf]
    %v94 = vld [vmem:[%s0 + $0x12c] sm:$0xf]
    %v95 = vld [vmem:[%s0 + $0x130] sm:$0xf]
    %v96 = vld [vmem:[%s0 + $0x134] sm:$0xf]
    %v97 = vld [vmem:[%s0 + $0x138] sm:$0xf]
    %v98 = vld [vmem:[%s0 + $0x13c] sm:$0xf]
    %v99 = vld [vmem:[%s0 + $0x140] sm:$0xf]
    %v100 = vld [vmem:[%s0 + $0x144] sm:$0xf]
    %v101 = vld [vmem:[%s0 + $0x148] sm:$0xf]
    %v102 = vld [vmem:[%s0 + $0x14c] sm:$0xf]
    %v103 = vld [vmem:[%s0 + $0x150] sm:$0xf]
    %v104 = vld [vmem:[%s0 + $0x154] sm:$0xf]
    %v105 = vld [vmem:[%s0 + $0x158] sm:$0xf]
    %v106 = vld [vmem:[%s0 + $0x15c] sm:$0xf]
    %v107 = vld [vmem:[%s0 + $0x160] sm:$0xf]
    %v108 = vld [vmem:[%s0 + $0x164] sm:$0xf]
    %v109 = vld [vmem:[%s0 + $0x168] sm:$0xf]
    %v110 = vld [vmem:[%s0 + $0x16c] sm:$0xf]
    %v111 = vld [vmem:[%s0 + $0x170] sm:$0xf]
    %v112 = vld [vmem:[%s0 + $0x174] sm:$0xf]
    %v113 = vld [vmem:[%s0 + $0x178] sm:$0xf]
    %v114 = vld [vmem:[%s0 + $0x17c] sm:$0xf]
    %v115 = vld [vmem:[%s0 + $0x180] sm:$0xf]
    %v116 = vld [vmem:[%s0 + $0x184] sm:$0xf]
    %v117 = vld [vmem:[%s0 + $0x188] sm:$0xf]
    %v118 = vld [vmem:[%s0 + $0x18c] sm:$0xf]
    %v119 = vld [vmem:[%s0 + $0x190] sm:$0xf]
    %v120 = vld [vmem:[%s0 + $0x194] sm:$0xf]
    %v121 = vld [vmem:[%s0 + $0x198] sm:$0xf]
    %v122 = vld [vmem:[%s0 + $0x19c] sm:$0xf]
    %v123 = vld [vmem:[%s0 + $0x1a0] sm:$0xf]
    %v124 = vld [vmem:[%s0 + $0x1a4] sm:$0xf]
    %v125 = vld [vmem:[%s0 + $0x1a8] sm:$0xf]
    %v126 = vld [vmem:[%s0 + $0x1ac] sm:$0xf]
    %v127 = vld [vmem:[%s0 + $0x1b0] sm:$0xf]
    %v128 = vld [vmem:[%s0 + $0x1b4] sm:$0xf]
    %v129 = vld [vmem:[%s0 + $0x1b8] sm:$0xf]
    %v130 = vld [vmem:[%s0 + $0x1bc] sm:$0xf]
    %v131 = vld [vmem:[%s0 + $0x1c0] sm:$0xf]
    %v132 = vld [vmem:[%s0 + $0x1c4] sm:$0xf]
    %v133 = vld [vmem:[%s0 + $0x1c8] sm:$0xf]
    %v134 = vld [vmem:[%s0 + $0x1cc] sm:$0xf]
    %v135 = vld [vmem:[%s0 + $0x1d0] sm:$0xf]
    %v136 = vld [vmem:[%s0 + $0x1d4] sm:$0xf]
    %v137 = vld [vmem:[%s0 + $0x1d8] sm:$0xf]
    %v138 = vld [vmem:[%s0 + $0x1dc] sm:$0xf]
    %v139 = vld [vmem:[%s0 + $0x1e0] sm:$0xf]
    %v140 = vld [vmem:[%s0 + $0x1e4] sm:$0xf]
    %v141 = vld [vmem:[%s0 + $0x1e8] sm:$0xf]
    %v142 = vld [vmem:[%s0 + $0x1ec] sm:$0xf]
    %v143 = vld [vmem:[%s0 + $0x1f0] sm:$0xf]
    %v144 = vld [vmem:[%s0 + $0x1f4] sm:$0xf]
    %v145 = vld [vmem:[%s0 + $0x1f8] sm:$0xf]
    %v146 = vld [vmem:[%s0 + $0x1fc] sm:$0xf]
    %v147 = vld [vmem:[%s3] sm:$0x1]
    %v148 = vld [vmem:[%s3 + $0x1] sm:$0x1]
    %v149 = vld [vmem:[%s3 + $0x2] sm:$0x1]
    %v150 = vld [vmem:[%s3 + $0x3] sm:$0x1]
    %v151 = vld [vmem:[%s3 + $0x4] sm:$0x1]
    %v152 = vld [vmem:[%s1] sm:$0xf]
    %v153 = vld [vmem:[%s1 + $0x4] sm:$0xf]
    %v154 = vlaneseq
    %v155 = vshrl.u32 %v154, 7
    %v156 = vsub.s32 0, %v155
    %v157 = vrot.slane %v147, %v156
    %v286 = vunpack.c.l.b16 %v19
    %v287 = vunpack.c.l.b16 %v20
    %v288 = vunpack.c.l.b16 %v21
    %v289 = vunpack.c.l.b16 %v22
    %v290 = vunpack.c.l.b16 %v23
    %v291 = vunpack.c.l.b16 %v24
    %v292 = vunpack.c.l.b16 %v25
    %v293 = vunpack.c.l.b16 %v26
    %v294 = vunpack.c.l.b16 %v27
    %v295 = vunpack.c.l.b16 %v28
    %v296 = vunpack.c.l.b16 %v29
    %v297 = vunpack.c.l.b16 %v30
    %v298 = vunpack.c.l.b16 %v31
    %v299 = vunpack.c.l.b16 %v32
    %v300 = vunpack.c.l.b16 %v33
    %v301 = vunpack.c.l.b16 %v34
    %v302 = vunpack.c.l.b16 %v35
    %v303 = vunpack.c.l.b16 %v36
    %v304 = vunpack.c.l.b16 %v37
    %v305 = vunpack.c.l.b16 %v38
    %v306 = vunpack.c.l.b16 %v39
    %v307 = vunpack.c.l.b16 %v40
    %v308 = vunpack.c.l.b16 %v41
    %v309 = vunpack.c.l.b16 %v42
    %v310 = vunpack.c.l.b16 %v43
    %v311 = vunpack.c.l.b16 %v44
    %v312 = vunpack.c.l.b16 %v45
    %v313 = vunpack.c.l.b16 %v46
    %v314 = vunpack.c.l.b16 %v47
    %v315 = vunpack.c.l.b16 %v48
    %v316 = vunpack.c.l.b16 %v49
    %v317 = vunpack.c.l.b16 %v50
    %v318 = vunpack.c.l.b16 %v51
    %v319 = vunpack.c.l.b16 %v52
    %v320 = vunpack.c.l.b16 %v53
    %v321 = vunpack.c.l.b16 %v54
    %v322 = vunpack.c.l.b16 %v55
    %v323 = vunpack.c.l.b16 %v56
    %v324 = vunpack.c.l.b16 %v57
    %v325 = vunpack.c.l.b16 %v58
    %v326 = vunpack.c.l.b16 %v59
    %v327 = vunpack.c.l.b16 %v60
    %v328 = vunpack.c.l.b16 %v61
    %v329 = vunpack.c.l.b16 %v62
    %v330 = vunpack.c.l.b16 %v63
    %v331 = vunpack.c.l.b16 %v64
    %v332 = vunpack.c.l.b16 %v65
    %v333 = vunpack.c.l.b16 %v66
    %v334 = vunpack.c.l.b16 %v67
    %v335 = vunpack.c.l.b16 %v68
    %v336 = vunpack.c.l.b16 %v69
    %v337 = vunpack.c.l.b16 %v70
    %v338 = vunpack.c.l.b16 %v71
    %v339 = vunpack.c.l.b16 %v72
    %v340 = vunpack.c.l.b16 %v73
    %v341 = vunpack.c.l.b16 %v74
    %v342 = vunpack.c.l.b16 %v75
    %v343 = vunpack.c.l.b16 %v76
    %v344 = vunpack.c.l.b16 %v77
    %v345 = vunpack.c.l.b16 %v78
    %v346 = vunpack.c.l.b16 %v79
    %v347 = vunpack.c.l.b16 %v80
    %v348 = vunpack.c.l.b16 %v81
    %v349 = vunpack.c.l.b16 %v82
    %v350 = vunpack.c.l.b16 %v83
    %v351 = vunpack.c.l.b16 %v84
    %v352 = vunpack.c.l.b16 %v85
    %v353 = vunpack.c.l.b16 %v86
    %v354 = vunpack.c.l.b16 %v87
    %v355 = vunpack.c.l.b16 %v88
    %v356 = vunpack.c.l.b16 %v89
    %v357 = vunpack.c.l.b16 %v90
    %v358 = vunpack.c.l.b16 %v91
    %v359 = vunpack.c.l.b16 %v92
    %v360 = vunpack.c.l.b16 %v93
    %v361 = vunpack.c.l.b16 %v94
    %v362 = vunpack.c.l.b16 %v95
    %v363 = vunpack.c.l.b16 %v96
    %v364 = vunpack.c.l.b16 %v97
    %v365 = vunpack.c.l.b16 %v98
    %v366 = vunpack.c.l.b16 %v99
    %v367 = vunpack.c.l.b16 %v100
    %v368 = vunpack.c.l.b16 %v101
    %v369 = vunpack.c.l.b16 %v102
    %v370 = vunpack.c.l.b16 %v103
    %v371 = vunpack.c.l.b16 %v104
    %v372 = vunpack.c.l.b16 %v105
    %v373 = vunpack.c.l.b16 %v106
    %v374 = vunpack.c.l.b16 %v107
    %v375 = vunpack.c.l.b16 %v108
    %v376 = vunpack.c.l.b16 %v109
    %v377 = vunpack.c.l.b16 %v110
    %v378 = vunpack.c.l.b16 %v111
    %v379 = vunpack.c.l.b16 %v112
    %v380 = vunpack.c.l.b16 %v113
    %v381 = vunpack.c.l.b16 %v114
    %v382 = vunpack.c.l.b16 %v115
    %v383 = vunpack.c.l.b16 %v116
    %v384 = vunpack.c.l.b16 %v117
    %v385 = vunpack.c.l.b16 %v118
    %v386 = vunpack.c.l.b16 %v119
    %v387 = vunpack.c.l.b16 %v120
    %v388 = vunpack.c.l.b16 %v121
    %v389 = vunpack.c.l.b16 %v122
    %v390 = vunpack.c.l.b16 %v123
    %v391 = vunpack.c.l.b16 %v124
    %v392 = vunpack.c.l.b16 %v125
    %v393 = vunpack.c.l.b16 %v126
    %v394 = vunpack.c.l.b16 %v127
    %v395 = vunpack.c.l.b16 %v128
    %v396 = vunpack.c.l.b16 %v129
    %v397 = vunpack.c.l.b16 %v130
    %v398 = vunpack.c.l.b16 %v131
    %v399 = vunpack.c.l.b16 %v132
    %v400 = vunpack.c.l.b16 %v133
    %v401 = vunpack.c.l.b16 %v134
    %v402 = vunpack.c.l.b16 %v135
    %v403 = vunpack.c.l.b16 %v136
    %v404 = vunpack.c.l.b16 %v137
    %v405 = vunpack.c.l.b16 %v138
    %v406 = vunpack.c.l.b16 %v139
    %v407 = vunpack.c.l.b16 %v140
    %v408 = vunpack.c.l.b16 %v141
    %v409 = vunpack.c.l.b16 %v142
    %v410 = vunpack.c.l.b16 %v143
    %v411 = vunpack.c.l.b16 %v144
    %v412 = vunpack.c.l.b16 %v145
    %v413 = vunpack.c.l.b16 %v146
    %v414 = vpack.c.b16 %v287, %v286
    %v415 = vpack.c.b16 %v289, %v288
    %v416 = vpack.c.b16 %v291, %v290
    %v417 = vpack.c.b16 %v293, %v292
    %v418 = vpack.c.b16 %v295, %v294
    %v419 = vpack.c.b16 %v297, %v296
    %v420 = vpack.c.b16 %v299, %v298
    %v421 = vpack.c.b16 %v301, %v300
    %v422 = vpack.c.b16 %v303, %v302
    %v423 = vpack.c.b16 %v305, %v304
    %v424 = vpack.c.b16 %v307, %v306
    %v425 = vpack.c.b16 %v309, %v308
    %v426 = vpack.c.b16 %v311, %v310
    %v427 = vpack.c.b16 %v313, %v312
    %v428 = vpack.c.b16 %v315, %v314
    %v429 = vpack.c.b16 %v317, %v316
    %v430 = vpack.c.b16 %v319, %v318
    %v431 = vpack.c.b16 %v321, %v320
    %v432 = vpack.c.b16 %v323, %v322
    %v433 = vpack.c.b16 %v325, %v324
    %v434 = vpack.c.b16 %v327, %v326
    %v435 = vpack.c.b16 %v329, %v328
    %v436 = vpack.c.b16 %v331, %v330
    %v437 = vpack.c.b16 %v333, %v332
    %v438 = vpack.c.b16 %v335, %v334
    %v439 = vpack.c.b16 %v337, %v336
    %v440 = vpack.c.b16 %v339, %v338
    %v441 = vpack.c.b16 %v341, %v340
    %v442 = vpack.c.b16 %v343, %v342
    %v443 = vpack.c.b16 %v345, %v344
    %v444 = vpack.c.b16 %v347, %v346
    %v445 = vpack.c.b16 %v349, %v348
    %v446 = vpack.c.b16 %v351, %v350
    %v447 = vpack.c.b16 %v353, %v352
    %v448 = vpack.c.b16 %v355, %v354
    %v449 = vpack.c.b16 %v357, %v356
    %v450 = vpack.c.b16 %v359, %v358
    %v451 = vpack.c.b16 %v361, %v360
    %v452 = vpack.c.b16 %v363, %v362
    %v453 = vpack.c.b16 %v365, %v364
    %v454 = vpack.c.b16 %v367, %v366
    %v455 = vpack.c.b16 %v369, %v368
    %v456 = vpack.c.b16 %v371, %v370
    %v457 = vpack.c.b16 %v373, %v372
    %v458 = vpack.c.b16 %v375, %v374
    %v459 = vpack.c.b16 %v377, %v376
    %v460 = vpack.c.b16 %v379, %v378
    %v461 = vpack.c.b16 %v381, %v380
    %v462 = vpack.c.b16 %v383, %v382
    %v463 = vpack.c.b16 %v385, %v384
    %v464 = vpack.c.b16 %v387, %v386
    %v465 = vpack.c.b16 %v389, %v388
    %v466 = vpack.c.b16 %v391, %v390
    %v467 = vpack.c.b16 %v393, %v392
    %v468 = vpack.c.b16 %v395, %v394
    %v469 = vpack.c.b16 %v397, %v396
    %v470 = vpack.c.b16 %v399, %v398
    %v471 = vpack.c.b16 %v401, %v400
    %v472 = vpack.c.b16 %v403, %v402
    %v473 = vpack.c.b16 %v405, %v404
    %v474 = vpack.c.b16 %v407, %v406
    %v475 = vpack.c.b16 %v409, %v408
    %v476 = vpack.c.b16 %v411, %v410
    %v477 = vpack.c.b16 %v413, %v412
    %v480 = vunpack.c.l.b16 %v152
    %v481 = vunpack.c.l.b16 %v153
    %v482 = vpack.c.b16 %v481, %v480
    %vm484 = vcmask 130048
    %v486 = vsel %vm484, %v414, 0
    %v489 = vsel %vm484, %v415, 0
    %v492 = vsel %vm484, %v416, 0
    %v495 = vsel %vm484, %v417, 0
    %v498 = vsel %vm484, %v418, 0
    %v501 = vsel %vm484, %v419, 0
    %v504 = vsel %vm484, %v420, 0
    %v507 = vsel %vm484, %v421, 0
    %v510 = vsel %vm484, %v422, 0
    %v513 = vsel %vm484, %v423, 0
    %v516 = vsel %vm484, %v424, 0
    %v519 = vsel %vm484, %v425, 0
    %v522 = vsel %vm484, %v426, 0
    %v525 = vsel %vm484, %v427, 0
    %v528 = vsel %vm484, %v428, 0
    %v531 = vsel %vm484, %v429, 0
    %v534 = vsel %vm484, %v430, 0
    %v537 = vsel %vm484, %v431, 0
    %v540 = vsel %vm484, %v432, 0
    %v543 = vsel %vm484, %v433, 0
    %v546 = vsel %vm484, %v434, 0
    %v549 = vsel %vm484, %v435, 0
    %v552 = vsel %vm484, %v436, 0
    %v555 = vsel %vm484, %v437, 0
    %v558 = vsel %vm484, %v438, 0
    %v561 = vsel %vm484, %v439, 0
    %v564 = vsel %vm484, %v440, 0
    %v567 = vsel %vm484, %v441, 0
    %v570 = vsel %vm484, %v442, 0
    %v573 = vsel %vm484, %v443, 0
    %v576 = vsel %vm484, %v444, 0
    %v579 = vsel %vm484, %v445, 0
    %v582 = vsel %vm484, %v446, 0
    %v585 = vsel %vm484, %v447, 0
    %v588 = vsel %vm484, %v448, 0
    %v591 = vsel %vm484, %v449, 0
    %v594 = vsel %vm484, %v450, 0
    %v597 = vsel %vm484, %v451, 0
    %v600 = vsel %vm484, %v452, 0
    %v603 = vsel %vm484, %v453, 0
    %v606 = vsel %vm484, %v454, 0
    %v609 = vsel %vm484, %v455, 0
    %v612 = vsel %vm484, %v456, 0
    %v615 = vsel %vm484, %v457, 0
    %v618 = vsel %vm484, %v458, 0
    %v621 = vsel %vm484, %v459, 0
    %v624 = vsel %vm484, %v460, 0
    %v627 = vsel %vm484, %v461, 0
    %v630 = vsel %vm484, %v462, 0
    %v633 = vsel %vm484, %v463, 0
    %v636 = vsel %vm484, %v464, 0
    %v639 = vsel %vm484, %v465, 0
    %v642 = vsel %vm484, %v466, 0
    %v645 = vsel %vm484, %v467, 0
    %v648 = vsel %vm484, %v468, 0
    %v651 = vsel %vm484, %v469, 0
    %v654 = vsel %vm484, %v470, 0
    %v657 = vsel %vm484, %v471, 0
    %v660 = vsel %vm484, %v472, 0
    %v663 = vsel %vm484, %v473, 0
    %v666 = vsel %vm484, %v474, 0
    %v669 = vsel %vm484, %v475, 0
    %v672 = vsel %vm484, %v476, 0
    %v675 = vsel %vm484, %v477, 0
    %677 = vmatprep.subr.bf16.mxu0 0
    %678 = vmatpush1.bf16.msra.mxu0 %v482
    %679 = vmatprep.subr.bf16.mxu0 0
    %680 = vmatpush1.bf16.msra.mxu0 0
    %681 = vmatprep.subr.bf16.mxu0 0
    %682 = vmatpush1.bf16.msra.mxu0 0
    %683 = vmatprep.subr.bf16.mxu0 0
    %684 = vmatpush1.bf16.msra.mxu0 0
    %685 = vmatprep.subr.bf16.mxu0 0
    %686 = vmatpush1.bf16.msra.mxu0 0
    %687 = vmatprep.subr.bf16.mxu0 0
    %688 = vmatpush1.bf16.msra.mxu0 0
    %689 = vmatprep.subr.bf16.mxu0 0
    %690 = vmatpush1.bf16.msra.mxu0 0
    %691 = vmatprep.subr.bf16.mxu0 0
    %692 = vmatpush1.bf16.msra.mxu0 0
    %693 = vmatprep.subr.bf16.mxu0 0
    %694 = vmatpush1.bf16.msra.mxu0 0
    %695 = vmatprep.subr.bf16.mxu0 0
    %696 = vmatpush1.bf16.msra.mxu0 0
    %697 = vmatprep.subr.bf16.mxu0 0
    %698 = vmatpush1.bf16.msra.mxu0 0
    %699 = vmatprep.subr.bf16.mxu0 0
    %700 = vmatpush1.bf16.msra.mxu0 0
    %701 = vmatprep.subr.bf16.mxu0 0
    %702 = vmatpush1.bf16.msra.mxu0 0
    %703 = vmatprep.subr.bf16.mxu0 0
    %704 = vmatpush1.bf16.msra.mxu0 0
    %705 = vmatprep.subr.bf16.mxu0 0
    %706 = vmatpush1.bf16.msra.mxu0 0
    %707 = vmatprep.subr.bf16.mxu0 0
    %708 = vmatpush1.bf16.msra.mxu0 0
    %709 = vmatprep.mubr.bf16.mxu0 0
    %710 = vmatmul.mubr.bf16.gmra.mrb[0].mxu0 %v486
    %v711 = vpop.f32.mrb[0].mxu0
    %v712 = vadd.f32 %v157, %v711
    %v713 = vpop.f32.mrb[0].mxu0
    %v714 = vpop.f32.mrb[0].mxu0
    %v715 = vadd.f32 %v157, %v714
    %v716 = vpop.f32.mrb[0].mxu0
    %717 = vmatprep.mubr.bf16.mxu0 0
    %718 = vmatmul.mubr.bf16.gmra.mrb[0].mxu0 %v489
    %v719 = vpop.f32.mrb[0].mxu0
    %v720 = vadd.f32 %v157, %v719
    %v721 = vpop.f32.mrb[0].mxu0
    %v722 = vpop.f32.mrb[0].mxu0
    %v723 = vadd.f32 %v157, %v722
    %v724 = vpop.f32.mrb[0].mxu0
    %725 = vmatprep.mubr.bf16.mxu0 0
    %726 = vmatmul.mubr.bf16.gmra.mrb[0].mxu0 %v492
    %v727 = vpop.f32.mrb[0].mxu0
    %v728 = vadd.f32 %v157, %v727
    %v729 = vpop.f32.mrb[0].mxu0
    %v730 = vpop.f32.mrb[0].mxu0
    %v731 = vadd.f32 %v157, %v730
    %v732 = vpop.f32.mrb[0].mxu0
    %733 = vmatprep.mubr.bf16.mxu0 0
    %734 = vmatmul.mubr.bf16.gmra.mrb[0].mxu0 %v495
    %v735 = vpop.f32.mrb[0].mxu0
    %v736 = vadd.f32 %v157, %v735
    %v737 = vpop.f32.mrb[0].mxu0
    %v738 = vpop.f32.mrb[0].mxu0
    %v739 = vadd.f32 %v157, %v738
    %v740 = vpop.f32.mrb[0].mxu0
    %741 = vmatprep.mubr.bf16.mxu0 0
    %742 = vmatmul.mubr.bf16.gmra.mrb[0].mxu0 %v498
    %v743 = vpop.f32.mrb[0].mxu0
    %v744 = vadd.f32 %v157, %v743
    %v745 = vpop.f32.mrb[0].mxu0
    %v746 = vpop.f32.mrb[0].mxu0
    %v747 = vadd.f32 %v157, %v746
    %v748 = vpop.f32.mrb[0].mxu0
    %749 = vmatprep.mubr.bf16.mxu0 0
    %750 = vmatmul.mubr.bf16.gmra.mrb[0].mxu0 %v501
    %v751 = vpop.f32.mrb[0].mxu0
    %v752 = vadd.f32 %v157, %v751
    %v753 = vpop.f32.mrb[0].mxu0
    %v754 = vpop.f32.mrb[0].mxu0
    %v755 = vadd.f32 %v157, %v754
    %v756 = vpop.f32.mrb[0].mxu0
    %757 = vmatprep.mubr.bf16.mxu0 0
    %758 = vmatmul.mubr.bf16.gmra.mrb[0].mxu0 %v504
    %v759 = vpop.f32.mrb[0].mxu0
    %v760 = vadd.f32 %v157, %v759
    %v761 = vpop.f32.mrb[0].mxu0
    %v762 = vpop.f32.mrb[0].mxu0
    %v763 = vadd.f32 %v157, %v762
    %v764 = vpop.f32.mrb[0].mxu0
    %765 = vmatprep.mubr.bf16.mxu0 0
    %766 = vmatmul.mubr.bf16.gmra.mrb[0].mxu0 %v507
    %v767 = vpop.f32.mrb[0].mxu0
    %v768 = vadd.f32 %v157, %v767
    %v769 = vpop.f32.mrb[0].mxu0
    %v770 = vpop.f32.mrb[0].mxu0
    %v771 = vadd.f32 %v157, %v770
    %v772 = vpop.f32.mrb[0].mxu0
    %773 = vmatprep.mubr.bf16.mxu0 0
    %774 = vmatmul.mubr.bf16.gmra.mrb[0].mxu0 %v510
    %v775 = vpop.f32.mrb[0].mxu0
    %v776 = vadd.f32 %v157, %v775
    %v777 = vpop.f32.mrb[0].mxu0
    %v778 = vpop.f32.mrb[0].mxu0
    %v779 = vadd.f32 %v157, %v778
    %v780 = vpop.f32.mrb[0].mxu0
    %781 = vmatprep.mubr.bf16.mxu0 0
    %782 = vmatmul.mubr.bf16.gmra.mrb[0].mxu0 %v513
    %v783 = vpop.f32.mrb[0].mxu0
    %v784 = vadd.f32 %v157, %v783
    %v785 = vpop.f32.mrb[0].mxu0
    %v786 = vpop.f32.mrb[0].mxu0
    %v787 = vadd.f32 %v157, %v786
    %v788 = vpop.f32.mrb[0].mxu0
    %789 = vmatprep.mubr.bf16.mxu0 0
    %790 = vmatmul.mubr.bf16.gmra.mrb[0].mxu0 %v516
    %v791 = vpop.f32.mrb[0].mxu0
    %v792 = vadd.f32 %v157, %v791
    %v793 = vpop.f32.mrb[0].mxu0
    %v794 = vpop.f32.mrb[0].mxu0
    %v795 = vadd.f32 %v157, %v794
    %v796 = vpop.f32.mrb[0].mxu0
    %797 = vmatprep.mubr.bf16.mxu0 0
    %798 = vmatmul.mubr.bf16.gmra.mrb[0].mxu0 %v519
    %v799 = vpop.f32.mrb[0].mxu0
    %v800 = vadd.f32 %v157, %v799
    %v801 = vpop.f32.mrb[0].mxu0
    %v802 = vpop.f32.mrb[0].mxu0
    %v803 = vadd.f32 %v157, %v802
    %v804 = vpop.f32.mrb[0].mxu0
    %805 = vmatprep.mubr.bf16.mxu0 0
    %806 = vmatmul.mubr.bf16.gmra.mrb[0].mxu0 %v522
    %v807 = vpop.f32.mrb[0].mxu0
    %v808 = vadd.f32 %v157, %v807
    %v809 = vpop.f32.mrb[0].mxu0
    %v810 = vpop.f32.mrb[0].mxu0
    %v811 = vadd.f32 %v157, %v810
    %v812 = vpop.f32.mrb[0].mxu0
    %813 = vmatprep.mubr.bf16.mxu0 0
    %814 = vmatmul.mubr.bf16.gmra.mrb[0].mxu0 %v525
    %v815 = vpop.f32.mrb[0].mxu0
    %v816 = vadd.f32 %v157, %v815
    %v817 = vpop.f32.mrb[0].mxu0
    %v818 = vpop.f32.mrb[0].mxu0
    %v819 = vadd.f32 %v157, %v818
    %v820 = vpop.f32.mrb[0].mxu0
    %821 = vmatprep.mubr.bf16.mxu0 0
    %822 = vmatmul.mubr.bf16.gmra.mrb[0].mxu0 %v528
    %v823 = vpop.f32.mrb[0].mxu0
    %v824 = vadd.f32 %v157, %v823
    %v825 = vpop.f32.mrb[0].mxu0
    %v826 = vpop.f32.mrb[0].mxu0
    %v827 = vadd.f32 %v157, %v826
    %v828 = vpop.f32.mrb[0].mxu0
    %829 = vmatprep.mubr.bf16.mxu0 0
    %830 = vmatmul.mubr.bf16.gmra.mrb[0].mxu0 %v531
    %v831 = vpop.f32.mrb[0].mxu0
    %v832 = vadd.f32 %v157, %v831
    %v833 = vpop.f32.mrb[0].mxu0
    %v834 = vpop.f32.mrb[0].mxu0
    %v835 = vadd.f32 %v157, %v834
    %v836 = vpop.f32.mrb[0].mxu0
    %837 = vmatprep.mubr.bf16.mxu0 0
    %838 = vmatmul.mubr.bf16.gmra.mrb[0].mxu0 %v534
    %v839 = vpop.f32.mrb[0].mxu0
    %v840 = vadd.f32 %v157, %v839
    %v841 = vpop.f32.mrb[0].mxu0
    %v842 = vpop.f32.mrb[0].mxu0
    %v843 = vadd.f32 %v157, %v842
    %v844 = vpop.f32.mrb[0].mxu0
    %845 = vmatprep.mubr.bf16.mxu0 0
    %846 = vmatmul.mubr.bf16.gmra.mrb[0].mxu0 %v537
    %v847 = vpop.f32.mrb[0].mxu0
    %v848 = vadd.f32 %v157, %v847
    %v849 = vpop.f32.mrb[0].mxu0
    %v850 = vpop.f32.mrb[0].mxu0
    %v851 = vadd.f32 %v157, %v850
    %v852 = vpop.f32.mrb[0].mxu0
    %853 = vmatprep.mubr.bf16.mxu0 0
    %854 = vmatmul.mubr.bf16.gmra.mrb[0].mxu0 %v540
    %v855 = vpop.f32.mrb[0].mxu0
    %v856 = vadd.f32 %v157, %v855
    %v857 = vpop.f32.mrb[0].mxu0
    %v858 = vpop.f32.mrb[0].mxu0
    %v859 = vadd.f32 %v157, %v858
    %v860 = vpop.f32.mrb[0].mxu0
    %861 = vmatprep.mubr.bf16.mxu0 0
    %862 = vmatmul.mubr.bf16.gmra.mrb[0].mxu0 %v543
    %v863 = vpop.f32.mrb[0].mxu0
    %v864 = vadd.f32 %v157, %v863
    %v865 = vpop.f32.mrb[0].mxu0
    %v866 = vpop.f32.mrb[0].mxu0
    %v867 = vadd.f32 %v157, %v866
    %v868 = vpop.f32.mrb[0].mxu0
    %869 = vmatprep.mubr.bf16.mxu0 0
    %870 = vmatmul.mubr.bf16.gmra.mrb[0].mxu0 %v546
    %v871 = vpop.f32.mrb[0].mxu0
    %v872 = vadd.f32 %v157, %v871
    %v873 = vpop.f32.mrb[0].mxu0
    %v874 = vpop.f32.mrb[0].mxu0
    %v875 = vadd.f32 %v157, %v874
    %v876 = vpop.f32.mrb[0].mxu0
    %877 = vmatprep.mubr.bf16.mxu0 0
    %878 = vmatmul.mubr.bf16.gmra.mrb[0].mxu0 %v549
    %v879 = vpop.f32.mrb[0].mxu0
    %v880 = vadd.f32 %v157, %v879
    %v881 = vpop.f32.mrb[0].mxu0
    %v882 = vpop.f32.mrb[0].mxu0
    %v883 = vadd.f32 %v157, %v882
    %v884 = vpop.f32.mrb[0].mxu0
    %885 = vmatprep.mubr.bf16.mxu0 0
    %886 = vmatmul.mubr.bf16.gmra.mrb[0].mxu0 %v552
    %v887 = vpop.f32.mrb[0].mxu0
    %v888 = vadd.f32 %v157, %v887
    %v889 = vpop.f32.mrb[0].mxu0
    %v890 = vpop.f32.mrb[0].mxu0
    %v891 = vadd.f32 %v157, %v890
    %v892 = vpop.f32.mrb[0].mxu0
    %893 = vmatprep.mubr.bf16.mxu0 0
    %894 = vmatmul.mubr.bf16.gmra.mrb[0].mxu0 %v555
    %v895 = vpop.f32.mrb[0].mxu0
    %v896 = vadd.f32 %v157, %v895
    %v897 = vpop.f32.mrb[0].mxu0
    %v898 = vpop.f32.mrb[0].mxu0
    %v899 = vadd.f32 %v157, %v898
    %v900 = vpop.f32.mrb[0].mxu0
    %901 = vmatprep.mubr.bf16.mxu0 0
    %902 = vmatmul.mubr.bf16.gmra.mrb[0].mxu0 %v558
    %v903 = vpop.f32.mrb[0].mxu0
    %v904 = vadd.f32 %v157, %v903
    %v905 = vpop.f32.mrb[0].mxu0
    %v906 = vpop.f32.mrb[0].mxu0
    %v907 = vadd.f32 %v157, %v906
    %v908 = vpop.f32.mrb[0].mxu0
    %909 = vmatprep.mubr.bf16.mxu0 0
    %910 = vmatmul.mubr.bf16.gmra.mrb[0].mxu0 %v561
    %v911 = vpop.f32.mrb[0].mxu0
    %v912 = vadd.f32 %v157, %v911
    %v913 = vpop.f32.mrb[0].mxu0
    %v914 = vpop.f32.mrb[0].mxu0
    %v915 = vadd.f32 %v157, %v914
    %v916 = vpop.f32.mrb[0].mxu0
    %917 = vmatprep.mubr.bf16.mxu0 0
    %918 = vmatmul.mubr.bf16.gmra.mrb[0].mxu0 %v564
    %v919 = vpop.f32.mrb[0].mxu0
    %v920 = vadd.f32 %v157, %v919
    %v921 = vpop.f32.mrb[0].mxu0
    %v922 = vpop.f32.mrb[0].mxu0
    %v923 = vadd.f32 %v157, %v922
    %v924 = vpop.f32.mrb[0].mxu0
    %925 = vmatprep.mubr.bf16.mxu0 0
    %926 = vmatmul.mubr.bf16.gmra.mrb[0].mxu0 %v567
    %v927 = vpop.f32.mrb[0].mxu0
    %v928 = vadd.f32 %v157, %v927
    %v929 = vpop.f32.mrb[0].mxu0
    %v930 = vpop.f32.mrb[0].mxu0
    %v931 = vadd.f32 %v157, %v930
    %v932 = vpop.f32.mrb[0].mxu0
    %933 = vmatprep.mubr.bf16.mxu0 0
    %934 = vmatmul.mubr.bf16.gmra.mrb[0].mxu0 %v570
    %v935 = vpop.f32.mrb[0].mxu0
    %v936 = vadd.f32 %v157, %v935
    %v937 = vpop.f32.mrb[0].mxu0
    %v938 = vpop.f32.mrb[0].mxu0
    %v939 = vadd.f32 %v157, %v938
    %v940 = vpop.f32.mrb[0].mxu0
    %941 = vmatprep.mubr.bf16.mxu0 0
    %942 = vmatmul.mubr.bf16.gmra.mrb[0].mxu0 %v573
    %v943 = vpop.f32.mrb[0].mxu0
    %v944 = vadd.f32 %v157, %v943
    %v945 = vpop.f32.mrb[0].mxu0
    %v946 = vpop.f32.mrb[0].mxu0
    %v947 = vadd.f32 %v157, %v946
    %v948 = vpop.f32.mrb[0].mxu0
    %949 = vmatprep.mubr.bf16.mxu0 0
    %950 = vmatmul.mubr.bf16.gmra.mrb[0].mxu0 %v576
    %v951 = vpop.f32.mrb[0].mxu0
    %v952 = vadd.f32 %v157, %v951
    %v953 = vpop.f32.mrb[0].mxu0
    %v954 = vpop.f32.mrb[0].mxu0
    %v955 = vadd.f32 %v157, %v954
    %v956 = vpop.f32.mrb[0].mxu0
    %957 = vmatprep.mubr.bf16.mxu0 0
    %958 = vmatmul.mubr.bf16.gmra.mrb[0].mxu0 %v579
    %v959 = vpop.f32.mrb[0].mxu0
    %v960 = vadd.f32 %v157, %v959
    %v961 = vpop.f32.mrb[0].mxu0
    %v962 = vpop.f32.mrb[0].mxu0
    %v963 = vadd.f32 %v157, %v962
    %v964 = vpop.f32.mrb[0].mxu0
    %965 = vmatprep.mubr.bf16.mxu0 0
    %966 = vmatmul.mubr.bf16.gmra.mrb[0].mxu0 %v582
    %v967 = vpop.f32.mrb[0].mxu0
    %v968 = vadd.f32 %v157, %v967
    %v969 = vpop.f32.mrb[0].mxu0
    %v970 = vpop.f32.mrb[0].mxu0
    %v971 = vadd.f32 %v157, %v970
    %v972 = vpop.f32.mrb[0].mxu0
    %973 = vmatprep.mubr.bf16.mxu0 0
    %974 = vmatmul.mubr.bf16.gmra.mrb[0].mxu0 %v585
    %v975 = vpop.f32.mrb[0].mxu0
    %v976 = vadd.f32 %v157, %v975
    %v977 = vpop.f32.mrb[0].mxu0
    %v978 = vpop.f32.mrb[0].mxu0
    %v979 = vadd.f32 %v157, %v978
    %v980 = vpop.f32.mrb[0].mxu0
    %981 = vmatprep.mubr.bf16.mxu0 0
    %982 = vmatmul.mubr.bf16.gmra.mrb[0].mxu0 %v588
    %v983 = vpop.f32.mrb[0].mxu0
    %v984 = vadd.f32 %v157, %v983
    %v985 = vpop.f32.mrb[0].mxu0
    %v986 = vpop.f32.mrb[0].mxu0
    %v987 = vadd.f32 %v157, %v986
    %v988 = vpop.f32.mrb[0].mxu0
    %989 = vmatprep.mubr.bf16.mxu0 0
    %990 = vmatmul.mubr.bf16.gmra.mrb[0].mxu0 %v591
    %v991 = vpop.f32.mrb[0].mxu0
    %v992 = vadd.f32 %v157, %v991
    %v993 = vpop.f32.mrb[0].mxu0
    %v994 = vpop.f32.mrb[0].mxu0
    %v995 = vadd.f32 %v157, %v994
    %v996 = vpop.f32.mrb[0].mxu0
    %997 = vmatprep.mubr.bf16.mxu0 0
    %998 = vmatmul.mubr.bf16.gmra.mrb[0].mxu0 %v594
    %v999 = vpop.f32.mrb[0].mxu0
    %v1000 = vadd.f32 %v157, %v999
    %v1001 = vpop.f32.mrb[0].mxu0
    %v1002 = vpop.f32.mrb[0].mxu0
    %v1003 = vadd.f32 %v157, %v1002
    %v1004 = vpop.f32.mrb[0].mxu0
    %1005 = vmatprep.mubr.bf16.mxu0 0
    %1006 = vmatmul.mubr.bf16.gmra.mrb[0].mxu0 %v597
    %v1007 = vpop.f32.mrb[0].mxu0
    %v1008 = vadd.f32 %v157, %v1007
    %v1009 = vpop.f32.mrb[0].mxu0
    %v1010 = vpop.f32.mrb[0].mxu0
    %v1011 = vadd.f32 %v157, %v1010
    %v1012 = vpop.f32.mrb[0].mxu0
    %1013 = vmatprep.mubr.bf16.mxu0 0
    %1014 = vmatmul.mubr.bf16.gmra.mrb[0].mxu0 %v600
    %v1015 = vpop.f32.mrb[0].mxu0
    %v1016 = vadd.f32 %v157, %v1015
    %v1017 = vpop.f32.mrb[0].mxu0
    %v1018 = vpop.f32.mrb[0].mxu0
    %v1019 = vadd.f32 %v157, %v1018
    %v1020 = vpop.f32.mrb[0].mxu0
    %1021 = vmatprep.mubr.bf16.mxu0 0
    %1022 = vmatmul.mubr.bf16.gmra.mrb[0].mxu0 %v603
    %v1023 = vpop.f32.mrb[0].mxu0
    %v1024 = vadd.f32 %v157, %v1023
    %v1025 = vpop.f32.mrb[0].mxu0
    %v1026 = vpop.f32.mrb[0].mxu0
    %v1027 = vadd.f32 %v157, %v1026
    %v1028 = vpop.f32.mrb[0].mxu0
    %1029 = vmatprep.mubr.bf16.mxu0 0
    %1030 = vmatmul.mubr.bf16.gmra.mrb[0].mxu0 %v606
    %v1031 = vpop.f32.mrb[0].mxu0
    %v1032 = vadd.f32 %v157, %v1031
    %v1033 = vpop.f32.mrb[0].mxu0
    %v1034 = vpop.f32.mrb[0].mxu0
    %v1035 = vadd.f32 %v157, %v1034
    %v1036 = vpop.f32.mrb[0].mxu0
    %1037 = vmatprep.mubr.bf16.mxu0 0
    %1038 = vmatmul.mubr.bf16.gmra.mrb[0].mxu0 %v609
    %v1039 = vpop.f32.mrb[0].mxu0
    %v1040 = vadd.f32 %v157, %v1039
    %v1041 = vpop.f32.mrb[0].mxu0
    %v1042 = vpop.f32.mrb[0].mxu0
    %v1043 = vadd.f32 %v157, %v1042
    %v1044 = vpop.f32.mrb[0].mxu0
    %1045 = vmatprep.mubr.bf16.mxu0 0
    %1046 = vmatmul.mubr.bf16.gmra.mrb[0].mxu0 %v612
    %v1047 = vpop.f32.mrb[0].mxu0
    %v1048 = vadd.f32 %v157, %v1047
    %v1049 = vpop.f32.mrb[0].mxu0
    %v1050 = vpop.f32.mrb[0].mxu0
    %v1051 = vadd.f32 %v157, %v1050
    %v1052 = vpop.f32.mrb[0].mxu0
    %1053 = vmatprep.mubr.bf16.mxu0 0
    %1054 = vmatmul.mubr.bf16.gmra.mrb[0].mxu0 %v615
    %v1055 = vpop.f32.mrb[0].mxu0
    %v1056 = vadd.f32 %v157, %v1055
    %v1057 = vpop.f32.mrb[0].mxu0
    %v1058 = vpop.f32.mrb[0].mxu0
    %v1059 = vadd.f32 %v157, %v1058
    %v1060 = vpop.f32.mrb[0].mxu0
    %1061 = vmatprep.mubr.bf16.mxu0 0
    %1062 = vmatmul.mubr.bf16.gmra.mrb[0].mxu0 %v618
    %v1063 = vpop.f32.mrb[0].mxu0
    %v1064 = vadd.f32 %v157, %v1063
    %v1065 = vpop.f32.mrb[0].mxu0
    %v1066 = vpop.f32.mrb[0].mxu0
    %v1067 = vadd.f32 %v157, %v1066
    %v1068 = vpop.f32.mrb[0].mxu0
    %1069 = vmatprep.mubr.bf16.mxu0 0
    %1070 = vmatmul.mubr.bf16.gmra.mrb[0].mxu0 %v621
    %v1071 = vpop.f32.mrb[0].mxu0
    %v1072 = vadd.f32 %v157, %v1071
    %v1073 = vpop.f32.mrb[0].mxu0
    %v1074 = vpop.f32.mrb[0].mxu0
    %v1075 = vadd.f32 %v157, %v1074
    %v1076 = vpop.f32.mrb[0].mxu0
    %1077 = vmatprep.mubr.bf16.mxu0 0
    %1078 = vmatmul.mubr.bf16.gmra.mrb[0].mxu0 %v624
    %v1079 = vpop.f32.mrb[0].mxu0
    %v1080 = vadd.f32 %v157, %v1079
    %v1081 = vpop.f32.mrb[0].mxu0
    %v1082 = vpop.f32.mrb[0].mxu0
    %v1083 = vadd.f32 %v157, %v1082
    %v1084 = vpop.f32.mrb[0].mxu0
    %1085 = vmatprep.mubr.bf16.mxu0 0
    %1086 = vmatmul.mubr.bf16.gmra.mrb[0].mxu0 %v627
    %v1087 = vpop.f32.mrb[0].mxu0
    %v1088 = vadd.f32 %v157, %v1087
    %v1089 = vpop.f32.mrb[0].mxu0
    %v1090 = vpop.f32.mrb[0].mxu0
    %v1091 = vadd.f32 %v157, %v1090
    %v1092 = vpop.f32.mrb[0].mxu0
    %1093 = vmatprep.mubr.bf16.mxu0 0
    %1094 = vmatmul.mubr.bf16.gmra.mrb[0].mxu0 %v630
    %v1095 = vpop.f32.mrb[0].mxu0
    %v1096 = vadd.f32 %v157, %v1095
    %v1097 = vpop.f32.mrb[0].mxu0
    %v1098 = vpop.f32.mrb[0].mxu0
    %v1099 = vadd.f32 %v157, %v1098
    %v1100 = vpop.f32.mrb[0].mxu0
    %1101 = vmatprep.mubr.bf16.mxu0 0
    %1102 = vmatmul.mubr.bf16.gmra.mrb[0].mxu0 %v633
    %v1103 = vpop.f32.mrb[0].mxu0
    %v1104 = vadd.f32 %v157, %v1103
    %v1105 = vpop.f32.mrb[0].mxu0
    %v1106 = vpop.f32.mrb[0].mxu0
    %v1107 = vadd.f32 %v157, %v1106
    %v1108 = vpop.f32.mrb[0].mxu0
    %1109 = vmatprep.mubr.bf16.mxu0 0
    %1110 = vmatmul.mubr.bf16.gmra.mrb[0].mxu0 %v636
    %v1111 = vpop.f32.mrb[0].mxu0
    %v1112 = vadd.f32 %v157, %v1111
    %v1113 = vpop.f32.mrb[0].mxu0
    %v1114 = vpop.f32.mrb[0].mxu0
    %v1115 = vadd.f32 %v157, %v1114
    %v1116 = vpop.f32.mrb[0].mxu0
    %1117 = vmatprep.mubr.bf16.mxu0 0
    %1118 = vmatmul.mubr.bf16.gmra.mrb[0].mxu0 %v639
    %v1119 = vpop.f32.mrb[0].mxu0
    %v1120 = vadd.f32 %v157, %v1119
    %v1121 = vpop.f32.mrb[0].mxu0
    %v1122 = vpop.f32.mrb[0].mxu0
    %v1123 = vadd.f32 %v157, %v1122
    %v1124 = vpop.f32.mrb[0].mxu0
    %1125 = vmatprep.mubr.bf16.mxu0 0
    %1126 = vmatmul.mubr.bf16.gmra.mrb[0].mxu0 %v642
    %v1127 = vpop.f32.mrb[0].mxu0
    %v1128 = vadd.f32 %v157, %v1127
    %v1129 = vpop.f32.mrb[0].mxu0
    %v1130 = vpop.f32.mrb[0].mxu0
    %v1131 = vadd.f32 %v157, %v1130
    %v1132 = vpop.f32.mrb[0].mxu0
    %1133 = vmatprep.mubr.bf16.mxu0 0
    %1134 = vmatmul.mubr.bf16.gmra.mrb[0].mxu0 %v645
    %v1135 = vpop.f32.mrb[0].mxu0
    %v1136 = vadd.f32 %v157, %v1135
    %v1137 = vpop.f32.mrb[0].mxu0
    %v1138 = vpop.f32.mrb[0].mxu0
    %v1139 = vadd.f32 %v157, %v1138
    %v1140 = vpop.f32.mrb[0].mxu0
    %1141 = vmatprep.mubr.bf16.mxu0 0
    %1142 = vmatmul.mubr.bf16.gmra.mrb[0].mxu0 %v648
    %v1143 = vpop.f32.mrb[0].mxu0
    %v1144 = vadd.f32 %v157, %v1143
    %v1145 = vpop.f32.mrb[0].mxu0
    %v1146 = vpop.f32.mrb[0].mxu0
    %v1147 = vadd.f32 %v157, %v1146
    %v1148 = vpop.f32.mrb[0].mxu0
    %1149 = vmatprep.mubr.bf16.mxu0 0
    %1150 = vmatmul.mubr.bf16.gmra.mrb[0].mxu0 %v651
    %v1151 = vpop.f32.mrb[0].mxu0
    %v1152 = vadd.f32 %v157, %v1151
    %v1153 = vpop.f32.mrb[0].mxu0
    %v1154 = vpop.f32.mrb[0].mxu0
    %v1155 = vadd.f32 %v157, %v1154
    %v1156 = vpop.f32.mrb[0].mxu0
    %1157 = vmatprep.mubr.bf16.mxu0 0
    %1158 = vmatmul.mubr.bf16.gmra.mrb[0].mxu0 %v654
    %v1159 = vpop.f32.mrb[0].mxu0
    %v1160 = vadd.f32 %v157, %v1159
    %v1161 = vpop.f32.mrb[0].mxu0
    %v1162 = vpop.f32.mrb[0].mxu0
    %v1163 = vadd.f32 %v157, %v1162
    %v1164 = vpop.f32.mrb[0].mxu0
    %1165 = vmatprep.mubr.bf16.mxu0 0
    %1166 = vmatmul.mubr.bf16.gmra.mrb[0].mxu0 %v657
    %v1167 = vpop.f32.mrb[0].mxu0
    %v1168 = vadd.f32 %v157, %v1167
    %v1169 = vpop.f32.mrb[0].mxu0
    %v1170 = vpop.f32.mrb[0].mxu0
    %v1171 = vadd.f32 %v157, %v1170
    %v1172 = vpop.f32.mrb[0].mxu0
    %1173 = vmatprep.mubr.bf16.mxu0 0
    %1174 = vmatmul.mubr.bf16.gmra.mrb[0].mxu0 %v660
    %v1175 = vpop.f32.mrb[0].mxu0
    %v1176 = vadd.f32 %v157, %v1175
    %v1177 = vpop.f32.mrb[0].mxu0
    %v1178 = vpop.f32.mrb[0].mxu0
    %v1179 = vadd.f32 %v157, %v1178
    %v1180 = vpop.f32.mrb[0].mxu0
    %1181 = vmatprep.mubr.bf16.mxu0 0
    %1182 = vmatmul.mubr.bf16.gmra.mrb[0].mxu0 %v663
    %v1183 = vpop.f32.mrb[0].mxu0
    %v1184 = vadd.f32 %v157, %v1183
    %v1185 = vpop.f32.mrb[0].mxu0
    %v1186 = vpop.f32.mrb[0].mxu0
    %v1187 = vadd.f32 %v157, %v1186
    %v1188 = vpop.f32.mrb[0].mxu0
    %1189 = vmatprep.mubr.bf16.mxu0 0
    %1190 = vmatmul.mubr.bf16.gmra.mrb[0].mxu0 %v666
    %v1191 = vpop.f32.mrb[0].mxu0
    %v1192 = vadd.f32 %v157, %v1191
    %v1193 = vpop.f32.mrb[0].mxu0
    %v1194 = vpop.f32.mrb[0].mxu0
    %v1195 = vadd.f32 %v157, %v1194
    %v1196 = vpop.f32.mrb[0].mxu0
    %1197 = vmatprep.mubr.bf16.mxu0 0
    %1198 = vmatmul.mubr.bf16.gmra.mrb[0].mxu0 %v669
    %v1199 = vpop.f32.mrb[0].mxu0
    %v1200 = vadd.f32 %v157, %v1199
    %v1201 = vpop.f32.mrb[0].mxu0
    %v1202 = vpop.f32.mrb[0].mxu0
    %v1203 = vadd.f32 %v157, %v1202
    %v1204 = vpop.f32.mrb[0].mxu0
    %1205 = vmatprep.mubr.bf16.mxu0 0
    %1206 = vmatmul.mubr.bf16.gmra.mrb[0].mxu0 %v672
    %v1207 = vpop.f32.mrb[0].mxu0
    %v1208 = vadd.f32 %v157, %v1207
    %v1209 = vpop.f32.mrb[0].mxu0
    %v1210 = vpop.f32.mrb[0].mxu0
    %v1211 = vadd.f32 %v157, %v1210
    %v1212 = vpop.f32.mrb[0].mxu0
    %1213 = vmatprep.mubr.bf16.mxu0 0
    %1214 = vmatmul.mubr.bf16.gmra.mrb[0].mxu0 %v675
    %v1215 = vpop.f32.mrb[0].mxu0
    %v1216 = vadd.f32 %v157, %v1215
    %v1217 = vpop.f32.mrb[0].mxu0
    %v1218 = vpop.f32.mrb[0].mxu0
    %v1219 = vadd.f32 %v157, %v1218
    %v1220 = vpop.f32.mrb[0].mxu0
    %1221 = vdwg.mxu0
    %v1222 = vmax.f32 %v712, 0.0
    %v1223 = vmax.f32 %v715, 0.0
    %v1224 = vmax.f32 %v720, 0.0
    %v1225 = vmax.f32 %v723, 0.0
    %v1226 = vmax.f32 %v728, 0.0
    %v1227 = vmax.f32 %v731, 0.0
    %v1228 = vmax.f32 %v736, 0.0
    %v1229 = vmax.f32 %v739, 0.0
    %v1230 = vmax.f32 %v744, 0.0
    %v1231 = vmax.f32 %v747, 0.0
    %v1232 = vmax.f32 %v752, 0.0
    %v1233 = vmax.f32 %v755, 0.0
    %v1234 = vmax.f32 %v760, 0.0
    %v1235 = vmax.f32 %v763, 0.0
    %v1236 = vmax.f32 %v768, 0.0
    %v1237 = vmax.f32 %v771, 0.0
    %v1238 = vmax.f32 %v776, 0.0
    %v1239 = vmax.f32 %v779, 0.0
    %v1240 = vmax.f32 %v784, 0.0
    %v1241 = vmax.f32 %v787, 0.0
    %v1242 = vmax.f32 %v792, 0.0
    %v1243 = vmax.f32 %v795, 0.0
    %v1244 = vmax.f32 %v800, 0.0
    %v1245 = vmax.f32 %v803, 0.0
    %v1246 = vmax.f32 %v808, 0.0
    %v1247 = vmax.f32 %v811, 0.0
    %v1248 = vmax.f32 %v816, 0.0
    %v1249 = vmax.f32 %v819, 0.0
    %v1250 = vmax.f32 %v824, 0.0
    %v1251 = vmax.f32 %v827, 0.0
    %v1252 = vmax.f32 %v832, 0.0
    %v1253 = vmax.f32 %v835, 0.0
    %v1254 = vmax.f32 %v840, 0.0
    %v1255 = vmax.f32 %v843, 0.0
    %v1256 = vmax.f32 %v848, 0.0
    %v1257 = vmax.f32 %v851, 0.0
    %v1258 = vmax.f32 %v856, 0.0
    %v1259 = vmax.f32 %v859, 0.0
    %v1260 = vmax.f32 %v864, 0.0
    %v1261 = vmax.f32 %v867, 0.0
    %v1262 = vmax.f32 %v872, 0.0
    %v1263 = vmax.f32 %v875, 0.0
    %v1264 = vmax.f32 %v880, 0.0
    %v1265 = vmax.f32 %v883, 0.0
    %v1266 = vmax.f32 %v888, 0.0
    %v1267 = vmax.f32 %v891, 0.0
    %v1268 = vmax.f32 %v896, 0.0
    %v1269 = vmax.f32 %v899, 0.0
    %v1270 = vmax.f32 %v904, 0.0
    %v1271 = vmax.f32 %v907, 0.0
    %v1272 = vmax.f32 %v912, 0.0
    %v1273 = vmax.f32 %v915, 0.0
    %v1274 = vmax.f32 %v920, 0.0
    %v1275 = vmax.f32 %v923, 0.0
    %v1276 = vmax.f32 %v928, 0.0
    %v1277 = vmax.f32 %v931, 0.0
    %v1278 = vmax.f32 %v936, 0.0
    %v1279 = vmax.f32 %v939, 0.0
    %v1280 = vmax.f32 %v944, 0.0
    %v1281 = vmax.f32 %v947, 0.0
    %v1282 = vmax.f32 %v952, 0.0
    %v1283 = vmax.f32 %v955, 0.0
    %v1284 = vmax.f32 %v960, 0.0
    %v1285 = vmax.f32 %v963, 0.0
    %v1286 = vmax.f32 %v968, 0.0
    %v1287 = vmax.f32 %v971, 0.0
    %v1288 = vmax.f32 %v976, 0.0
    %v1289 = vmax.f32 %v979, 0.0
    %v1290 = vmax.f32 %v984, 0.0
    %v1291 = vmax.f32 %v987, 0.0
    %v1292 = vmax.f32 %v992, 0.0
    %v1293 = vmax.f32 %v995, 0.0
    %v1294 = vmax.f32 %v1000, 0.0
    %v1295 = vmax.f32 %v1003, 0.0
    %v1296 = vmax.f32 %v1008, 0.0
    %v1297 = vmax.f32 %v1011, 0.0
    %v1298 = vmax.f32 %v1016, 0.0
    %v1299 = vmax.f32 %v1019, 0.0
    %v1300 = vmax.f32 %v1024, 0.0
    %v1301 = vmax.f32 %v1027, 0.0
    %v1302 = vmax.f32 %v1032, 0.0
    %v1303 = vmax.f32 %v1035, 0.0
    %v1304 = vmax.f32 %v1040, 0.0
    %v1305 = vmax.f32 %v1043, 0.0
    %v1306 = vmax.f32 %v1048, 0.0
    %v1307 = vmax.f32 %v1051, 0.0
    %v1308 = vmax.f32 %v1056, 0.0
    %v1309 = vmax.f32 %v1059, 0.0
    %v1310 = vmax.f32 %v1064, 0.0
    %v1311 = vmax.f32 %v1067, 0.0
    %v1312 = vmax.f32 %v1072, 0.0
    %v1313 = vmax.f32 %v1075, 0.0
    %v1314 = vmax.f32 %v1080, 0.0
    %v1315 = vmax.f32 %v1083, 0.0
    %v1316 = vmax.f32 %v1088, 0.0
    %v1317 = vmax.f32 %v1091, 0.0
    %v1318 = vmax.f32 %v1096, 0.0
    %v1319 = vmax.f32 %v1099, 0.0
    %v1320 = vmax.f32 %v1104, 0.0
    %v1321 = vmax.f32 %v1107, 0.0
    %v1322 = vmax.f32 %v1112, 0.0
    %v1323 = vmax.f32 %v1115, 0.0
    %v1324 = vmax.f32 %v1120, 0.0
    %v1325 = vmax.f32 %v1123, 0.0
    %v1326 = vmax.f32 %v1128, 0.0
    %v1327 = vmax.f32 %v1131, 0.0
    %v1328 = vmax.f32 %v1136, 0.0
    %v1329 = vmax.f32 %v1139, 0.0
    %v1330 = vmax.f32 %v1144, 0.0
    %v1331 = vmax.f32 %v1147, 0.0
    %v1332 = vmax.f32 %v1152, 0.0
    %v1333 = vmax.f32 %v1155, 0.0
    %v1334 = vmax.f32 %v1160, 0.0
    %v1335 = vmax.f32 %v1163, 0.0
    %v1336 = vmax.f32 %v1168, 0.0
    %v1337 = vmax.f32 %v1171, 0.0
    %v1338 = vmax.f32 %v1176, 0.0
    %v1339 = vmax.f32 %v1179, 0.0
    %v1340 = vmax.f32 %v1184, 0.0
    %v1341 = vmax.f32 %v1187, 0.0
    %v1342 = vmax.f32 %v1192, 0.0
    %v1343 = vmax.f32 %v1195, 0.0
    %v1344 = vmax.f32 %v1200, 0.0
    %v1345 = vmax.f32 %v1203, 0.0
    %v1346 = vmax.f32 %v1208, 0.0
    %v1347 = vmax.f32 %v1211, 0.0
    %v1348 = vmax.f32 %v1216, 0.0
    %v1349 = vmax.f32 %v1219, 0.0
    %v1350 = vpack.c.bf16 %v1223, %v1222
    %v1351 = vpack.c.bf16 %v1225, %v1224
    %v1352 = vpack.c.bf16 %v1227, %v1226
    %v1353 = vpack.c.bf16 %v1229, %v1228
    %v1354 = vpack.c.bf16 %v1231, %v1230
    %v1355 = vpack.c.bf16 %v1233, %v1232
    %v1356 = vpack.c.bf16 %v1235, %v1234
    %v1357 = vpack.c.bf16 %v1237, %v1236
    %v1358 = vpack.c.bf16 %v1239, %v1238
    %v1359 = vpack.c.bf16 %v1241, %v1240
    %v1360 = vpack.c.bf16 %v1243, %v1242
    %v1361 = vpack.c.bf16 %v1245, %v1244
    %v1362 = vpack.c.bf16 %v1247, %v1246
    %v1363 = vpack.c.bf16 %v1249, %v1248
    %v1364 = vpack.c.bf16 %v1251, %v1250
    %v1365 = vpack.c.bf16 %v1253, %v1252
    %v1366 = vpack.c.bf16 %v1255, %v1254
    %v1367 = vpack.c.bf16 %v1257, %v1256
    %v1368 = vpack.c.bf16 %v1259, %v1258
    %v1369 = vpack.c.bf16 %v1261, %v1260
    %v1370 = vpack.c.bf16 %v1263, %v1262
    %v1371 = vpack.c.bf16 %v1265, %v1264
    %v1372 = vpack.c.bf16 %v1267, %v1266
    %v1373 = vpack.c.bf16 %v1269, %v1268
    %v1374 = vpack.c.bf16 %v1271, %v1270
    %v1375 = vpack.c.bf16 %v1273, %v1272
    %v1376 = vpack.c.bf16 %v1275, %v1274
    %v1377 = vpack.c.bf16 %v1277, %v1276
    %v1378 = vpack.c.bf16 %v1279, %v1278
    %v1379 = vpack.c.bf16 %v1281, %v1280
    %v1380 = vpack.c.bf16 %v1283, %v1282
    %v1381 = vpack.c.bf16 %v1285, %v1284
    %v1382 = vpack.c.bf16 %v1287, %v1286
    %v1383 = vpack.c.bf16 %v1289, %v1288
    %v1384 = vpack.c.bf16 %v1291, %v1290
    %v1385 = vpack.c.bf16 %v1293, %v1292
    %v1386 = vpack.c.bf16 %v1295, %v1294
    %v1387 = vpack.c.bf16 %v1297, %v1296
    %v1388 = vpack.c.bf16 %v1299, %v1298
    %v1389 = vpack.c.bf16 %v1301, %v1300
    %v1390 = vpack.c.bf16 %v1303, %v1302
    %v1391 = vpack.c.bf16 %v1305, %v1304
    %v1392 = vpack.c.bf16 %v1307, %v1306
    %v1393 = vpack.c.bf16 %v1309, %v1308
    %v1394 = vpack.c.bf16 %v1311, %v1310
    %v1395 = vpack.c.bf16 %v1313, %v1312
    %v1396 = vpack.c.bf16 %v1315, %v1314
    %v1397 = vpack.c.bf16 %v1317, %v1316
    %v1398 = vpack.c.bf16 %v1319, %v1318
    %v1399 = vpack.c.bf16 %v1321, %v1320
    %v1400 = vpack.c.bf16 %v1323, %v1322
    %v1401 = vpack.c.bf16 %v1325, %v1324
    %v1402 = vpack.c.bf16 %v1327, %v1326
    %v1403 = vpack.c.bf16 %v1329, %v1328
    %v1404 = vpack.c.bf16 %v1331, %v1330
    %v1405 = vpack.c.bf16 %v1333, %v1332
    %v1406 = vpack.c.bf16 %v1335, %v1334
    %v1407 = vpack.c.bf16 %v1337, %v1336
    %v1408 = vpack.c.bf16 %v1339, %v1338
    %v1409 = vpack.c.bf16 %v1341, %v1340
    %v1410 = vpack.c.bf16 %v1343, %v1342
    %v1411 = vpack.c.bf16 %v1345, %v1344
    %v1412 = vpack.c.bf16 %v1347, %v1346
    %v1413 = vpack.c.bf16 %v1349, %v1348
    %v1414 = vld [vmem:[%s2] sm:$0xf]
    %v1415 = vld [vmem:[%s2 + $0x4] sm:$0xf]
    %v1416 = vld [vmem:[%s2 + $0x8] sm:$0xf]
    %v1417 = vld [vmem:[%s2 + $0xc] sm:$0xf]
    %v1418 = vld [vmem:[%s2 + $0x10] sm:$0xf]
    %v1419 = vld [vmem:[%s2 + $0x14] sm:$0xf]
    %v1420 = vld [vmem:[%s2 + $0x18] sm:$0xf]
    %v1421 = vld [vmem:[%s2 + $0x1c] sm:$0xf]
    %v1422 = vld [vmem:[%s2 + $0x20] sm:$0xf]
    %v1423 = vld [vmem:[%s2 + $0x24] sm:$0xf]
    %v1424 = vld [vmem:[%s2 + $0x28] sm:$0xf]
    %v1425 = vld [vmem:[%s2 + $0x2c] sm:$0xf]
    %v1426 = vld [vmem:[%s2 + $0x30] sm:$0xf]
    %v1427 = vld [vmem:[%s2 + $0x34] sm:$0xf]
    %v1428 = vld [vmem:[%s2 + $0x38] sm:$0xf]
    %v1429 = vld [vmem:[%s2 + $0x3c] sm:$0xf]
    %v1430 = vlaneseq
    %v1431 = vshrl.u32 %v1430, 7
    %v1432 = vsub.s32 0, %v1431
    %v1433 = vrot.slane %v148, %v1432
    %v1450 = vunpack.c.l.b16 %v1414
    %v1451 = vunpack.c.l.b16 %v1415
    %v1452 = vunpack.c.l.b16 %v1416
    %v1453 = vunpack.c.l.b16 %v1417
    %v1454 = vunpack.c.l.b16 %v1418
    %v1455 = vunpack.c.l.b16 %v1419
    %v1456 = vunpack.c.l.b16 %v1420
    %v1457 = vunpack.c.l.b16 %v1421
    %v1458 = vunpack.c.l.b16 %v1422
    %v1459 = vunpack.c.l.b16 %v1423
    %v1460 = vunpack.c.l.b16 %v1424
    %v1461 = vunpack.c.l.b16 %v1425
    %v1462 = vunpack.c.l.b16 %v1426
    %v1463 = vunpack.c.l.b16 %v1427
    %v1464 = vunpack.c.l.b16 %v1428
    %v1465 = vunpack.c.l.b16 %v1429
    %v1466 = vpack.c.b16 %v1451, %v1450
    %v1467 = vpack.c.b16 %v1453, %v1452
    %v1468 = vpack.c.b16 %v1455, %v1454
    %v1469 = vpack.c.b16 %v1457, %v1456
    %v1470 = vpack.c.b16 %v1459, %v1458
    %v1471 = vpack.c.b16 %v1461, %v1460
    %v1472 = vpack.c.b16 %v1463, %v1462
    %v1473 = vpack.c.b16 %v1465, %v1464
    %1482 = vmatprep.subr.bf16.mxu0 0
    %1483 = vmatpush1.bf16.msra.mxu0 %v1466
    %1484 = vmatprep.subr.bf16.mxu0 0
    %1485 = vmatpush1.bf16.msra.mxu0 %v1467
    %1486 = vmatprep.subr.bf16.mxu0 0
    %1487 = vmatpush1.bf16.msra.mxu0 %v1468
    %1488 = vmatprep.subr.bf16.mxu0 0
    %1489 = vmatpush1.bf16.msra.mxu0 %v1469
    %1490 = vmatprep.subr.bf16.mxu0 0
    %1491 = vmatpush1.bf16.msra.mxu0 %v1470
    %1492 = vmatprep.subr.bf16.mxu0 0
    %1493 = vmatpush1.bf16.msra.mxu0 %v1471
    %1494 = vmatprep.subr.bf16.mxu0 0
    %1495 = vmatpush1.bf16.msra.mxu0 %v1472
    %1496 = vmatprep.subr.bf16.mxu0 0
    %1497 = vmatpush1.bf16.msra.mxu0 %v1473
    %1498 = vmatprep.subr.bf16.mxu0 0
    %1499 = vmatpush1.bf16.msra.mxu0 0
    %1500 = vmatprep.subr.bf16.mxu0 0
    %1501 = vmatpush1.bf16.msra.mxu0 0
    %1502 = vmatprep.subr.bf16.mxu0 0
    %1503 = vmatpush1.bf16.msra.mxu0 0
    %1504 = vmatprep.subr.bf16.mxu0 0
    %1505 = vmatpush1.bf16.msra.mxu0 0
    %1506 = vmatprep.subr.bf16.mxu0 0
    %1507 = vmatpush1.bf16.msra.mxu0 0
    %1508 = vmatprep.subr.bf16.mxu0 0
    %1509 = vmatpush1.bf16.msra.mxu0 0
    %1510 = vmatprep.subr.bf16.mxu0 0
    %1511 = vmatpush1.bf16.msra.mxu0 0
    %1512 = vmatprep.subr.bf16.mxu0 0
    %1513 = vmatpush1.bf16.msra.mxu0 0
    %1514 = vmatprep.mubr.bf16.mxu0 0
    %1515 = vmatmul.mubr.bf16.gmra.mrb[0].mxu0 %v1350
    %v1516 = vpop.f32.mrb[0].mxu0
    %v1517 = vadd.f32 %v1433, %v1516
    %v1518 = vpop.f32.mrb[0].mxu0
    %v1519 = vpop.f32.mrb[0].mxu0
    %v1520 = vadd.f32 %v1433, %v1519
    %v1521 = vpop.f32.mrb[0].mxu0
    %1522 = vmatprep.mubr.bf16.mxu0 0
    %1523 = vmatmul.mubr.bf16.gmra.mrb[0].mxu0 %v1351
    %v1524 = vpop.f32.mrb[0].mxu0
    %v1525 = vadd.f32 %v1433, %v1524
    %v1526 = vpop.f32.mrb[0].mxu0
    %v1527 = vpop.f32.mrb[0].mxu0
    %v1528 = vadd.f32 %v1433, %v1527
    %v1529 = vpop.f32.mrb[0].mxu0
    %1530 = vmatprep.mubr.bf16.mxu0 0
    %1531 = vmatmul.mubr.bf16.gmra.mrb[0].mxu0 %v1352
    %v1532 = vpop.f32.mrb[0].mxu0
    %v1533 = vadd.f32 %v1433, %v1532
    %v1534 = vpop.f32.mrb[0].mxu0
    %v1535 = vpop.f32.mrb[0].mxu0
    %v1536 = vadd.f32 %v1433, %v1535
    %v1537 = vpop.f32.mrb[0].mxu0
    %1538 = vmatprep.mubr.bf16.mxu0 0
    %1539 = vmatmul.mubr.bf16.gmra.mrb[0].mxu0 %v1353
    %v1540 = vpop.f32.mrb[0].mxu0
    %v1541 = vadd.f32 %v1433, %v1540
    %v1542 = vpop.f32.mrb[0].mxu0
    %v1543 = vpop.f32.mrb[0].mxu0
    %v1544 = vadd.f32 %v1433, %v1543
    %v1545 = vpop.f32.mrb[0].mxu0
    %1546 = vmatprep.mubr.bf16.mxu0 0
    %1547 = vmatmul.mubr.bf16.gmra.mrb[0].mxu0 %v1354
    %v1548 = vpop.f32.mrb[0].mxu0
    %v1549 = vadd.f32 %v1433, %v1548
    %v1550 = vpop.f32.mrb[0].mxu0
    %v1551 = vpop.f32.mrb[0].mxu0
    %v1552 = vadd.f32 %v1433, %v1551
    %v1553 = vpop.f32.mrb[0].mxu0
    %1554 = vmatprep.mubr.bf16.mxu0 0
    %1555 = vmatmul.mubr.bf16.gmra.mrb[0].mxu0 %v1355
    %v1556 = vpop.f32.mrb[0].mxu0
    %v1557 = vadd.f32 %v1433, %v1556
    %v1558 = vpop.f32.mrb[0].mxu0
    %v1559 = vpop.f32.mrb[0].mxu0
    %v1560 = vadd.f32 %v1433, %v1559
    %v1561 = vpop.f32.mrb[0].mxu0
    %1562 = vmatprep.mubr.bf16.mxu0 0
    %1563 = vmatmul.mubr.bf16.gmra.mrb[0].mxu0 %v1356
    %v1564 = vpop.f32.mrb[0].mxu0
    %v1565 = vadd.f32 %v1433, %v1564
    %v1566 = vpop.f32.mrb[0].mxu0
    %v1567 = vpop.f32.mrb[0].mxu0
    %v1568 = vadd.f32 %v1433, %v1567
    %v1569 = vpop.f32.mrb[0].mxu0
    %1570 = vmatprep.mubr.bf16.mxu0 0
    %1571 = vmatmul.mubr.bf16.gmra.mrb[0].mxu0 %v1357
    %v1572 = vpop.f32.mrb[0].mxu0
    %v1573 = vadd.f32 %v1433, %v1572
    %v1574 = vpop.f32.mrb[0].mxu0
    %v1575 = vpop.f32.mrb[0].mxu0
    %v1576 = vadd.f32 %v1433, %v1575
    %v1577 = vpop.f32.mrb[0].mxu0
    %1578 = vmatprep.mubr.bf16.mxu0 0
    %1579 = vmatmul.mubr.bf16.gmra.mrb[0].mxu0 %v1358
    %v1580 = vpop.f32.mrb[0].mxu0
    %v1581 = vadd.f32 %v1433, %v1580
    %v1582 = vpop.f32.mrb[0].mxu0
    %v1583 = vpop.f32.mrb[0].mxu0
    %v1584 = vadd.f32 %v1433, %v1583
    %v1585 = vpop.f32.mrb[0].mxu0
    %1586 = vmatprep.mubr.bf16.mxu0 0
    %1587 = vmatmul.mubr.bf16.gmra.mrb[0].mxu0 %v1359
    %v1588 = vpop.f32.mrb[0].mxu0
    %v1589 = vadd.f32 %v1433, %v1588
    %v1590 = vpop.f32.mrb[0].mxu0
    %v1591 = vpop.f32.mrb[0].mxu0
    %v1592 = vadd.f32 %v1433, %v1591
    %v1593 = vpop.f32.mrb[0].mxu0
    %1594 = vmatprep.mubr.bf16.mxu0 0
    %1595 = vmatmul.mubr.bf16.gmra.mrb[0].mxu0 %v1360
    %v1596 = vpop.f32.mrb[0].mxu0
    %v1597 = vadd.f32 %v1433, %v1596
    %v1598 = vpop.f32.mrb[0].mxu0
    %v1599 = vpop.f32.mrb[0].mxu0
    %v1600 = vadd.f32 %v1433, %v1599
    %v1601 = vpop.f32.mrb[0].mxu0
    %1602 = vmatprep.mubr.bf16.mxu0 0
    %1603 = vmatmul.mubr.bf16.gmra.mrb[0].mxu0 %v1361
    %v1604 = vpop.f32.mrb[0].mxu0
    %v1605 = vadd.f32 %v1433, %v1604
    %v1606 = vpop.f32.mrb[0].mxu0
    %v1607 = vpop.f32.mrb[0].mxu0
    %v1608 = vadd.f32 %v1433, %v1607
    %v1609 = vpop.f32.mrb[0].mxu0
    %1610 = vmatprep.mubr.bf16.mxu0 0
    %1611 = vmatmul.mubr.bf16.gmra.mrb[0].mxu0 %v1362
    %v1612 = vpop.f32.mrb[0].mxu0
    %v1613 = vadd.f32 %v1433, %v1612
    %v1614 = vpop.f32.mrb[0].mxu0
    %v1615 = vpop.f32.mrb[0].mxu0
    %v1616 = vadd.f32 %v1433, %v1615
    %v1617 = vpop.f32.mrb[0].mxu0
    %1618 = vmatprep.mubr.bf16.mxu0 0
    %1619 = vmatmul.mubr.bf16.gmra.mrb[0].mxu0 %v1363
    %v1620 = vpop.f32.mrb[0].mxu0
    %v1621 = vadd.f32 %v1433, %v1620
    %v1622 = vpop.f32.mrb[0].mxu0
    %v1623 = vpop.f32.mrb[0].mxu0
    %v1624 = vadd.f32 %v1433, %v1623
    %v1625 = vpop.f32.mrb[0].mxu0
    %1626 = vmatprep.mubr.bf16.mxu0 0
    %1627 = vmatmul.mubr.bf16.gmra.mrb[0].mxu0 %v1364
    %v1628 = vpop.f32.mrb[0].mxu0
    %v1629 = vadd.f32 %v1433, %v1628
    %v1630 = vpop.f32.mrb[0].mxu0
    %v1631 = vpop.f32.mrb[0].mxu0
    %v1632 = vadd.f32 %v1433, %v1631
    %v1633 = vpop.f32.mrb[0].mxu0
    %1634 = vmatprep.mubr.bf16.mxu0 0
    %1635 = vmatmul.mubr.bf16.gmra.mrb[0].mxu0 %v1365
    %v1636 = vpop.f32.mrb[0].mxu0
    %v1637 = vadd.f32 %v1433, %v1636
    %v1638 = vpop.f32.mrb[0].mxu0
    %v1639 = vpop.f32.mrb[0].mxu0
    %v1640 = vadd.f32 %v1433, %v1639
    %v1641 = vpop.f32.mrb[0].mxu0
    %1642 = vmatprep.mubr.bf16.mxu0 0
    %1643 = vmatmul.mubr.bf16.gmra.mrb[0].mxu0 %v1366
    %v1644 = vpop.f32.mrb[0].mxu0
    %v1645 = vadd.f32 %v1433, %v1644
    %v1646 = vpop.f32.mrb[0].mxu0
    %v1647 = vpop.f32.mrb[0].mxu0
    %v1648 = vadd.f32 %v1433, %v1647
    %v1649 = vpop.f32.mrb[0].mxu0
    %1650 = vmatprep.mubr.bf16.mxu0 0
    %1651 = vmatmul.mubr.bf16.gmra.mrb[0].mxu0 %v1367
    %v1652 = vpop.f32.mrb[0].mxu0
    %v1653 = vadd.f32 %v1433, %v1652
    %v1654 = vpop.f32.mrb[0].mxu0
    %v1655 = vpop.f32.mrb[0].mxu0
    %v1656 = vadd.f32 %v1433, %v1655
    %v1657 = vpop.f32.mrb[0].mxu0
    %1658 = vmatprep.mubr.bf16.mxu0 0
    %1659 = vmatmul.mubr.bf16.gmra.mrb[0].mxu0 %v1368
    %v1660 = vpop.f32.mrb[0].mxu0
    %v1661 = vadd.f32 %v1433, %v1660
    %v1662 = vpop.f32.mrb[0].mxu0
    %v1663 = vpop.f32.mrb[0].mxu0
    %v1664 = vadd.f32 %v1433, %v1663
    %v1665 = vpop.f32.mrb[0].mxu0
    %1666 = vmatprep.mubr.bf16.mxu0 0
    %1667 = vmatmul.mubr.bf16.gmra.mrb[0].mxu0 %v1369
    %v1668 = vpop.f32.mrb[0].mxu0
    %v1669 = vadd.f32 %v1433, %v1668
    %v1670 = vpop.f32.mrb[0].mxu0
    %v1671 = vpop.f32.mrb[0].mxu0
    %v1672 = vadd.f32 %v1433, %v1671
    %v1673 = vpop.f32.mrb[0].mxu0
    %1674 = vmatprep.mubr.bf16.mxu0 0
    %1675 = vmatmul.mubr.bf16.gmra.mrb[0].mxu0 %v1370
    %v1676 = vpop.f32.mrb[0].mxu0
    %v1677 = vadd.f32 %v1433, %v1676
    %v1678 = vpop.f32.mrb[0].mxu0
    %v1679 = vpop.f32.mrb[0].mxu0
    %v1680 = vadd.f32 %v1433, %v1679
    %v1681 = vpop.f32.mrb[0].mxu0
    %1682 = vmatprep.mubr.bf16.mxu0 0
    %1683 = vmatmul.mubr.bf16.gmra.mrb[0].mxu0 %v1371
    %v1684 = vpop.f32.mrb[0].mxu0
    %v1685 = vadd.f32 %v1433, %v1684
    %v1686 = vpop.f32.mrb[0].mxu0
    %v1687 = vpop.f32.mrb[0].mxu0
    %v1688 = vadd.f32 %v1433, %v1687
    %v1689 = vpop.f32.mrb[0].mxu0
    %1690 = vmatprep.mubr.bf16.mxu0 0
    %1691 = vmatmul.mubr.bf16.gmra.mrb[0].mxu0 %v1372
    %v1692 = vpop.f32.mrb[0].mxu0
    %v1693 = vadd.f32 %v1433, %v1692
    %v1694 = vpop.f32.mrb[0].mxu0
    %v1695 = vpop.f32.mrb[0].mxu0
    %v1696 = vadd.f32 %v1433, %v1695
    %v1697 = vpop.f32.mrb[0].mxu0
    %1698 = vmatprep.mubr.bf16.mxu0 0
    %1699 = vmatmul.mubr.bf16.gmra.mrb[0].mxu0 %v1373
    %v1700 = vpop.f32.mrb[0].mxu0
    %v1701 = vadd.f32 %v1433, %v1700
    %v1702 = vpop.f32.mrb[0].mxu0
    %v1703 = vpop.f32.mrb[0].mxu0
    %v1704 = vadd.f32 %v1433, %v1703
    %v1705 = vpop.f32.mrb[0].mxu0
    %1706 = vmatprep.mubr.bf16.mxu0 0
    %1707 = vmatmul.mubr.bf16.gmra.mrb[0].mxu0 %v1374
    %v1708 = vpop.f32.mrb[0].mxu0
    %v1709 = vadd.f32 %v1433, %v1708
    %v1710 = vpop.f32.mrb[0].mxu0
    %v1711 = vpop.f32.mrb[0].mxu0
    %v1712 = vadd.f32 %v1433, %v1711
    %v1713 = vpop.f32.mrb[0].mxu0
    %1714 = vmatprep.mubr.bf16.mxu0 0
    %1715 = vmatmul.mubr.bf16.gmra.mrb[0].mxu0 %v1375
    %v1716 = vpop.f32.mrb[0].mxu0
    %v1717 = vadd.f32 %v1433, %v1716
    %v1718 = vpop.f32.mrb[0].mxu0
    %v1719 = vpop.f32.mrb[0].mxu0
    %v1720 = vadd.f32 %v1433, %v1719
    %v1721 = vpop.f32.mrb[0].mxu0
    %1722 = vmatprep.mubr.bf16.mxu0 0
    %1723 = vmatmul.mubr.bf16.gmra.mrb[0].mxu0 %v1376
    %v1724 = vpop.f32.mrb[0].mxu0
    %v1725 = vadd.f32 %v1433, %v1724
    %v1726 = vpop.f32.mrb[0].mxu0
    %v1727 = vpop.f32.mrb[0].mxu0
    %v1728 = vadd.f32 %v1433, %v1727
    %v1729 = vpop.f32.mrb[0].mxu0
    %1730 = vmatprep.mubr.bf16.mxu0 0
    %1731 = vmatmul.mubr.bf16.gmra.mrb[0].mxu0 %v1377
    %v1732 = vpop.f32.mrb[0].mxu0
    %v1733 = vadd.f32 %v1433, %v1732
    %v1734 = vpop.f32.mrb[0].mxu0
    %v1735 = vpop.f32.mrb[0].mxu0
    %v1736 = vadd.f32 %v1433, %v1735
    %v1737 = vpop.f32.mrb[0].mxu0
    %1738 = vmatprep.mubr.bf16.mxu0 0
    %1739 = vmatmul.mubr.bf16.gmra.mrb[0].mxu0 %v1378
    %v1740 = vpop.f32.mrb[0].mxu0
    %v1741 = vadd.f32 %v1433, %v1740
    %v1742 = vpop.f32.mrb[0].mxu0
    %v1743 = vpop.f32.mrb[0].mxu0
    %v1744 = vadd.f32 %v1433, %v1743
    %v1745 = vpop.f32.mrb[0].mxu0
    %1746 = vmatprep.mubr.bf16.mxu0 0
    %1747 = vmatmul.mubr.bf16.gmra.mrb[0].mxu0 %v1379
    %v1748 = vpop.f32.mrb[0].mxu0
    %v1749 = vadd.f32 %v1433, %v1748
    %v1750 = vpop.f32.mrb[0].mxu0
    %v1751 = vpop.f32.mrb[0].mxu0
    %v1752 = vadd.f32 %v1433, %v1751
    %v1753 = vpop.f32.mrb[0].mxu0
    %1754 = vmatprep.mubr.bf16.mxu0 0
    %1755 = vmatmul.mubr.bf16.gmra.mrb[0].mxu0 %v1380
    %v1756 = vpop.f32.mrb[0].mxu0
    %v1757 = vadd.f32 %v1433, %v1756
    %v1758 = vpop.f32.mrb[0].mxu0
    %v1759 = vpop.f32.mrb[0].mxu0
    %v1760 = vadd.f32 %v1433, %v1759
    %v1761 = vpop.f32.mrb[0].mxu0
    %1762 = vmatprep.mubr.bf16.mxu0 0
    %1763 = vmatmul.mubr.bf16.gmra.mrb[0].mxu0 %v1381
    %v1764 = vpop.f32.mrb[0].mxu0
    %v1765 = vadd.f32 %v1433, %v1764
    %v1766 = vpop.f32.mrb[0].mxu0
    %v1767 = vpop.f32.mrb[0].mxu0
    %v1768 = vadd.f32 %v1433, %v1767
    %v1769 = vpop.f32.mrb[0].mxu0
    %1770 = vmatprep.mubr.bf16.mxu0 0
    %1771 = vmatmul.mubr.bf16.gmra.mrb[0].mxu0 %v1382
    %v1772 = vpop.f32.mrb[0].mxu0
    %v1773 = vadd.f32 %v1433, %v1772
    %v1774 = vpop.f32.mrb[0].mxu0
    %v1775 = vpop.f32.mrb[0].mxu0
    %v1776 = vadd.f32 %v1433, %v1775
    %v1777 = vpop.f32.mrb[0].mxu0
    %1778 = vmatprep.mubr.bf16.mxu0 0
    %1779 = vmatmul.mubr.bf16.gmra.mrb[0].mxu0 %v1383
    %v1780 = vpop.f32.mrb[0].mxu0
    %v1781 = vadd.f32 %v1433, %v1780
    %v1782 = vpop.f32.mrb[0].mxu0
    %v1783 = vpop.f32.mrb[0].mxu0
    %v1784 = vadd.f32 %v1433, %v1783
    %v1785 = vpop.f32.mrb[0].mxu0
    %1786 = vmatprep.mubr.bf16.mxu0 0
    %1787 = vmatmul.mubr.bf16.gmra.mrb[0].mxu0 %v1384
    %v1788 = vpop.f32.mrb[0].mxu0
    %v1789 = vadd.f32 %v1433, %v1788
    %v1790 = vpop.f32.mrb[0].mxu0
    %v1791 = vpop.f32.mrb[0].mxu0
    %v1792 = vadd.f32 %v1433, %v1791
    %v1793 = vpop.f32.mrb[0].mxu0
    %1794 = vmatprep.mubr.bf16.mxu0 0
    %1795 = vmatmul.mubr.bf16.gmra.mrb[0].mxu0 %v1385
    %v1796 = vpop.f32.mrb[0].mxu0
    %v1797 = vadd.f32 %v1433, %v1796
    %v1798 = vpop.f32.mrb[0].mxu0
    %v1799 = vpop.f32.mrb[0].mxu0
    %v1800 = vadd.f32 %v1433, %v1799
    %v1801 = vpop.f32.mrb[0].mxu0
    %1802 = vmatprep.mubr.bf16.mxu0 0
    %1803 = vmatmul.mubr.bf16.gmra.mrb[0].mxu0 %v1386
    %v1804 = vpop.f32.mrb[0].mxu0
    %v1805 = vadd.f32 %v1433, %v1804
    %v1806 = vpop.f32.mrb[0].mxu0
    %v1807 = vpop.f32.mrb[0].mxu0
    %v1808 = vadd.f32 %v1433, %v1807
    %v1809 = vpop.f32.mrb[0].mxu0
    %1810 = vmatprep.mubr.bf16.mxu0 0
    %1811 = vmatmul.mubr.bf16.gmra.mrb[0].mxu0 %v1387
    %v1812 = vpop.f32.mrb[0].mxu0
    %v1813 = vadd.f32 %v1433, %v1812
    %v1814 = vpop.f32.mrb[0].mxu0
    %v1815 = vpop.f32.mrb[0].mxu0
    %v1816 = vadd.f32 %v1433, %v1815
    %v1817 = vpop.f32.mrb[0].mxu0
    %1818 = vmatprep.mubr.bf16.mxu0 0
    %1819 = vmatmul.mubr.bf16.gmra.mrb[0].mxu0 %v1388
    %v1820 = vpop.f32.mrb[0].mxu0
    %v1821 = vadd.f32 %v1433, %v1820
    %v1822 = vpop.f32.mrb[0].mxu0
    %v1823 = vpop.f32.mrb[0].mxu0
    %v1824 = vadd.f32 %v1433, %v1823
    %v1825 = vpop.f32.mrb[0].mxu0
    %1826 = vmatprep.mubr.bf16.mxu0 0
    %1827 = vmatmul.mubr.bf16.gmra.mrb[0].mxu0 %v1389
    %v1828 = vpop.f32.mrb[0].mxu0
    %v1829 = vadd.f32 %v1433, %v1828
    %v1830 = vpop.f32.mrb[0].mxu0
    %v1831 = vpop.f32.mrb[0].mxu0
    %v1832 = vadd.f32 %v1433, %v1831
    %v1833 = vpop.f32.mrb[0].mxu0
    %1834 = vmatprep.mubr.bf16.mxu0 0
    %1835 = vmatmul.mubr.bf16.gmra.mrb[0].mxu0 %v1390
    %v1836 = vpop.f32.mrb[0].mxu0
    %v1837 = vadd.f32 %v1433, %v1836
    %v1838 = vpop.f32.mrb[0].mxu0
    %v1839 = vpop.f32.mrb[0].mxu0
    %v1840 = vadd.f32 %v1433, %v1839
    %v1841 = vpop.f32.mrb[0].mxu0
    %1842 = vmatprep.mubr.bf16.mxu0 0
    %1843 = vmatmul.mubr.bf16.gmra.mrb[0].mxu0 %v1391
    %v1844 = vpop.f32.mrb[0].mxu0
    %v1845 = vadd.f32 %v1433, %v1844
    %v1846 = vpop.f32.mrb[0].mxu0
    %v1847 = vpop.f32.mrb[0].mxu0
    %v1848 = vadd.f32 %v1433, %v1847
    %v1849 = vpop.f32.mrb[0].mxu0
    %1850 = vmatprep.mubr.bf16.mxu0 0
    %1851 = vmatmul.mubr.bf16.gmra.mrb[0].mxu0 %v1392
    %v1852 = vpop.f32.mrb[0].mxu0
    %v1853 = vadd.f32 %v1433, %v1852
    %v1854 = vpop.f32.mrb[0].mxu0
    %v1855 = vpop.f32.mrb[0].mxu0
    %v1856 = vadd.f32 %v1433, %v1855
    %v1857 = vpop.f32.mrb[0].mxu0
    %1858 = vmatprep.mubr.bf16.mxu0 0
    %1859 = vmatmul.mubr.bf16.gmra.mrb[0].mxu0 %v1393
    %v1860 = vpop.f32.mrb[0].mxu0
    %v1861 = vadd.f32 %v1433, %v1860
    %v1862 = vpop.f32.mrb[0].mxu0
    %v1863 = vpop.f32.mrb[0].mxu0
    %v1864 = vadd.f32 %v1433, %v1863
    %v1865 = vpop.f32.mrb[0].mxu0
    %1866 = vmatprep.mubr.bf16.mxu0 0
    %1867 = vmatmul.mubr.bf16.gmra.mrb[0].mxu0 %v1394
    %v1868 = vpop.f32.mrb[0].mxu0
    %v1869 = vadd.f32 %v1433, %v1868
    %v1870 = vpop.f32.mrb[0].mxu0
    %v1871 = vpop.f32.mrb[0].mxu0
    %v1872 = vadd.f32 %v1433, %v1871
    %v1873 = vpop.f32.mrb[0].mxu0
    %1874 = vmatprep.mubr.bf16.mxu0 0
    %1875 = vmatmul.mubr.bf16.gmra.mrb[0].mxu0 %v1395
    %v1876 = vpop.f32.mrb[0].mxu0
    %v1877 = vadd.f32 %v1433, %v1876
    %v1878 = vpop.f32.mrb[0].mxu0
    %v1879 = vpop.f32.mrb[0].mxu0
    %v1880 = vadd.f32 %v1433, %v1879
    %v1881 = vpop.f32.mrb[0].mxu0
    %1882 = vmatprep.mubr.bf16.mxu0 0
    %1883 = vmatmul.mubr.bf16.gmra.mrb[0].mxu0 %v1396
    %v1884 = vpop.f32.mrb[0].mxu0
    %v1885 = vadd.f32 %v1433, %v1884
    %v1886 = vpop.f32.mrb[0].mxu0
    %v1887 = vpop.f32.mrb[0].mxu0
    %v1888 = vadd.f32 %v1433, %v1887
    %v1889 = vpop.f32.mrb[0].mxu0
    %1890 = vmatprep.mubr.bf16.mxu0 0
    %1891 = vmatmul.mubr.bf16.gmra.mrb[0].mxu0 %v1397
    %v1892 = vpop.f32.mrb[0].mxu0
    %v1893 = vadd.f32 %v1433, %v1892
    %v1894 = vpop.f32.mrb[0].mxu0
    %v1895 = vpop.f32.mrb[0].mxu0
    %v1896 = vadd.f32 %v1433, %v1895
    %v1897 = vpop.f32.mrb[0].mxu0
    %1898 = vmatprep.mubr.bf16.mxu0 0
    %1899 = vmatmul.mubr.bf16.gmra.mrb[0].mxu0 %v1398
    %v1900 = vpop.f32.mrb[0].mxu0
    %v1901 = vadd.f32 %v1433, %v1900
    %v1902 = vpop.f32.mrb[0].mxu0
    %v1903 = vpop.f32.mrb[0].mxu0
    %v1904 = vadd.f32 %v1433, %v1903
    %v1905 = vpop.f32.mrb[0].mxu0
    %1906 = vmatprep.mubr.bf16.mxu0 0
    %1907 = vmatmul.mubr.bf16.gmra.mrb[0].mxu0 %v1399
    %v1908 = vpop.f32.mrb[0].mxu0
    %v1909 = vadd.f32 %v1433, %v1908
    %v1910 = vpop.f32.mrb[0].mxu0
    %v1911 = vpop.f32.mrb[0].mxu0
    %v1912 = vadd.f32 %v1433, %v1911
    %v1913 = vpop.f32.mrb[0].mxu0
    %1914 = vmatprep.mubr.bf16.mxu0 0
    %1915 = vmatmul.mubr.bf16.gmra.mrb[0].mxu0 %v1400
    %v1916 = vpop.f32.mrb[0].mxu0
    %v1917 = vadd.f32 %v1433, %v1916
    %v1918 = vpop.f32.mrb[0].mxu0
    %v1919 = vpop.f32.mrb[0].mxu0
    %v1920 = vadd.f32 %v1433, %v1919
    %v1921 = vpop.f32.mrb[0].mxu0
    %1922 = vmatprep.mubr.bf16.mxu0 0
    %1923 = vmatmul.mubr.bf16.gmra.mrb[0].mxu0 %v1401
    %v1924 = vpop.f32.mrb[0].mxu0
    %v1925 = vadd.f32 %v1433, %v1924
    %v1926 = vpop.f32.mrb[0].mxu0
    %v1927 = vpop.f32.mrb[0].mxu0
    %v1928 = vadd.f32 %v1433, %v1927
    %v1929 = vpop.f32.mrb[0].mxu0
    %1930 = vmatprep.mubr.bf16.mxu0 0
    %1931 = vmatmul.mubr.bf16.gmra.mrb[0].mxu0 %v1402
    %v1932 = vpop.f32.mrb[0].mxu0
    %v1933 = vadd.f32 %v1433, %v1932
    %v1934 = vpop.f32.mrb[0].mxu0
    %v1935 = vpop.f32.mrb[0].mxu0
    %v1936 = vadd.f32 %v1433, %v1935
    %v1937 = vpop.f32.mrb[0].mxu0
    %1938 = vmatprep.mubr.bf16.mxu0 0
    %1939 = vmatmul.mubr.bf16.gmra.mrb[0].mxu0 %v1403
    %v1940 = vpop.f32.mrb[0].mxu0
    %v1941 = vadd.f32 %v1433, %v1940
    %v1942 = vpop.f32.mrb[0].mxu0
    %v1943 = vpop.f32.mrb[0].mxu0
    %v1944 = vadd.f32 %v1433, %v1943
    %v1945 = vpop.f32.mrb[0].mxu0
    %1946 = vmatprep.mubr.bf16.mxu0 0
    %1947 = vmatmul.mubr.bf16.gmra.mrb[0].mxu0 %v1404
    %v1948 = vpop.f32.mrb[0].mxu0
    %v1949 = vadd.f32 %v1433, %v1948
    %v1950 = vpop.f32.mrb[0].mxu0
    %v1951 = vpop.f32.mrb[0].mxu0
    %v1952 = vadd.f32 %v1433, %v1951
    %v1953 = vpop.f32.mrb[0].mxu0
    %1954 = vmatprep.mubr.bf16.mxu0 0
    %1955 = vmatmul.mubr.bf16.gmra.mrb[0].mxu0 %v1405
    %v1956 = vpop.f32.mrb[0].mxu0
    %v1957 = vadd.f32 %v1433, %v1956
    %v1958 = vpop.f32.mrb[0].mxu0
    %v1959 = vpop.f32.mrb[0].mxu0
    %v1960 = vadd.f32 %v1433, %v1959
    %v1961 = vpop.f32.mrb[0].mxu0
    %1962 = vmatprep.mubr.bf16.mxu0 0
    %1963 = vmatmul.mubr.bf16.gmra.mrb[0].mxu0 %v1406
    %v1964 = vpop.f32.mrb[0].mxu0
    %v1965 = vadd.f32 %v1433, %v1964
    %v1966 = vpop.f32.mrb[0].mxu0
    %v1967 = vpop.f32.mrb[0].mxu0
    %v1968 = vadd.f32 %v1433, %v1967
    %v1969 = vpop.f32.mrb[0].mxu0
    %1970 = vmatprep.mubr.bf16.mxu0 0
    %1971 = vmatmul.mubr.bf16.gmra.mrb[0].mxu0 %v1407
    %v1972 = vpop.f32.mrb[0].mxu0
    %v1973 = vadd.f32 %v1433, %v1972
    %v1974 = vpop.f32.mrb[0].mxu0
    %v1975 = vpop.f32.mrb[0].mxu0
    %v1976 = vadd.f32 %v1433, %v1975
    %v1977 = vpop.f32.mrb[0].mxu0
    %1978 = vmatprep.mubr.bf16.mxu0 0
    %1979 = vmatmul.mubr.bf16.gmra.mrb[0].mxu0 %v1408
    %v1980 = vpop.f32.mrb[0].mxu0
    %v1981 = vadd.f32 %v1433, %v1980
    %v1982 = vpop.f32.mrb[0].mxu0
    %v1983 = vpop.f32.mrb[0].mxu0
    %v1984 = vadd.f32 %v1433, %v1983
    %v1985 = vpop.f32.mrb[0].mxu0
    %1986 = vmatprep.mubr.bf16.mxu0 0
    %1987 = vmatmul.mubr.bf16.gmra.mrb[0].mxu0 %v1409
    %v1988 = vpop.f32.mrb[0].mxu0
    %v1989 = vadd.f32 %v1433, %v1988
    %v1990 = vpop.f32.mrb[0].mxu0
    %v1991 = vpop.f32.mrb[0].mxu0
    %v1992 = vadd.f32 %v1433, %v1991
    %v1993 = vpop.f32.mrb[0].mxu0
    %1994 = vmatprep.mubr.bf16.mxu0 0
    %1995 = vmatmul.mubr.bf16.gmra.mrb[0].mxu0 %v1410
    %v1996 = vpop.f32.mrb[0].mxu0
    %v1997 = vadd.f32 %v1433, %v1996
    %v1998 = vpop.f32.mrb[0].mxu0
    %v1999 = vpop.f32.mrb[0].mxu0
    %v2000 = vadd.f32 %v1433, %v1999
    %v2001 = vpop.f32.mrb[0].mxu0
    %2002 = vmatprep.mubr.bf16.mxu0 0
    %2003 = vmatmul.mubr.bf16.gmra.mrb[0].mxu0 %v1411
    %v2004 = vpop.f32.mrb[0].mxu0
    %v2005 = vadd.f32 %v1433, %v2004
    %v2006 = vpop.f32.mrb[0].mxu0
    %v2007 = vpop.f32.mrb[0].mxu0
    %v2008 = vadd.f32 %v1433, %v2007
    %v2009 = vpop.f32.mrb[0].mxu0
    %2010 = vmatprep.mubr.bf16.mxu0 0
    %2011 = vmatmul.mubr.bf16.gmra.mrb[0].mxu0 %v1412
    %v2012 = vpop.f32.mrb[0].mxu0
    %v2013 = vadd.f32 %v1433, %v2012
    %v2014 = vpop.f32.mrb[0].mxu0
    %v2015 = vpop.f32.mrb[0].mxu0
    %v2016 = vadd.f32 %v1433, %v2015
    %v2017 = vpop.f32.mrb[0].mxu0
    %2018 = vmatprep.mubr.bf16.mxu0 0
    %2019 = vmatmul.mubr.bf16.gmra.mrb[0].mxu0 %v1413
    %v2020 = vpop.f32.mrb[0].mxu0
    %v2021 = vadd.f32 %v1433, %v2020
    %v2022 = vpop.f32.mrb[0].mxu0
    %v2023 = vpop.f32.mrb[0].mxu0
    %v2024 = vadd.f32 %v1433, %v2023
    %v2025 = vpop.f32.mrb[0].mxu0
    %2026 = vdwg.mxu0
    %v2027 = vmax.f32 %v1517, 0.0
    %v2028 = vmax.f32 %v1520, 0.0
    %v2029 = vmax.f32 %v1525, 0.0
    %v2030 = vmax.f32 %v1528, 0.0
    %v2031 = vmax.f32 %v1533, 0.0
    %v2032 = vmax.f32 %v1536, 0.0
    %v2033 = vmax.f32 %v1541, 0.0
    %v2034 = vmax.f32 %v1544, 0.0
    %v2035 = vmax.f32 %v1549, 0.0
    %v2036 = vmax.f32 %v1552, 0.0
    %v2037 = vmax.f32 %v1557, 0.0
    %v2038 = vmax.f32 %v1560, 0.0
    %v2039 = vmax.f32 %v1565, 0.0
    %v2040 = vmax.f32 %v1568, 0.0
    %v2041 = vmax.f32 %v1573, 0.0
    %v2042 = vmax.f32 %v1576, 0.0
    %v2043 = vmax.f32 %v1581, 0.0
    %v2044 = vmax.f32 %v1584, 0.0
    %v2045 = vmax.f32 %v1589, 0.0
    %v2046 = vmax.f32 %v1592, 0.0
    %v2047 = vmax.f32 %v1597, 0.0
    %v2048 = vmax.f32 %v1600, 0.0
    %v2049 = vmax.f32 %v1605, 0.0
    %v2050 = vmax.f32 %v1608, 0.0
    %v2051 = vmax.f32 %v1613, 0.0
    %v2052 = vmax.f32 %v1616, 0.0
    %v2053 = vmax.f32 %v1621, 0.0
    %v2054 = vmax.f32 %v1624, 0.0
    %v2055 = vmax.f32 %v1629, 0.0
    %v2056 = vmax.f32 %v1632, 0.0
    %v2057 = vmax.f32 %v1637, 0.0
    %v2058 = vmax.f32 %v1640, 0.0
    %v2059 = vmax.f32 %v1645, 0.0
    %v2060 = vmax.f32 %v1648, 0.0
    %v2061 = vmax.f32 %v1653, 0.0
    %v2062 = vmax.f32 %v1656, 0.0
    %v2063 = vmax.f32 %v1661, 0.0
    %v2064 = vmax.f32 %v1664, 0.0
    %v2065 = vmax.f32 %v1669, 0.0
    %v2066 = vmax.f32 %v1672, 0.0
    %v2067 = vmax.f32 %v1677, 0.0
    %v2068 = vmax.f32 %v1680, 0.0
    %v2069 = vmax.f32 %v1685, 0.0
    %v2070 = vmax.f32 %v1688, 0.0
    %v2071 = vmax.f32 %v1693, 0.0
    %v2072 = vmax.f32 %v1696, 0.0
    %v2073 = vmax.f32 %v1701, 0.0
    %v2074 = vmax.f32 %v1704, 0.0
    %v2075 = vmax.f32 %v1709, 0.0
    %v2076 = vmax.f32 %v1712, 0.0
    %v2077 = vmax.f32 %v1717, 0.0
    %v2078 = vmax.f32 %v1720, 0.0
    %v2079 = vmax.f32 %v1725, 0.0
    %v2080 = vmax.f32 %v1728, 0.0
    %v2081 = vmax.f32 %v1733, 0.0
    %v2082 = vmax.f32 %v1736, 0.0
    %v2083 = vmax.f32 %v1741, 0.0
    %v2084 = vmax.f32 %v1744, 0.0
    %v2085 = vmax.f32 %v1749, 0.0
    %v2086 = vmax.f32 %v1752, 0.0
    %v2087 = vmax.f32 %v1757, 0.0
    %v2088 = vmax.f32 %v1760, 0.0
    %v2089 = vmax.f32 %v1765, 0.0
    %v2090 = vmax.f32 %v1768, 0.0
    %v2091 = vmax.f32 %v1773, 0.0
    %v2092 = vmax.f32 %v1776, 0.0
    %v2093 = vmax.f32 %v1781, 0.0
    %v2094 = vmax.f32 %v1784, 0.0
    %v2095 = vmax.f32 %v1789, 0.0
    %v2096 = vmax.f32 %v1792, 0.0
    %v2097 = vmax.f32 %v1797, 0.0
    %v2098 = vmax.f32 %v1800, 0.0
    %v2099 = vmax.f32 %v1805, 0.0
    %v2100 = vmax.f32 %v1808, 0.0
    %v2101 = vmax.f32 %v1813, 0.0
    %v2102 = vmax.f32 %v1816, 0.0
    %v2103 = vmax.f32 %v1821, 0.0
    %v2104 = vmax.f32 %v1824, 0.0
    %v2105 = vmax.f32 %v1829, 0.0
    %v2106 = vmax.f32 %v1832, 0.0
    %v2107 = vmax.f32 %v1837, 0.0
    %v2108 = vmax.f32 %v1840, 0.0
    %v2109 = vmax.f32 %v1845, 0.0
    %v2110 = vmax.f32 %v1848, 0.0
    %v2111 = vmax.f32 %v1853, 0.0
    %v2112 = vmax.f32 %v1856, 0.0
    %v2113 = vmax.f32 %v1861, 0.0
    %v2114 = vmax.f32 %v1864, 0.0
    %v2115 = vmax.f32 %v1869, 0.0
    %v2116 = vmax.f32 %v1872, 0.0
    %v2117 = vmax.f32 %v1877, 0.0
    %v2118 = vmax.f32 %v1880, 0.0
    %v2119 = vmax.f32 %v1885, 0.0
    %v2120 = vmax.f32 %v1888, 0.0
    %v2121 = vmax.f32 %v1893, 0.0
    %v2122 = vmax.f32 %v1896, 0.0
    %v2123 = vmax.f32 %v1901, 0.0
    %v2124 = vmax.f32 %v1904, 0.0
    %v2125 = vmax.f32 %v1909, 0.0
    %v2126 = vmax.f32 %v1912, 0.0
    %v2127 = vmax.f32 %v1917, 0.0
    %v2128 = vmax.f32 %v1920, 0.0
    %v2129 = vmax.f32 %v1925, 0.0
    %v2130 = vmax.f32 %v1928, 0.0
    %v2131 = vmax.f32 %v1933, 0.0
    %v2132 = vmax.f32 %v1936, 0.0
    %v2133 = vmax.f32 %v1941, 0.0
    %v2134 = vmax.f32 %v1944, 0.0
    %v2135 = vmax.f32 %v1949, 0.0
    %v2136 = vmax.f32 %v1952, 0.0
    %v2137 = vmax.f32 %v1957, 0.0
    %v2138 = vmax.f32 %v1960, 0.0
    %v2139 = vmax.f32 %v1965, 0.0
    %v2140 = vmax.f32 %v1968, 0.0
    %v2141 = vmax.f32 %v1973, 0.0
    %v2142 = vmax.f32 %v1976, 0.0
    %v2143 = vmax.f32 %v1981, 0.0
    %v2144 = vmax.f32 %v1984, 0.0
    %v2145 = vmax.f32 %v1989, 0.0
    %v2146 = vmax.f32 %v1992, 0.0
    %v2147 = vmax.f32 %v1997, 0.0
    %v2148 = vmax.f32 %v2000, 0.0
    %v2149 = vmax.f32 %v2005, 0.0
    %v2150 = vmax.f32 %v2008, 0.0
    %v2151 = vmax.f32 %v2013, 0.0
    %v2152 = vmax.f32 %v2016, 0.0
    %v2153 = vmax.f32 %v2021, 0.0
    %v2154 = vmax.f32 %v2024, 0.0
    %v2155 = vpack.c.bf16 %v2028, %v2027
    %v2156 = vpack.c.bf16 %v2030, %v2029
    %v2157 = vpack.c.bf16 %v2032, %v2031
    %v2158 = vpack.c.bf16 %v2034, %v2033
    %v2159 = vpack.c.bf16 %v2036, %v2035
    %v2160 = vpack.c.bf16 %v2038, %v2037
    %v2161 = vpack.c.bf16 %v2040, %v2039
    %v2162 = vpack.c.bf16 %v2042, %v2041
    %v2163 = vpack.c.bf16 %v2044, %v2043
    %v2164 = vpack.c.bf16 %v2046, %v2045
    %v2165 = vpack.c.bf16 %v2048, %v2047
    %v2166 = vpack.c.bf16 %v2050, %v2049
    %v2167 = vpack.c.bf16 %v2052, %v2051
    %v2168 = vpack.c.bf16 %v2054, %v2053
    %v2169 = vpack.c.bf16 %v2056, %v2055
    %v2170 = vpack.c.bf16 %v2058, %v2057
    %v2171 = vpack.c.bf16 %v2060, %v2059
    %v2172 = vpack.c.bf16 %v2062, %v2061
    %v2173 = vpack.c.bf16 %v2064, %v2063
    %v2174 = vpack.c.bf16 %v2066, %v2065
    %v2175 = vpack.c.bf16 %v2068, %v2067
    %v2176 = vpack.c.bf16 %v2070, %v2069
    %v2177 = vpack.c.bf16 %v2072, %v2071
    %v2178 = vpack.c.bf16 %v2074, %v2073
    %v2179 = vpack.c.bf16 %v2076, %v2075
    %v2180 = vpack.c.bf16 %v2078, %v2077
    %v2181 = vpack.c.bf16 %v2080, %v2079
    %v2182 = vpack.c.bf16 %v2082, %v2081
    %v2183 = vpack.c.bf16 %v2084, %v2083
    %v2184 = vpack.c.bf16 %v2086, %v2085
    %v2185 = vpack.c.bf16 %v2088, %v2087
    %v2186 = vpack.c.bf16 %v2090, %v2089
    %v2187 = vpack.c.bf16 %v2092, %v2091
    %v2188 = vpack.c.bf16 %v2094, %v2093
    %v2189 = vpack.c.bf16 %v2096, %v2095
    %v2190 = vpack.c.bf16 %v2098, %v2097
    %v2191 = vpack.c.bf16 %v2100, %v2099
    %v2192 = vpack.c.bf16 %v2102, %v2101
    %v2193 = vpack.c.bf16 %v2104, %v2103
    %v2194 = vpack.c.bf16 %v2106, %v2105
    %v2195 = vpack.c.bf16 %v2108, %v2107
    %v2196 = vpack.c.bf16 %v2110, %v2109
    %v2197 = vpack.c.bf16 %v2112, %v2111
    %v2198 = vpack.c.bf16 %v2114, %v2113
    %v2199 = vpack.c.bf16 %v2116, %v2115
    %v2200 = vpack.c.bf16 %v2118, %v2117
    %v2201 = vpack.c.bf16 %v2120, %v2119
    %v2202 = vpack.c.bf16 %v2122, %v2121
    %v2203 = vpack.c.bf16 %v2124, %v2123
    %v2204 = vpack.c.bf16 %v2126, %v2125
    %v2205 = vpack.c.bf16 %v2128, %v2127
    %v2206 = vpack.c.bf16 %v2130, %v2129
    %v2207 = vpack.c.bf16 %v2132, %v2131
    %v2208 = vpack.c.bf16 %v2134, %v2133
    %v2209 = vpack.c.bf16 %v2136, %v2135
    %v2210 = vpack.c.bf16 %v2138, %v2137
    %v2211 = vpack.c.bf16 %v2140, %v2139
    %v2212 = vpack.c.bf16 %v2142, %v2141
    %v2213 = vpack.c.bf16 %v2144, %v2143
    %v2214 = vpack.c.bf16 %v2146, %v2145
    %v2215 = vpack.c.bf16 %v2148, %v2147
    %v2216 = vpack.c.bf16 %v2150, %v2149
    %v2217 = vpack.c.bf16 %v2152, %v2151
    %v2218 = vpack.c.bf16 %v2154, %v2153
    %s2219 = scalar_lea.vmem %s2, 64
    %v2220 = vld [vmem:[%s2219] sm:$0xf]
    %v2221 = vld [vmem:[%s2219 + $0x4] sm:$0xf]
    %v2222 = vld [vmem:[%s2219 + $0x8] sm:$0xf]
    %v2223 = vld [vmem:[%s2219 + $0xc] sm:$0xf]
    %v2224 = vld [vmem:[%s2219 + $0x10] sm:$0xf]
    %v2225 = vld [vmem:[%s2219 + $0x14] sm:$0xf]
    %v2226 = vld [vmem:[%s2219 + $0x18] sm:$0xf]
    %v2227 = vld [vmem:[%s2219 + $0x1c] sm:$0xf]
    %v2228 = vld [vmem:[%s2219 + $0x20] sm:$0xf]
    %v2229 = vld [vmem:[%s2219 + $0x24] sm:$0xf]
    %v2230 = vld [vmem:[%s2219 + $0x28] sm:$0xf]
    %v2231 = vld [vmem:[%s2219 + $0x2c] sm:$0xf]
    %v2232 = vld [vmem:[%s2219 + $0x30] sm:$0xf]
    %v2233 = vld [vmem:[%s2219 + $0x34] sm:$0xf]
    %v2234 = vld [vmem:[%s2219 + $0x38] sm:$0xf]
    %v2235 = vld [vmem:[%s2219 + $0x3c] sm:$0xf]
    %v2236 = vlaneseq
    %v2237 = vshrl.u32 %v2236, 7
    %v2238 = vsub.s32 0, %v2237
    %v2239 = vrot.slane %v149, %v2238
    %v2256 = vunpack.c.l.b16 %v2220
    %v2257 = vunpack.c.l.b16 %v2221
    %v2258 = vunpack.c.l.b16 %v2222
    %v2259 = vunpack.c.l.b16 %v2223
    %v2260 = vunpack.c.l.b16 %v2224
    %v2261 = vunpack.c.l.b16 %v2225
    %v2262 = vunpack.c.l.b16 %v2226
    %v2263 = vunpack.c.l.b16 %v2227
    %v2264 = vunpack.c.l.b16 %v2228
    %v2265 = vunpack.c.l.b16 %v2229
    %v2266 = vunpack.c.l.b16 %v2230
    %v2267 = vunpack.c.l.b16 %v2231
    %v2268 = vunpack.c.l.b16 %v2232
    %v2269 = vunpack.c.l.b16 %v2233
    %v2270 = vunpack.c.l.b16 %v2234
    %v2271 = vunpack.c.l.b16 %v2235
    %v2272 = vpack.c.b16 %v2257, %v2256
    %v2273 = vpack.c.b16 %v2259, %v2258
    %v2274 = vpack.c.b16 %v2261, %v2260
    %v2275 = vpack.c.b16 %v2263, %v2262
    %v2276 = vpack.c.b16 %v2265, %v2264
    %v2277 = vpack.c.b16 %v2267, %v2266
    %v2278 = vpack.c.b16 %v2269, %v2268
    %v2279 = vpack.c.b16 %v2271, %v2270
    %2288 = vmatprep.subr.bf16.mxu0 0
    %2289 = vmatpush1.bf16.msra.mxu0 %v2272
    %2290 = vmatprep.subr.bf16.mxu0 0
    %2291 = vmatpush1.bf16.msra.mxu0 %v2273
    %2292 = vmatprep.subr.bf16.mxu0 0
    %2293 = vmatpush1.bf16.msra.mxu0 %v2274
    %2294 = vmatprep.subr.bf16.mxu0 0
    %2295 = vmatpush1.bf16.msra.mxu0 %v2275
    %2296 = vmatprep.subr.bf16.mxu0 0
    %2297 = vmatpush1.bf16.msra.mxu0 %v2276
    %2298 = vmatprep.subr.bf16.mxu0 0
    %2299 = vmatpush1.bf16.msra.mxu0 %v2277
    %2300 = vmatprep.subr.bf16.mxu0 0
    %2301 = vmatpush1.bf16.msra.mxu0 %v2278
    %2302 = vmatprep.subr.bf16.mxu0 0
    %2303 = vmatpush1.bf16.msra.mxu0 %v2279
    %2304 = vmatprep.subr.bf16.mxu0 0
    %2305 = vmatpush1.bf16.msra.mxu0 0
    %2306 = vmatprep.subr.bf16.mxu0 0
    %2307 = vmatpush1.bf16.msra.mxu0 0
    %2308 = vmatprep.subr.bf16.mxu0 0
    %2309 = vmatpush1.bf16.msra.mxu0 0
    %2310 = vmatprep.subr.bf16.mxu0 0
    %2311 = vmatpush1.bf16.msra.mxu0 0
    %2312 = vmatprep.subr.bf16.mxu0 0
    %2313 = vmatpush1.bf16.msra.mxu0 0
    %2314 = vmatprep.subr.bf16.mxu0 0
    %2315 = vmatpush1.bf16.msra.mxu0 0
    %2316 = vmatprep.subr.bf16.mxu0 0
    %2317 = vmatpush1.bf16.msra.mxu0 0
    %2318 = vmatprep.subr.bf16.mxu0 0
    %2319 = vmatpush1.bf16.msra.mxu0 0
    %2320 = vmatprep.mubr.bf16.mxu0 0
    %2321 = vmatmul.mubr.bf16.gmra.mrb[0].mxu0 %v2155
    %v2322 = vpop.f32.mrb[0].mxu0
    %v2323 = vadd.f32 %v2239, %v2322
    %v2324 = vpop.f32.mrb[0].mxu0
    %v2325 = vpop.f32.mrb[0].mxu0
    %v2326 = vadd.f32 %v2239, %v2325
    %v2327 = vpop.f32.mrb[0].mxu0
    %2328 = vmatprep.mubr.bf16.mxu0 0
    %2329 = vmatmul.mubr.bf16.gmra.mrb[0].mxu0 %v2156
    %v2330 = vpop.f32.mrb[0].mxu0
    %v2331 = vadd.f32 %v2239, %v2330
    %v2332 = vpop.f32.mrb[0].mxu0
    %v2333 = vpop.f32.mrb[0].mxu0
    %v2334 = vadd.f32 %v2239, %v2333
    %v2335 = vpop.f32.mrb[0].mxu0
    %2336 = vmatprep.mubr.bf16.mxu0 0
    %2337 = vmatmul.mubr.bf16.gmra.mrb[0].mxu0 %v2157
    %v2338 = vpop.f32.mrb[0].mxu0
    %v2339 = vadd.f32 %v2239, %v2338
    %v2340 = vpop.f32.mrb[0].mxu0
    %v2341 = vpop.f32.mrb[0].mxu0
    %v2342 = vadd.f32 %v2239, %v2341
    %v2343 = vpop.f32.mrb[0].mxu0
    %2344 = vmatprep.mubr.bf16.mxu0 0
    %2345 = vmatmul.mubr.bf16.gmra.mrb[0].mxu0 %v2158
    %v2346 = vpop.f32.mrb[0].mxu0
    %v2347 = vadd.f32 %v2239, %v2346
    %v2348 = vpop.f32.mrb[0].mxu0
    %v2349 = vpop.f32.mrb[0].mxu0
    %v2350 = vadd.f32 %v2239, %v2349
    %v2351 = vpop.f32.mrb[0].mxu0
    %2352 = vmatprep.mubr.bf16.mxu0 0
    %2353 = vmatmul.mubr.bf16.gmra.mrb[0].mxu0 %v2159
    %v2354 = vpop.f32.mrb[0].mxu0
    %v2355 = vadd.f32 %v2239, %v2354
    %v2356 = vpop.f32.mrb[0].mxu0
    %v2357 = vpop.f32.mrb[0].mxu0
    %v2358 = vadd.f32 %v2239, %v2357
    %v2359 = vpop.f32.mrb[0].mxu0
    %2360 = vmatprep.mubr.bf16.mxu0 0
    %2361 = vmatmul.mubr.bf16.gmra.mrb[0].mxu0 %v2160
    %v2362 = vpop.f32.mrb[0].mxu0
    %v2363 = vadd.f32 %v2239, %v2362
    %v2364 = vpop.f32.mrb[0].mxu0
    %v2365 = vpop.f32.mrb[0].mxu0
    %v2366 = vadd.f32 %v2239, %v2365
    %v2367 = vpop.f32.mrb[0].mxu0
    %2368 = vmatprep.mubr.bf16.mxu0 0
    %2369 = vmatmul.mubr.bf16.gmra.mrb[0].mxu0 %v2161
    %v2370 = vpop.f32.mrb[0].mxu0
    %v2371 = vadd.f32 %v2239, %v2370
    %v2372 = vpop.f32.mrb[0].mxu0
    %v2373 = vpop.f32.mrb[0].mxu0
    %v2374 = vadd.f32 %v2239, %v2373
    %v2375 = vpop.f32.mrb[0].mxu0
    %2376 = vmatprep.mubr.bf16.mxu0 0
    %2377 = vmatmul.mubr.bf16.gmra.mrb[0].mxu0 %v2162
    %v2378 = vpop.f32.mrb[0].mxu0
    %v2379 = vadd.f32 %v2239, %v2378
    %v2380 = vpop.f32.mrb[0].mxu0
    %v2381 = vpop.f32.mrb[0].mxu0
    %v2382 = vadd.f32 %v2239, %v2381
    %v2383 = vpop.f32.mrb[0].mxu0
    %2384 = vmatprep.mubr.bf16.mxu0 0
    %2385 = vmatmul.mubr.bf16.gmra.mrb[0].mxu0 %v2163
    %v2386 = vpop.f32.mrb[0].mxu0
    %v2387 = vadd.f32 %v2239, %v2386
    %v2388 = vpop.f32.mrb[0].mxu0
    %v2389 = vpop.f32.mrb[0].mxu0
    %v2390 = vadd.f32 %v2239, %v2389
    %v2391 = vpop.f32.mrb[0].mxu0
    %2392 = vmatprep.mubr.bf16.mxu0 0
    %2393 = vmatmul.mubr.bf16.gmra.mrb[0].mxu0 %v2164
    %v2394 = vpop.f32.mrb[0].mxu0
    %v2395 = vadd.f32 %v2239, %v2394
    %v2396 = vpop.f32.mrb[0].mxu0
    %v2397 = vpop.f32.mrb[0].mxu0
    %v2398 = vadd.f32 %v2239, %v2397
    %v2399 = vpop.f32.mrb[0].mxu0
    %2400 = vmatprep.mubr.bf16.mxu0 0
    %2401 = vmatmul.mubr.bf16.gmra.mrb[0].mxu0 %v2165
    %v2402 = vpop.f32.mrb[0].mxu0
    %v2403 = vadd.f32 %v2239, %v2402
    %v2404 = vpop.f32.mrb[0].mxu0
    %v2405 = vpop.f32.mrb[0].mxu0
    %v2406 = vadd.f32 %v2239, %v2405
    %v2407 = vpop.f32.mrb[0].mxu0
    %2408 = vmatprep.mubr.bf16.mxu0 0
    %2409 = vmatmul.mubr.bf16.gmra.mrb[0].mxu0 %v2166
    %v2410 = vpop.f32.mrb[0].mxu0
    %v2411 = vadd.f32 %v2239, %v2410
    %v2412 = vpop.f32.mrb[0].mxu0
    %v2413 = vpop.f32.mrb[0].mxu0
    %v2414 = vadd.f32 %v2239, %v2413
    %v2415 = vpop.f32.mrb[0].mxu0
    %2416 = vmatprep.mubr.bf16.mxu0 0
    %2417 = vmatmul.mubr.bf16.gmra.mrb[0].mxu0 %v2167
    %v2418 = vpop.f32.mrb[0].mxu0
    %v2419 = vadd.f32 %v2239, %v2418
    %v2420 = vpop.f32.mrb[0].mxu0
    %v2421 = vpop.f32.mrb[0].mxu0
    %v2422 = vadd.f32 %v2239, %v2421
    %v2423 = vpop.f32.mrb[0].mxu0
    %2424 = vmatprep.mubr.bf16.mxu0 0
    %2425 = vmatmul.mubr.bf16.gmra.mrb[0].mxu0 %v2168
    %v2426 = vpop.f32.mrb[0].mxu0
    %v2427 = vadd.f32 %v2239, %v2426
    %v2428 = vpop.f32.mrb[0].mxu0
    %v2429 = vpop.f32.mrb[0].mxu0
    %v2430 = vadd.f32 %v2239, %v2429
    %v2431 = vpop.f32.mrb[0].mxu0
    %2432 = vmatprep.mubr.bf16.mxu0 0
    %2433 = vmatmul.mubr.bf16.gmra.mrb[0].mxu0 %v2169
    %v2434 = vpop.f32.mrb[0].mxu0
    %v2435 = vadd.f32 %v2239, %v2434
    %v2436 = vpop.f32.mrb[0].mxu0
    %v2437 = vpop.f32.mrb[0].mxu0
    %v2438 = vadd.f32 %v2239, %v2437
    %v2439 = vpop.f32.mrb[0].mxu0
    %2440 = vmatprep.mubr.bf16.mxu0 0
    %2441 = vmatmul.mubr.bf16.gmra.mrb[0].mxu0 %v2170
    %v2442 = vpop.f32.mrb[0].mxu0
    %v2443 = vadd.f32 %v2239, %v2442
    %v2444 = vpop.f32.mrb[0].mxu0
    %v2445 = vpop.f32.mrb[0].mxu0
    %v2446 = vadd.f32 %v2239, %v2445
    %v2447 = vpop.f32.mrb[0].mxu0
    %2448 = vmatprep.mubr.bf16.mxu0 0
    %2449 = vmatmul.mubr.bf16.gmra.mrb[0].mxu0 %v2171
    %v2450 = vpop.f32.mrb[0].mxu0
    %v2451 = vadd.f32 %v2239, %v2450
    %v2452 = vpop.f32.mrb[0].mxu0
    %v2453 = vpop.f32.mrb[0].mxu0
    %v2454 = vadd.f32 %v2239, %v2453
    %v2455 = vpop.f32.mrb[0].mxu0
    %2456 = vmatprep.mubr.bf16.mxu0 0
    %2457 = vmatmul.mubr.bf16.gmra.mrb[0].mxu0 %v2172
    %v2458 = vpop.f32.mrb[0].mxu0
    %v2459 = vadd.f32 %v2239, %v2458
    %v2460 = vpop.f32.mrb[0].mxu0
    %v2461 = vpop.f32.mrb[0].mxu0
    %v2462 = vadd.f32 %v2239, %v2461
    %v2463 = vpop.f32.mrb[0].mxu0
    %2464 = vmatprep.mubr.bf16.mxu0 0
    %2465 = vmatmul.mubr.bf16.gmra.mrb[0].mxu0 %v2173
    %v2466 = vpop.f32.mrb[0].mxu0
    %v2467 = vadd.f32 %v2239, %v2466
    %v2468 = vpop.f32.mrb[0].mxu0
    %v2469 = vpop.f32.mrb[0].mxu0
    %v2470 = vadd.f32 %v2239, %v2469
    %v2471 = vpop.f32.mrb[0].mxu0
    %2472 = vmatprep.mubr.bf16.mxu0 0
    %2473 = vmatmul.mubr.bf16.gmra.mrb[0].mxu0 %v2174
    %v2474 = vpop.f32.mrb[0].mxu0
    %v2475 = vadd.f32 %v2239, %v2474
    %v2476 = vpop.f32.mrb[0].mxu0
    %v2477 = vpop.f32.mrb[0].mxu0
    %v2478 = vadd.f32 %v2239, %v2477
    %v2479 = vpop.f32.mrb[0].mxu0
    %2480 = vmatprep.mubr.bf16.mxu0 0
    %2481 = vmatmul.mubr.bf16.gmra.mrb[0].mxu0 %v2175
    %v2482 = vpop.f32.mrb[0].mxu0
    %v2483 = vadd.f32 %v2239, %v2482
    %v2484 = vpop.f32.mrb[0].mxu0
    %v2485 = vpop.f32.mrb[0].mxu0
    %v2486 = vadd.f32 %v2239, %v2485
    %v2487 = vpop.f32.mrb[0].mxu0
    %2488 = vmatprep.mubr.bf16.mxu0 0
    %2489 = vmatmul.mubr.bf16.gmra.mrb[0].mxu0 %v2176
    %v2490 = vpop.f32.mrb[0].mxu0
    %v2491 = vadd.f32 %v2239, %v2490
    %v2492 = vpop.f32.mrb[0].mxu0
    %v2493 = vpop.f32.mrb[0].mxu0
    %v2494 = vadd.f32 %v2239, %v2493
    %v2495 = vpop.f32.mrb[0].mxu0
    %2496 = vmatprep.mubr.bf16.mxu0 0
    %2497 = vmatmul.mubr.bf16.gmra.mrb[0].mxu0 %v2177
    %v2498 = vpop.f32.mrb[0].mxu0
    %v2499 = vadd.f32 %v2239, %v2498
    %v2500 = vpop.f32.mrb[0].mxu0
    %v2501 = vpop.f32.mrb[0].mxu0
    %v2502 = vadd.f32 %v2239, %v2501
    %v2503 = vpop.f32.mrb[0].mxu0
    %2504 = vmatprep.mubr.bf16.mxu0 0
    %2505 = vmatmul.mubr.bf16.gmra.mrb[0].mxu0 %v2178
    %v2506 = vpop.f32.mrb[0].mxu0
    %v2507 = vadd.f32 %v2239, %v2506
    %v2508 = vpop.f32.mrb[0].mxu0
    %v2509 = vpop.f32.mrb[0].mxu0
    %v2510 = vadd.f32 %v2239, %v2509
    %v2511 = vpop.f32.mrb[0].mxu0
    %2512 = vmatprep.mubr.bf16.mxu0 0
    %2513 = vmatmul.mubr.bf16.gmra.mrb[0].mxu0 %v2179
    %v2514 = vpop.f32.mrb[0].mxu0
    %v2515 = vadd.f32 %v2239, %v2514
    %v2516 = vpop.f32.mrb[0].mxu0
    %v2517 = vpop.f32.mrb[0].mxu0
    %v2518 = vadd.f32 %v2239, %v2517
    %v2519 = vpop.f32.mrb[0].mxu0
    %2520 = vmatprep.mubr.bf16.mxu0 0
    %2521 = vmatmul.mubr.bf16.gmra.mrb[0].mxu0 %v2180
    %v2522 = vpop.f32.mrb[0].mxu0
    %v2523 = vadd.f32 %v2239, %v2522
    %v2524 = vpop.f32.mrb[0].mxu0
    %v2525 = vpop.f32.mrb[0].mxu0
    %v2526 = vadd.f32 %v2239, %v2525
    %v2527 = vpop.f32.mrb[0].mxu0
    %2528 = vmatprep.mubr.bf16.mxu0 0
    %2529 = vmatmul.mubr.bf16.gmra.mrb[0].mxu0 %v2181
    %v2530 = vpop.f32.mrb[0].mxu0
    %v2531 = vadd.f32 %v2239, %v2530
    %v2532 = vpop.f32.mrb[0].mxu0
    %v2533 = vpop.f32.mrb[0].mxu0
    %v2534 = vadd.f32 %v2239, %v2533
    %v2535 = vpop.f32.mrb[0].mxu0
    %2536 = vmatprep.mubr.bf16.mxu0 0
    %2537 = vmatmul.mubr.bf16.gmra.mrb[0].mxu0 %v2182
    %v2538 = vpop.f32.mrb[0].mxu0
    %v2539 = vadd.f32 %v2239, %v2538
    %v2540 = vpop.f32.mrb[0].mxu0
    %v2541 = vpop.f32.mrb[0].mxu0
    %v2542 = vadd.f32 %v2239, %v2541
    %v2543 = vpop.f32.mrb[0].mxu0
    %2544 = vmatprep.mubr.bf16.mxu0 0
    %2545 = vmatmul.mubr.bf16.gmra.mrb[0].mxu0 %v2183
    %v2546 = vpop.f32.mrb[0].mxu0
    %v2547 = vadd.f32 %v2239, %v2546
    %v2548 = vpop.f32.mrb[0].mxu0
    %v2549 = vpop.f32.mrb[0].mxu0
    %v2550 = vadd.f32 %v2239, %v2549
    %v2551 = vpop.f32.mrb[0].mxu0
    %2552 = vmatprep.mubr.bf16.mxu0 0
    %2553 = vmatmul.mubr.bf16.gmra.mrb[0].mxu0 %v2184
    %v2554 = vpop.f32.mrb[0].mxu0
    %v2555 = vadd.f32 %v2239, %v2554
    %v2556 = vpop.f32.mrb[0].mxu0
    %v2557 = vpop.f32.mrb[0].mxu0
    %v2558 = vadd.f32 %v2239, %v2557
    %v2559 = vpop.f32.mrb[0].mxu0
    %2560 = vmatprep.mubr.bf16.mxu0 0
    %2561 = vmatmul.mubr.bf16.gmra.mrb[0].mxu0 %v2185
    %v2562 = vpop.f32.mrb[0].mxu0
    %v2563 = vadd.f32 %v2239, %v2562
    %v2564 = vpop.f32.mrb[0].mxu0
    %v2565 = vpop.f32.mrb[0].mxu0
    %v2566 = vadd.f32 %v2239, %v2565
    %v2567 = vpop.f32.mrb[0].mxu0
    %2568 = vmatprep.mubr.bf16.mxu0 0
    %2569 = vmatmul.mubr.bf16.gmra.mrb[0].mxu0 %v2186
    %v2570 = vpop.f32.mrb[0].mxu0
    %v2571 = vadd.f32 %v2239, %v2570
    %v2572 = vpop.f32.mrb[0].mxu0
    %v2573 = vpop.f32.mrb[0].mxu0
    %v2574 = vadd.f32 %v2239, %v2573
    %v2575 = vpop.f32.mrb[0].mxu0
    %2576 = vmatprep.mubr.bf16.mxu0 0
    %2577 = vmatmul.mubr.bf16.gmra.mrb[0].mxu0 %v2187
    %v2578 = vpop.f32.mrb[0].mxu0
    %v2579 = vadd.f32 %v2239, %v2578
    %v2580 = vpop.f32.mrb[0].mxu0
    %v2581 = vpop.f32.mrb[0].mxu0
    %v2582 = vadd.f32 %v2239, %v2581
    %v2583 = vpop.f32.mrb[0].mxu0
    %2584 = vmatprep.mubr.bf16.mxu0 0
    %2585 = vmatmul.mubr.bf16.gmra.mrb[0].mxu0 %v2188
    %v2586 = vpop.f32.mrb[0].mxu0
    %v2587 = vadd.f32 %v2239, %v2586
    %v2588 = vpop.f32.mrb[0].mxu0
    %v2589 = vpop.f32.mrb[0].mxu0
    %v2590 = vadd.f32 %v2239, %v2589
    %v2591 = vpop.f32.mrb[0].mxu0
    %2592 = vmatprep.mubr.bf16.mxu0 0
    %2593 = vmatmul.mubr.bf16.gmra.mrb[0].mxu0 %v2189
    %v2594 = vpop.f32.mrb[0].mxu0
    %v2595 = vadd.f32 %v2239, %v2594
    %v2596 = vpop.f32.mrb[0].mxu0
    %v2597 = vpop.f32.mrb[0].mxu0
    %v2598 = vadd.f32 %v2239, %v2597
    %v2599 = vpop.f32.mrb[0].mxu0
    %2600 = vmatprep.mubr.bf16.mxu0 0
    %2601 = vmatmul.mubr.bf16.gmra.mrb[0].mxu0 %v2190
    %v2602 = vpop.f32.mrb[0].mxu0
    %v2603 = vadd.f32 %v2239, %v2602
    %v2604 = vpop.f32.mrb[0].mxu0
    %v2605 = vpop.f32.mrb[0].mxu0
    %v2606 = vadd.f32 %v2239, %v2605
    %v2607 = vpop.f32.mrb[0].mxu0
    %2608 = vmatprep.mubr.bf16.mxu0 0
    %2609 = vmatmul.mubr.bf16.gmra.mrb[0].mxu0 %v2191
    %v2610 = vpop.f32.mrb[0].mxu0
    %v2611 = vadd.f32 %v2239, %v2610
    %v2612 = vpop.f32.mrb[0].mxu0
    %v2613 = vpop.f32.mrb[0].mxu0
    %v2614 = vadd.f32 %v2239, %v2613
    %v2615 = vpop.f32.mrb[0].mxu0
    %2616 = vmatprep.mubr.bf16.mxu0 0
    %2617 = vmatmul.mubr.bf16.gmra.mrb[0].mxu0 %v2192
    %v2618 = vpop.f32.mrb[0].mxu0
    %v2619 = vadd.f32 %v2239, %v2618
    %v2620 = vpop.f32.mrb[0].mxu0
    %v2621 = vpop.f32.mrb[0].mxu0
    %v2622 = vadd.f32 %v2239, %v2621
    %v2623 = vpop.f32.mrb[0].mxu0
    %2624 = vmatprep.mubr.bf16.mxu0 0
    %2625 = vmatmul.mubr.bf16.gmra.mrb[0].mxu0 %v2193
    %v2626 = vpop.f32.mrb[0].mxu0
    %v2627 = vadd.f32 %v2239, %v2626
    %v2628 = vpop.f32.mrb[0].mxu0
    %v2629 = vpop.f32.mrb[0].mxu0
    %v2630 = vadd.f32 %v2239, %v2629
    %v2631 = vpop.f32.mrb[0].mxu0
    %2632 = vmatprep.mubr.bf16.mxu0 0
    %2633 = vmatmul.mubr.bf16.gmra.mrb[0].mxu0 %v2194
    %v2634 = vpop.f32.mrb[0].mxu0
    %v2635 = vadd.f32 %v2239, %v2634
    %v2636 = vpop.f32.mrb[0].mxu0
    %v2637 = vpop.f32.mrb[0].mxu0
    %v2638 = vadd.f32 %v2239, %v2637
    %v2639 = vpop.f32.mrb[0].mxu0
    %2640 = vmatprep.mubr.bf16.mxu0 0
    %2641 = vmatmul.mubr.bf16.gmra.mrb[0].mxu0 %v2195
    %v2642 = vpop.f32.mrb[0].mxu0
    %v2643 = vadd.f32 %v2239, %v2642
    %v2644 = vpop.f32.mrb[0].mxu0
    %v2645 = vpop.f32.mrb[0].mxu0
    %v2646 = vadd.f32 %v2239, %v2645
    %v2647 = vpop.f32.mrb[0].mxu0
    %2648 = vmatprep.mubr.bf16.mxu0 0
    %2649 = vmatmul.mubr.bf16.gmra.mrb[0].mxu0 %v2196
    %v2650 = vpop.f32.mrb[0].mxu0
    %v2651 = vadd.f32 %v2239, %v2650
    %v2652 = vpop.f32.mrb[0].mxu0
    %v2653 = vpop.f32.mrb[0].mxu0
    %v2654 = vadd.f32 %v2239, %v2653
    %v2655 = vpop.f32.mrb[0].mxu0
    %2656 = vmatprep.mubr.bf16.mxu0 0
    %2657 = vmatmul.mubr.bf16.gmra.mrb[0].mxu0 %v2197
    %v2658 = vpop.f32.mrb[0].mxu0
    %v2659 = vadd.f32 %v2239, %v2658
    %v2660 = vpop.f32.mrb[0].mxu0
    %v2661 = vpop.f32.mrb[0].mxu0
    %v2662 = vadd.f32 %v2239, %v2661
    %v2663 = vpop.f32.mrb[0].mxu0
    %2664 = vmatprep.mubr.bf16.mxu0 0
    %2665 = vmatmul.mubr.bf16.gmra.mrb[0].mxu0 %v2198
    %v2666 = vpop.f32.mrb[0].mxu0
    %v2667 = vadd.f32 %v2239, %v2666
    %v2668 = vpop.f32.mrb[0].mxu0
    %v2669 = vpop.f32.mrb[0].mxu0
    %v2670 = vadd.f32 %v2239, %v2669
    %v2671 = vpop.f32.mrb[0].mxu0
    %2672 = vmatprep.mubr.bf16.mxu0 0
    %2673 = vmatmul.mubr.bf16.gmra.mrb[0].mxu0 %v2199
    %v2674 = vpop.f32.mrb[0].mxu0
    %v2675 = vadd.f32 %v2239, %v2674
    %v2676 = vpop.f32.mrb[0].mxu0
    %v2677 = vpop.f32.mrb[0].mxu0
    %v2678 = vadd.f32 %v2239, %v2677
    %v2679 = vpop.f32.mrb[0].mxu0
    %2680 = vmatprep.mubr.bf16.mxu0 0
    %2681 = vmatmul.mubr.bf16.gmra.mrb[0].mxu0 %v2200
    %v2682 = vpop.f32.mrb[0].mxu0
    %v2683 = vadd.f32 %v2239, %v2682
    %v2684 = vpop.f32.mrb[0].mxu0
    %v2685 = vpop.f32.mrb[0].mxu0
    %v2686 = vadd.f32 %v2239, %v2685
    %v2687 = vpop.f32.mrb[0].mxu0
    %2688 = vmatprep.mubr.bf16.mxu0 0
    %2689 = vmatmul.mubr.bf16.gmra.mrb[0].mxu0 %v2201
    %v2690 = vpop.f32.mrb[0].mxu0
    %v2691 = vadd.f32 %v2239, %v2690
    %v2692 = vpop.f32.mrb[0].mxu0
    %v2693 = vpop.f32.mrb[0].mxu0
    %v2694 = vadd.f32 %v2239, %v2693
    %v2695 = vpop.f32.mrb[0].mxu0
    %2696 = vmatprep.mubr.bf16.mxu0 0
    %2697 = vmatmul.mubr.bf16.gmra.mrb[0].mxu0 %v2202
    %v2698 = vpop.f32.mrb[0].mxu0
    %v2699 = vadd.f32 %v2239, %v2698
    %v2700 = vpop.f32.mrb[0].mxu0
    %v2701 = vpop.f32.mrb[0].mxu0
    %v2702 = vadd.f32 %v2239, %v2701
    %v2703 = vpop.f32.mrb[0].mxu0
    %2704 = vmatprep.mubr.bf16.mxu0 0
    %2705 = vmatmul.mubr.bf16.gmra.mrb[0].mxu0 %v2203
    %v2706 = vpop.f32.mrb[0].mxu0
    %v2707 = vadd.f32 %v2239, %v2706
    %v2708 = vpop.f32.mrb[0].mxu0
    %v2709 = vpop.f32.mrb[0].mxu0
    %v2710 = vadd.f32 %v2239, %v2709
    %v2711 = vpop.f32.mrb[0].mxu0
    %2712 = vmatprep.mubr.bf16.mxu0 0
    %2713 = vmatmul.mubr.bf16.gmra.mrb[0].mxu0 %v2204
    %v2714 = vpop.f32.mrb[0].mxu0
    %v2715 = vadd.f32 %v2239, %v2714
    %v2716 = vpop.f32.mrb[0].mxu0
    %v2717 = vpop.f32.mrb[0].mxu0
    %v2718 = vadd.f32 %v2239, %v2717
    %v2719 = vpop.f32.mrb[0].mxu0
    %2720 = vmatprep.mubr.bf16.mxu0 0
    %2721 = vmatmul.mubr.bf16.gmra.mrb[0].mxu0 %v2205
    %v2722 = vpop.f32.mrb[0].mxu0
    %v2723 = vadd.f32 %v2239, %v2722
    %v2724 = vpop.f32.mrb[0].mxu0
    %v2725 = vpop.f32.mrb[0].mxu0
    %v2726 = vadd.f32 %v2239, %v2725
    %v2727 = vpop.f32.mrb[0].mxu0
    %2728 = vmatprep.mubr.bf16.mxu0 0
    %2729 = vmatmul.mubr.bf16.gmra.mrb[0].mxu0 %v2206
    %v2730 = vpop.f32.mrb[0].mxu0
    %v2731 = vadd.f32 %v2239, %v2730
    %v2732 = vpop.f32.mrb[0].mxu0
    %v2733 = vpop.f32.mrb[0].mxu0
    %v2734 = vadd.f32 %v2239, %v2733
    %v2735 = vpop.f32.mrb[0].mxu0
    %2736 = vmatprep.mubr.bf16.mxu0 0
    %2737 = vmatmul.mubr.bf16.gmra.mrb[0].mxu0 %v2207
    %v2738 = vpop.f32.mrb[0].mxu0
    %v2739 = vadd.f32 %v2239, %v2738
    %v2740 = vpop.f32.mrb[0].mxu0
    %v2741 = vpop.f32.mrb[0].mxu0
    %v2742 = vadd.f32 %v2239, %v2741
    %v2743 = vpop.f32.mrb[0].mxu0
    %2744 = vmatprep.mubr.bf16.mxu0 0
    %2745 = vmatmul.mubr.bf16.gmra.mrb[0].mxu0 %v2208
    %v2746 = vpop.f32.mrb[0].mxu0
    %v2747 = vadd.f32 %v2239, %v2746
    %v2748 = vpop.f32.mrb[0].mxu0
    %v2749 = vpop.f32.mrb[0].mxu0
    %v2750 = vadd.f32 %v2239, %v2749
    %v2751 = vpop.f32.mrb[0].mxu0
    %2752 = vmatprep.mubr.bf16.mxu0 0
    %2753 = vmatmul.mubr.bf16.gmra.mrb[0].mxu0 %v2209
    %v2754 = vpop.f32.mrb[0].mxu0
    %v2755 = vadd.f32 %v2239, %v2754
    %v2756 = vpop.f32.mrb[0].mxu0
    %v2757 = vpop.f32.mrb[0].mxu0
    %v2758 = vadd.f32 %v2239, %v2757
    %v2759 = vpop.f32.mrb[0].mxu0
    %2760 = vmatprep.mubr.bf16.mxu0 0
    %2761 = vmatmul.mubr.bf16.gmra.mrb[0].mxu0 %v2210
    %v2762 = vpop.f32.mrb[0].mxu0
    %v2763 = vadd.f32 %v2239, %v2762
    %v2764 = vpop.f32.mrb[0].mxu0
    %v2765 = vpop.f32.mrb[0].mxu0
    %v2766 = vadd.f32 %v2239, %v2765
    %v2767 = vpop.f32.mrb[0].mxu0
    %2768 = vmatprep.mubr.bf16.mxu0 0
    %2769 = vmatmul.mubr.bf16.gmra.mrb[0].mxu0 %v2211
    %v2770 = vpop.f32.mrb[0].mxu0
    %v2771 = vadd.f32 %v2239, %v2770
    %v2772 = vpop.f32.mrb[0].mxu0
    %v2773 = vpop.f32.mrb[0].mxu0
    %v2774 = vadd.f32 %v2239, %v2773
    %v2775 = vpop.f32.mrb[0].mxu0
    %2776 = vmatprep.mubr.bf16.mxu0 0
    %2777 = vmatmul.mubr.bf16.gmra.mrb[0].mxu0 %v2212
    %v2778 = vpop.f32.mrb[0].mxu0
    %v2779 = vadd.f32 %v2239, %v2778
    %v2780 = vpop.f32.mrb[0].mxu0
    %v2781 = vpop.f32.mrb[0].mxu0
    %v2782 = vadd.f32 %v2239, %v2781
    %v2783 = vpop.f32.mrb[0].mxu0
    %2784 = vmatprep.mubr.bf16.mxu0 0
    %2785 = vmatmul.mubr.bf16.gmra.mrb[0].mxu0 %v2213
    %v2786 = vpop.f32.mrb[0].mxu0
    %v2787 = vadd.f32 %v2239, %v2786
    %v2788 = vpop.f32.mrb[0].mxu0
    %v2789 = vpop.f32.mrb[0].mxu0
    %v2790 = vadd.f32 %v2239, %v2789
    %v2791 = vpop.f32.mrb[0].mxu0
    %2792 = vmatprep.mubr.bf16.mxu0 0
    %2793 = vmatmul.mubr.bf16.gmra.mrb[0].mxu0 %v2214
    %v2794 = vpop.f32.mrb[0].mxu0
    %v2795 = vadd.f32 %v2239, %v2794
    %v2796 = vpop.f32.mrb[0].mxu0
    %v2797 = vpop.f32.mrb[0].mxu0
    %v2798 = vadd.f32 %v2239, %v2797
    %v2799 = vpop.f32.mrb[0].mxu0
    %2800 = vmatprep.mubr.bf16.mxu0 0
    %2801 = vmatmul.mubr.bf16.gmra.mrb[0].mxu0 %v2215
    %v2802 = vpop.f32.mrb[0].mxu0
    %v2803 = vadd.f32 %v2239, %v2802
    %v2804 = vpop.f32.mrb[0].mxu0
    %v2805 = vpop.f32.mrb[0].mxu0
    %v2806 = vadd.f32 %v2239, %v2805
    %v2807 = vpop.f32.mrb[0].mxu0
    %2808 = vmatprep.mubr.bf16.mxu0 0
    %2809 = vmatmul.mubr.bf16.gmra.mrb[0].mxu0 %v2216
    %v2810 = vpop.f32.mrb[0].mxu0
    %v2811 = vadd.f32 %v2239, %v2810
    %v2812 = vpop.f32.mrb[0].mxu0
    %v2813 = vpop.f32.mrb[0].mxu0
    %v2814 = vadd.f32 %v2239, %v2813
    %v2815 = vpop.f32.mrb[0].mxu0
    %2816 = vmatprep.mubr.bf16.mxu0 0
    %2817 = vmatmul.mubr.bf16.gmra.mrb[0].mxu0 %v2217
    %v2818 = vpop.f32.mrb[0].mxu0
    %v2819 = vadd.f32 %v2239, %v2818
    %v2820 = vpop.f32.mrb[0].mxu0
    %v2821 = vpop.f32.mrb[0].mxu0
    %v2822 = vadd.f32 %v2239, %v2821
    %v2823 = vpop.f32.mrb[0].mxu0
    %2824 = vmatprep.mubr.bf16.mxu0 0
    %2825 = vmatmul.mubr.bf16.gmra.mrb[0].mxu0 %v2218
    %v2826 = vpop.f32.mrb[0].mxu0
    %v2827 = vadd.f32 %v2239, %v2826
    %v2828 = vpop.f32.mrb[0].mxu0
    %v2829 = vpop.f32.mrb[0].mxu0
    %v2830 = vadd.f32 %v2239, %v2829
    %v2831 = vpop.f32.mrb[0].mxu0
    %2832 = vdwg.mxu0
    %v2833 = vmax.f32 %v2323, 0.0
    %v2834 = vmax.f32 %v2326, 0.0
    %v2835 = vmax.f32 %v2331, 0.0
    %v2836 = vmax.f32 %v2334, 0.0
    %v2837 = vmax.f32 %v2339, 0.0
    %v2838 = vmax.f32 %v2342, 0.0
    %v2839 = vmax.f32 %v2347, 0.0
    %v2840 = vmax.f32 %v2350, 0.0
    %v2841 = vmax.f32 %v2355, 0.0
    %v2842 = vmax.f32 %v2358, 0.0
    %v2843 = vmax.f32 %v2363, 0.0
    %v2844 = vmax.f32 %v2366, 0.0
    %v2845 = vmax.f32 %v2371, 0.0
    %v2846 = vmax.f32 %v2374, 0.0
    %v2847 = vmax.f32 %v2379, 0.0
    %v2848 = vmax.f32 %v2382, 0.0
    %v2849 = vmax.f32 %v2387, 0.0
    %v2850 = vmax.f32 %v2390, 0.0
    %v2851 = vmax.f32 %v2395, 0.0
    %v2852 = vmax.f32 %v2398, 0.0
    %v2853 = vmax.f32 %v2403, 0.0
    %v2854 = vmax.f32 %v2406, 0.0
    %v2855 = vmax.f32 %v2411, 0.0
    %v2856 = vmax.f32 %v2414, 0.0
    %v2857 = vmax.f32 %v2419, 0.0
    %v2858 = vmax.f32 %v2422, 0.0
    %v2859 = vmax.f32 %v2427, 0.0
    %v2860 = vmax.f32 %v2430, 0.0
    %v2861 = vmax.f32 %v2435, 0.0
    %v2862 = vmax.f32 %v2438, 0.0
    %v2863 = vmax.f32 %v2443, 0.0
    %v2864 = vmax.f32 %v2446, 0.0
    %v2865 = vmax.f32 %v2451, 0.0
    %v2866 = vmax.f32 %v2454, 0.0
    %v2867 = vmax.f32 %v2459, 0.0
    %v2868 = vmax.f32 %v2462, 0.0
    %v2869 = vmax.f32 %v2467, 0.0
    %v2870 = vmax.f32 %v2470, 0.0
    %v2871 = vmax.f32 %v2475, 0.0
    %v2872 = vmax.f32 %v2478, 0.0
    %v2873 = vmax.f32 %v2483, 0.0
    %v2874 = vmax.f32 %v2486, 0.0
    %v2875 = vmax.f32 %v2491, 0.0
    %v2876 = vmax.f32 %v2494, 0.0
    %v2877 = vmax.f32 %v2499, 0.0
    %v2878 = vmax.f32 %v2502, 0.0
    %v2879 = vmax.f32 %v2507, 0.0
    %v2880 = vmax.f32 %v2510, 0.0
    %v2881 = vmax.f32 %v2515, 0.0
    %v2882 = vmax.f32 %v2518, 0.0
    %v2883 = vmax.f32 %v2523, 0.0
    %v2884 = vmax.f32 %v2526, 0.0
    %v2885 = vmax.f32 %v2531, 0.0
    %v2886 = vmax.f32 %v2534, 0.0
    %v2887 = vmax.f32 %v2539, 0.0
    %v2888 = vmax.f32 %v2542, 0.0
    %v2889 = vmax.f32 %v2547, 0.0
    %v2890 = vmax.f32 %v2550, 0.0
    %v2891 = vmax.f32 %v2555, 0.0
    %v2892 = vmax.f32 %v2558, 0.0
    %v2893 = vmax.f32 %v2563, 0.0
    %v2894 = vmax.f32 %v2566, 0.0
    %v2895 = vmax.f32 %v2571, 0.0
    %v2896 = vmax.f32 %v2574, 0.0
    %v2897 = vmax.f32 %v2579, 0.0
    %v2898 = vmax.f32 %v2582, 0.0
    %v2899 = vmax.f32 %v2587, 0.0
    %v2900 = vmax.f32 %v2590, 0.0
    %v2901 = vmax.f32 %v2595, 0.0
    %v2902 = vmax.f32 %v2598, 0.0
    %v2903 = vmax.f32 %v2603, 0.0
    %v2904 = vmax.f32 %v2606, 0.0
    %v2905 = vmax.f32 %v2611, 0.0
    %v2906 = vmax.f32 %v2614, 0.0
    %v2907 = vmax.f32 %v2619, 0.0
    %v2908 = vmax.f32 %v2622, 0.0
    %v2909 = vmax.f32 %v2627, 0.0
    %v2910 = vmax.f32 %v2630, 0.0
    %v2911 = vmax.f32 %v2635, 0.0
    %v2912 = vmax.f32 %v2638, 0.0
    %v2913 = vmax.f32 %v2643, 0.0
    %v2914 = vmax.f32 %v2646, 0.0
    %v2915 = vmax.f32 %v2651, 0.0
    %v2916 = vmax.f32 %v2654, 0.0
    %v2917 = vmax.f32 %v2659, 0.0
    %v2918 = vmax.f32 %v2662, 0.0
    %v2919 = vmax.f32 %v2667, 0.0
    %v2920 = vmax.f32 %v2670, 0.0
    %v2921 = vmax.f32 %v2675, 0.0
    %v2922 = vmax.f32 %v2678, 0.0
    %v2923 = vmax.f32 %v2683, 0.0
    %v2924 = vmax.f32 %v2686, 0.0
    %v2925 = vmax.f32 %v2691, 0.0
    %v2926 = vmax.f32 %v2694, 0.0
    %v2927 = vmax.f32 %v2699, 0.0
    %v2928 = vmax.f32 %v2702, 0.0
    %v2929 = vmax.f32 %v2707, 0.0
    %v2930 = vmax.f32 %v2710, 0.0
    %v2931 = vmax.f32 %v2715, 0.0
    %v2932 = vmax.f32 %v2718, 0.0
    %v2933 = vmax.f32 %v2723, 0.0
    %v2934 = vmax.f32 %v2726, 0.0
    %v2935 = vmax.f32 %v2731, 0.0
    %v2936 = vmax.f32 %v2734, 0.0
    %v2937 = vmax.f32 %v2739, 0.0
    %v2938 = vmax.f32 %v2742, 0.0
    %v2939 = vmax.f32 %v2747, 0.0
    %v2940 = vmax.f32 %v2750, 0.0
    %v2941 = vmax.f32 %v2755, 0.0
    %v2942 = vmax.f32 %v2758, 0.0
    %v2943 = vmax.f32 %v2763, 0.0
    %v2944 = vmax.f32 %v2766, 0.0
    %v2945 = vmax.f32 %v2771, 0.0
    %v2946 = vmax.f32 %v2774, 0.0
    %v2947 = vmax.f32 %v2779, 0.0
    %v2948 = vmax.f32 %v2782, 0.0
    %v2949 = vmax.f32 %v2787, 0.0
    %v2950 = vmax.f32 %v2790, 0.0
    %v2951 = vmax.f32 %v2795, 0.0
    %v2952 = vmax.f32 %v2798, 0.0
    %v2953 = vmax.f32 %v2803, 0.0
    %v2954 = vmax.f32 %v2806, 0.0
    %v2955 = vmax.f32 %v2811, 0.0
    %v2956 = vmax.f32 %v2814, 0.0
    %v2957 = vmax.f32 %v2819, 0.0
    %v2958 = vmax.f32 %v2822, 0.0
    %v2959 = vmax.f32 %v2827, 0.0
    %v2960 = vmax.f32 %v2830, 0.0
    %v2961 = vlaneseq
    %v2962 = vshrl.u32 %v2961, 7
    %v2963 = vsub.s32 0, %v2962
    %v2964 = vrot.slane %v150, %v2963
    %v2965 = vmul.f32 %v2833, %v2964
    %v2966 = vmul.f32 %v2834, %v2964
    %v2967 = vmul.f32 %v2835, %v2964
    %v2968 = vmul.f32 %v2836, %v2964
    %v2969 = vmul.f32 %v2837, %v2964
    %v2970 = vmul.f32 %v2838, %v2964
    %v2971 = vmul.f32 %v2839, %v2964
    %v2972 = vmul.f32 %v2840, %v2964
    %v2973 = vmul.f32 %v2841, %v2964
    %v2974 = vmul.f32 %v2842, %v2964
    %v2975 = vmul.f32 %v2843, %v2964
    %v2976 = vmul.f32 %v2844, %v2964
    %v2977 = vmul.f32 %v2845, %v2964
    %v2978 = vmul.f32 %v2846, %v2964
    %v2979 = vmul.f32 %v2847, %v2964
    %v2980 = vmul.f32 %v2848, %v2964
    %v2981 = vmul.f32 %v2849, %v2964
    %v2982 = vmul.f32 %v2850, %v2964
    %v2983 = vmul.f32 %v2851, %v2964
    %v2984 = vmul.f32 %v2852, %v2964
    %v2985 = vmul.f32 %v2853, %v2964
    %v2986 = vmul.f32 %v2854, %v2964
    %v2987 = vmul.f32 %v2855, %v2964
    %v2988 = vmul.f32 %v2856, %v2964
    %v2989 = vmul.f32 %v2857, %v2964
    %v2990 = vmul.f32 %v2858, %v2964
    %v2991 = vmul.f32 %v2859, %v2964
    %v2992 = vmul.f32 %v2860, %v2964
    %v2993 = vmul.f32 %v2861, %v2964
    %v2994 = vmul.f32 %v2862, %v2964
    %v2995 = vmul.f32 %v2863, %v2964
    %v2996 = vmul.f32 %v2864, %v2964
    %v2997 = vmul.f32 %v2865, %v2964
    %v2998 = vmul.f32 %v2866, %v2964
    %v2999 = vmul.f32 %v2867, %v2964
    %v3000 = vmul.f32 %v2868, %v2964
    %v3001 = vmul.f32 %v2869, %v2964
    %v3002 = vmul.f32 %v2870, %v2964
    %v3003 = vmul.f32 %v2871, %v2964
    %v3004 = vmul.f32 %v2872, %v2964
    %v3005 = vmul.f32 %v2873, %v2964
    %v3006 = vmul.f32 %v2874, %v2964
    %v3007 = vmul.f32 %v2875, %v2964
    %v3008 = vmul.f32 %v2876, %v2964
    %v3009 = vmul.f32 %v2877, %v2964
    %v3010 = vmul.f32 %v2878, %v2964
    %v3011 = vmul.f32 %v2879, %v2964
    %v3012 = vmul.f32 %v2880, %v2964
    %v3013 = vmul.f32 %v2881, %v2964
    %v3014 = vmul.f32 %v2882, %v2964
    %v3015 = vmul.f32 %v2883, %v2964
    %v3016 = vmul.f32 %v2884, %v2964
    %v3017 = vmul.f32 %v2885, %v2964
    %v3018 = vmul.f32 %v2886, %v2964
    %v3019 = vmul.f32 %v2887, %v2964
    %v3020 = vmul.f32 %v2888, %v2964
    %v3021 = vmul.f32 %v2889, %v2964
    %v3022 = vmul.f32 %v2890, %v2964
    %v3023 = vmul.f32 %v2891, %v2964
    %v3024 = vmul.f32 %v2892, %v2964
    %v3025 = vmul.f32 %v2893, %v2964
    %v3026 = vmul.f32 %v2894, %v2964
    %v3027 = vmul.f32 %v2895, %v2964
    %v3028 = vmul.f32 %v2896, %v2964
    %v3029 = vmul.f32 %v2897, %v2964
    %v3030 = vmul.f32 %v2898, %v2964
    %v3031 = vmul.f32 %v2899, %v2964
    %v3032 = vmul.f32 %v2900, %v2964
    %v3033 = vmul.f32 %v2901, %v2964
    %v3034 = vmul.f32 %v2902, %v2964
    %v3035 = vmul.f32 %v2903, %v2964
    %v3036 = vmul.f32 %v2904, %v2964
    %v3037 = vmul.f32 %v2905, %v2964
    %v3038 = vmul.f32 %v2906, %v2964
    %v3039 = vmul.f32 %v2907, %v2964
    %v3040 = vmul.f32 %v2908, %v2964
    %v3041 = vmul.f32 %v2909, %v2964
    %v3042 = vmul.f32 %v2910, %v2964
    %v3043 = vmul.f32 %v2911, %v2964
    %v3044 = vmul.f32 %v2912, %v2964
    %v3045 = vmul.f32 %v2913, %v2964
    %v3046 = vmul.f32 %v2914, %v2964
    %v3047 = vmul.f32 %v2915, %v2964
    %v3048 = vmul.f32 %v2916, %v2964
    %v3049 = vmul.f32 %v2917, %v2964
    %v3050 = vmul.f32 %v2918, %v2964
    %v3051 = vmul.f32 %v2919, %v2964
    %v3052 = vmul.f32 %v2920, %v2964
    %v3053 = vmul.f32 %v2921, %v2964
    %v3054 = vmul.f32 %v2922, %v2964
    %v3055 = vmul.f32 %v2923, %v2964
    %v3056 = vmul.f32 %v2924, %v2964
    %v3057 = vmul.f32 %v2925, %v2964
    %v3058 = vmul.f32 %v2926, %v2964
    %v3059 = vmul.f32 %v2927, %v2964
    %v3060 = vmul.f32 %v2928, %v2964
    %v3061 = vmul.f32 %v2929, %v2964
    %v3062 = vmul.f32 %v2930, %v2964
    %v3063 = vmul.f32 %v2931, %v2964
    %v3064 = vmul.f32 %v2932, %v2964
    %v3065 = vmul.f32 %v2933, %v2964
    %v3066 = vmul.f32 %v2934, %v2964
    %v3067 = vmul.f32 %v2935, %v2964
    %v3068 = vmul.f32 %v2936, %v2964
    %v3069 = vmul.f32 %v2937, %v2964
    %v3070 = vmul.f32 %v2938, %v2964
    %v3071 = vmul.f32 %v2939, %v2964
    %v3072 = vmul.f32 %v2940, %v2964
    %v3073 = vmul.f32 %v2941, %v2964
    %v3074 = vmul.f32 %v2942, %v2964
    %v3075 = vmul.f32 %v2943, %v2964
    %v3076 = vmul.f32 %v2944, %v2964
    %v3077 = vmul.f32 %v2945, %v2964
    %v3078 = vmul.f32 %v2946, %v2964
    %v3079 = vmul.f32 %v2947, %v2964
    %v3080 = vmul.f32 %v2948, %v2964
    %v3081 = vmul.f32 %v2949, %v2964
    %v3082 = vmul.f32 %v2950, %v2964
    %v3083 = vmul.f32 %v2951, %v2964
    %v3084 = vmul.f32 %v2952, %v2964
    %v3085 = vmul.f32 %v2953, %v2964
    %v3086 = vmul.f32 %v2954, %v2964
    %v3087 = vmul.f32 %v2955, %v2964
    %v3088 = vmul.f32 %v2956, %v2964
    %v3089 = vmul.f32 %v2957, %v2964
    %v3090 = vmul.f32 %v2958, %v2964
    %v3091 = vmul.f32 %v2959, %v2964
    %v3092 = vmul.f32 %v2960, %v2964
    %vm3093 = vcmask 523264
    %v3094 = vsel %vm3093, %v2965, 0.0
    %3095 = vadd.xlane.f32.xlu0 %v3094
    %v3096 = vpop.xlane.xlu0 %3095
    %v3097 = vsel %vm3093, %v2966, 0.0
    %3098 = vadd.xlane.f32.xlu0 %v3097
    %v3099 = vpop.xlane.xlu0 %3098
    %v3100 = vsel %vm3093, %v2967, 0.0
    %3101 = vadd.xlane.f32.xlu0 %v3100
    %v3102 = vpop.xlane.xlu0 %3101
    %v3103 = vsel %vm3093, %v2968, 0.0
    %3104 = vadd.xlane.f32.xlu0 %v3103
    %v3105 = vpop.xlane.xlu0 %3104
    %v3106 = vsel %vm3093, %v2969, 0.0
    %3107 = vadd.xlane.f32.xlu0 %v3106
    %v3108 = vpop.xlane.xlu0 %3107
    %v3109 = vsel %vm3093, %v2970, 0.0
    %3110 = vadd.xlane.f32.xlu0 %v3109
    %v3111 = vpop.xlane.xlu0 %3110
    %v3112 = vsel %vm3093, %v2971, 0.0
    %3113 = vadd.xlane.f32.xlu0 %v3112
    %v3114 = vpop.xlane.xlu0 %3113
    %v3115 = vsel %vm3093, %v2972, 0.0
    %3116 = vadd.xlane.f32.xlu0 %v3115
    %v3117 = vpop.xlane.xlu0 %3116
    %v3118 = vsel %vm3093, %v2973, 0.0
    %3119 = vadd.xlane.f32.xlu0 %v3118
    %v3120 = vpop.xlane.xlu0 %3119
    %v3121 = vsel %vm3093, %v2974, 0.0
    %3122 = vadd.xlane.f32.xlu0 %v3121
    %v3123 = vpop.xlane.xlu0 %3122
    %v3124 = vsel %vm3093, %v2975, 0.0
    %3125 = vadd.xlane.f32.xlu0 %v3124
    %v3126 = vpop.xlane.xlu0 %3125
    %v3127 = vsel %vm3093, %v2976, 0.0
    %3128 = vadd.xlane.f32.xlu0 %v3127
    %v3129 = vpop.xlane.xlu0 %3128
    %v3130 = vsel %vm3093, %v2977, 0.0
    %3131 = vadd.xlane.f32.xlu0 %v3130
    %v3132 = vpop.xlane.xlu0 %3131
    %v3133 = vsel %vm3093, %v2978, 0.0
    %3134 = vadd.xlane.f32.xlu0 %v3133
    %v3135 = vpop.xlane.xlu0 %3134
    %v3136 = vsel %vm3093, %v2979, 0.0
    %3137 = vadd.xlane.f32.xlu0 %v3136
    %v3138 = vpop.xlane.xlu0 %3137
    %v3139 = vsel %vm3093, %v2980, 0.0
    %3140 = vadd.xlane.f32.xlu0 %v3139
    %v3141 = vpop.xlane.xlu0 %3140
    %v3142 = vsel %vm3093, %v2981, 0.0
    %3143 = vadd.xlane.f32.xlu0 %v3142
    %v3144 = vpop.xlane.xlu0 %3143
    %v3145 = vsel %vm3093, %v2982, 0.0
    %3146 = vadd.xlane.f32.xlu0 %v3145
    %v3147 = vpop.xlane.xlu0 %3146
    %v3148 = vsel %vm3093, %v2983, 0.0
    %3149 = vadd.xlane.f32.xlu0 %v3148
    %v3150 = vpop.xlane.xlu0 %3149
    %v3151 = vsel %vm3093, %v2984, 0.0
    %3152 = vadd.xlane.f32.xlu0 %v3151
    %v3153 = vpop.xlane.xlu0 %3152
    %v3154 = vsel %vm3093, %v2985, 0.0
    %3155 = vadd.xlane.f32.xlu0 %v3154
    %v3156 = vpop.xlane.xlu0 %3155
    %v3157 = vsel %vm3093, %v2986, 0.0
    %3158 = vadd.xlane.f32.xlu0 %v3157
    %v3159 = vpop.xlane.xlu0 %3158
    %v3160 = vsel %vm3093, %v2987, 0.0
    %3161 = vadd.xlane.f32.xlu0 %v3160
    %v3162 = vpop.xlane.xlu0 %3161
    %v3163 = vsel %vm3093, %v2988, 0.0
    %3164 = vadd.xlane.f32.xlu0 %v3163
    %v3165 = vpop.xlane.xlu0 %3164
    %v3166 = vsel %vm3093, %v2989, 0.0
    %3167 = vadd.xlane.f32.xlu0 %v3166
    %v3168 = vpop.xlane.xlu0 %3167
    %v3169 = vsel %vm3093, %v2990, 0.0
    %3170 = vadd.xlane.f32.xlu0 %v3169
    %v3171 = vpop.xlane.xlu0 %3170
    %v3172 = vsel %vm3093, %v2991, 0.0
    %3173 = vadd.xlane.f32.xlu0 %v3172
    %v3174 = vpop.xlane.xlu0 %3173
    %v3175 = vsel %vm3093, %v2992, 0.0
    %3176 = vadd.xlane.f32.xlu0 %v3175
    %v3177 = vpop.xlane.xlu0 %3176
    %v3178 = vsel %vm3093, %v2993, 0.0
    %3179 = vadd.xlane.f32.xlu0 %v3178
    %v3180 = vpop.xlane.xlu0 %3179
    %v3181 = vsel %vm3093, %v2994, 0.0
    %3182 = vadd.xlane.f32.xlu0 %v3181
    %v3183 = vpop.xlane.xlu0 %3182
    %v3184 = vsel %vm3093, %v2995, 0.0
    %3185 = vadd.xlane.f32.xlu0 %v3184
    %v3186 = vpop.xlane.xlu0 %3185
    %v3187 = vsel %vm3093, %v2996, 0.0
    %3188 = vadd.xlane.f32.xlu0 %v3187
    %v3189 = vpop.xlane.xlu0 %3188
    %v3190 = vsel %vm3093, %v2997, 0.0
    %3191 = vadd.xlane.f32.xlu0 %v3190
    %v3192 = vpop.xlane.xlu0 %3191
    %v3193 = vsel %vm3093, %v2998, 0.0
    %3194 = vadd.xlane.f32.xlu0 %v3193
    %v3195 = vpop.xlane.xlu0 %3194
    %v3196 = vsel %vm3093, %v2999, 0.0
    %3197 = vadd.xlane.f32.xlu0 %v3196
    %v3198 = vpop.xlane.xlu0 %3197
    %v3199 = vsel %vm3093, %v3000, 0.0
    %3200 = vadd.xlane.f32.xlu0 %v3199
    %v3201 = vpop.xlane.xlu0 %3200
    %v3202 = vsel %vm3093, %v3001, 0.0
    %3203 = vadd.xlane.f32.xlu0 %v3202
    %v3204 = vpop.xlane.xlu0 %3203
    %v3205 = vsel %vm3093, %v3002, 0.0
    %3206 = vadd.xlane.f32.xlu0 %v3205
    %v3207 = vpop.xlane.xlu0 %3206
    %v3208 = vsel %vm3093, %v3003, 0.0
    %3209 = vadd.xlane.f32.xlu0 %v3208
    %v3210 = vpop.xlane.xlu0 %3209
    %v3211 = vsel %vm3093, %v3004, 0.0
    %3212 = vadd.xlane.f32.xlu0 %v3211
    %v3213 = vpop.xlane.xlu0 %3212
    %v3214 = vsel %vm3093, %v3005, 0.0
    %3215 = vadd.xlane.f32.xlu0 %v3214
    %v3216 = vpop.xlane.xlu0 %3215
    %v3217 = vsel %vm3093, %v3006, 0.0
    %3218 = vadd.xlane.f32.xlu0 %v3217
    %v3219 = vpop.xlane.xlu0 %3218
    %v3220 = vsel %vm3093, %v3007, 0.0
    %3221 = vadd.xlane.f32.xlu0 %v3220
    %v3222 = vpop.xlane.xlu0 %3221
    %v3223 = vsel %vm3093, %v3008, 0.0
    %3224 = vadd.xlane.f32.xlu0 %v3223
    %v3225 = vpop.xlane.xlu0 %3224
    %v3226 = vsel %vm3093, %v3009, 0.0
    %3227 = vadd.xlane.f32.xlu0 %v3226
    %v3228 = vpop.xlane.xlu0 %3227
    %v3229 = vsel %vm3093, %v3010, 0.0
    %3230 = vadd.xlane.f32.xlu0 %v3229
    %v3231 = vpop.xlane.xlu0 %3230
    %v3232 = vsel %vm3093, %v3011, 0.0
    %3233 = vadd.xlane.f32.xlu0 %v3232
    %v3234 = vpop.xlane.xlu0 %3233
    %v3235 = vsel %vm3093, %v3012, 0.0
    %3236 = vadd.xlane.f32.xlu0 %v3235
    %v3237 = vpop.xlane.xlu0 %3236
    %v3238 = vsel %vm3093, %v3013, 0.0
    %3239 = vadd.xlane.f32.xlu0 %v3238
    %v3240 = vpop.xlane.xlu0 %3239
    %v3241 = vsel %vm3093, %v3014, 0.0
    %3242 = vadd.xlane.f32.xlu0 %v3241
    %v3243 = vpop.xlane.xlu0 %3242
    %v3244 = vsel %vm3093, %v3015, 0.0
    %3245 = vadd.xlane.f32.xlu0 %v3244
    %v3246 = vpop.xlane.xlu0 %3245
    %v3247 = vsel %vm3093, %v3016, 0.0
    %3248 = vadd.xlane.f32.xlu0 %v3247
    %v3249 = vpop.xlane.xlu0 %3248
    %v3250 = vsel %vm3093, %v3017, 0.0
    %3251 = vadd.xlane.f32.xlu0 %v3250
    %v3252 = vpop.xlane.xlu0 %3251
    %v3253 = vsel %vm3093, %v3018, 0.0
    %3254 = vadd.xlane.f32.xlu0 %v3253
    %v3255 = vpop.xlane.xlu0 %3254
    %v3256 = vsel %vm3093, %v3019, 0.0
    %3257 = vadd.xlane.f32.xlu0 %v3256
    %v3258 = vpop.xlane.xlu0 %3257
    %v3259 = vsel %vm3093, %v3020, 0.0
    %3260 = vadd.xlane.f32.xlu0 %v3259
    %v3261 = vpop.xlane.xlu0 %3260
    %v3262 = vsel %vm3093, %v3021, 0.0
    %3263 = vadd.xlane.f32.xlu0 %v3262
    %v3264 = vpop.xlane.xlu0 %3263
    %v3265 = vsel %vm3093, %v3022, 0.0
    %3266 = vadd.xlane.f32.xlu0 %v3265
    %v3267 = vpop.xlane.xlu0 %3266
    %v3268 = vsel %vm3093, %v3023, 0.0
    %3269 = vadd.xlane.f32.xlu0 %v3268
    %v3270 = vpop.xlane.xlu0 %3269
    %v3271 = vsel %vm3093, %v3024, 0.0
    %3272 = vadd.xlane.f32.xlu0 %v3271
    %v3273 = vpop.xlane.xlu0 %3272
    %v3274 = vsel %vm3093, %v3025, 0.0
    %3275 = vadd.xlane.f32.xlu0 %v3274
    %v3276 = vpop.xlane.xlu0 %3275
    %v3277 = vsel %vm3093, %v3026, 0.0
    %3278 = vadd.xlane.f32.xlu0 %v3277
    %v3279 = vpop.xlane.xlu0 %3278
    %v3280 = vsel %vm3093, %v3027, 0.0
    %3281 = vadd.xlane.f32.xlu0 %v3280
    %v3282 = vpop.xlane.xlu0 %3281
    %v3283 = vsel %vm3093, %v3028, 0.0
    %3284 = vadd.xlane.f32.xlu0 %v3283
    %v3285 = vpop.xlane.xlu0 %3284
    %v3286 = vsel %vm3093, %v3029, 0.0
    %3287 = vadd.xlane.f32.xlu0 %v3286
    %v3288 = vpop.xlane.xlu0 %3287
    %v3289 = vsel %vm3093, %v3030, 0.0
    %3290 = vadd.xlane.f32.xlu0 %v3289
    %v3291 = vpop.xlane.xlu0 %3290
    %v3292 = vsel %vm3093, %v3031, 0.0
    %3293 = vadd.xlane.f32.xlu0 %v3292
    %v3294 = vpop.xlane.xlu0 %3293
    %v3295 = vsel %vm3093, %v3032, 0.0
    %3296 = vadd.xlane.f32.xlu0 %v3295
    %v3297 = vpop.xlane.xlu0 %3296
    %v3298 = vsel %vm3093, %v3033, 0.0
    %3299 = vadd.xlane.f32.xlu0 %v3298
    %v3300 = vpop.xlane.xlu0 %3299
    %v3301 = vsel %vm3093, %v3034, 0.0
    %3302 = vadd.xlane.f32.xlu0 %v3301
    %v3303 = vpop.xlane.xlu0 %3302
    %v3304 = vsel %vm3093, %v3035, 0.0
    %3305 = vadd.xlane.f32.xlu0 %v3304
    %v3306 = vpop.xlane.xlu0 %3305
    %v3307 = vsel %vm3093, %v3036, 0.0
    %3308 = vadd.xlane.f32.xlu0 %v3307
    %v3309 = vpop.xlane.xlu0 %3308
    %v3310 = vsel %vm3093, %v3037, 0.0
    %3311 = vadd.xlane.f32.xlu0 %v3310
    %v3312 = vpop.xlane.xlu0 %3311
    %v3313 = vsel %vm3093, %v3038, 0.0
    %3314 = vadd.xlane.f32.xlu0 %v3313
    %v3315 = vpop.xlane.xlu0 %3314
    %v3316 = vsel %vm3093, %v3039, 0.0
    %3317 = vadd.xlane.f32.xlu0 %v3316
    %v3318 = vpop.xlane.xlu0 %3317
    %v3319 = vsel %vm3093, %v3040, 0.0
    %3320 = vadd.xlane.f32.xlu0 %v3319
    %v3321 = vpop.xlane.xlu0 %3320
    %v3322 = vsel %vm3093, %v3041, 0.0
    %3323 = vadd.xlane.f32.xlu0 %v3322
    %v3324 = vpop.xlane.xlu0 %3323
    %v3325 = vsel %vm3093, %v3042, 0.0
    %3326 = vadd.xlane.f32.xlu0 %v3325
    %v3327 = vpop.xlane.xlu0 %3326
    %v3328 = vsel %vm3093, %v3043, 0.0
    %3329 = vadd.xlane.f32.xlu0 %v3328
    %v3330 = vpop.xlane.xlu0 %3329
    %v3331 = vsel %vm3093, %v3044, 0.0
    %3332 = vadd.xlane.f32.xlu0 %v3331
    %v3333 = vpop.xlane.xlu0 %3332
    %v3334 = vsel %vm3093, %v3045, 0.0
    %3335 = vadd.xlane.f32.xlu0 %v3334
    %v3336 = vpop.xlane.xlu0 %3335
    %v3337 = vsel %vm3093, %v3046, 0.0
    %3338 = vadd.xlane.f32.xlu0 %v3337
    %v3339 = vpop.xlane.xlu0 %3338
    %v3340 = vsel %vm3093, %v3047, 0.0
    %3341 = vadd.xlane.f32.xlu0 %v3340
    %v3342 = vpop.xlane.xlu0 %3341
    %v3343 = vsel %vm3093, %v3048, 0.0
    %3344 = vadd.xlane.f32.xlu0 %v3343
    %v3345 = vpop.xlane.xlu0 %3344
    %v3346 = vsel %vm3093, %v3049, 0.0
    %3347 = vadd.xlane.f32.xlu0 %v3346
    %v3348 = vpop.xlane.xlu0 %3347
    %v3349 = vsel %vm3093, %v3050, 0.0
    %3350 = vadd.xlane.f32.xlu0 %v3349
    %v3351 = vpop.xlane.xlu0 %3350
    %v3352 = vsel %vm3093, %v3051, 0.0
    %3353 = vadd.xlane.f32.xlu0 %v3352
    %v3354 = vpop.xlane.xlu0 %3353
    %v3355 = vsel %vm3093, %v3052, 0.0
    %3356 = vadd.xlane.f32.xlu0 %v3355
    %v3357 = vpop.xlane.xlu0 %3356
    %v3358 = vsel %vm3093, %v3053, 0.0
    %3359 = vadd.xlane.f32.xlu0 %v3358
    %v3360 = vpop.xlane.xlu0 %3359
    %v3361 = vsel %vm3093, %v3054, 0.0
    %3362 = vadd.xlane.f32.xlu0 %v3361
    %v3363 = vpop.xlane.xlu0 %3362
    %v3364 = vsel %vm3093, %v3055, 0.0
    %3365 = vadd.xlane.f32.xlu0 %v3364
    %v3366 = vpop.xlane.xlu0 %3365
    %v3367 = vsel %vm3093, %v3056, 0.0
    %3368 = vadd.xlane.f32.xlu0 %v3367
    %v3369 = vpop.xlane.xlu0 %3368
    %v3370 = vsel %vm3093, %v3057, 0.0
    %3371 = vadd.xlane.f32.xlu0 %v3370
    %v3372 = vpop.xlane.xlu0 %3371
    %v3373 = vsel %vm3093, %v3058, 0.0
    %3374 = vadd.xlane.f32.xlu0 %v3373
    %v3375 = vpop.xlane.xlu0 %3374
    %v3376 = vsel %vm3093, %v3059, 0.0
    %3377 = vadd.xlane.f32.xlu0 %v3376
    %v3378 = vpop.xlane.xlu0 %3377
    %v3379 = vsel %vm3093, %v3060, 0.0
    %3380 = vadd.xlane.f32.xlu0 %v3379
    %v3381 = vpop.xlane.xlu0 %3380
    %v3382 = vsel %vm3093, %v3061, 0.0
    %3383 = vadd.xlane.f32.xlu0 %v3382
    %v3384 = vpop.xlane.xlu0 %3383
    %v3385 = vsel %vm3093, %v3062, 0.0
    %3386 = vadd.xlane.f32.xlu0 %v3385
    %v3387 = vpop.xlane.xlu0 %3386
    %v3388 = vsel %vm3093, %v3063, 0.0
    %3389 = vadd.xlane.f32.xlu0 %v3388
    %v3390 = vpop.xlane.xlu0 %3389
    %v3391 = vsel %vm3093, %v3064, 0.0
    %3392 = vadd.xlane.f32.xlu0 %v3391
    %v3393 = vpop.xlane.xlu0 %3392
    %v3394 = vsel %vm3093, %v3065, 0.0
    %3395 = vadd.xlane.f32.xlu0 %v3394
    %v3396 = vpop.xlane.xlu0 %3395
    %v3397 = vsel %vm3093, %v3066, 0.0
    %3398 = vadd.xlane.f32.xlu0 %v3397
    %v3399 = vpop.xlane.xlu0 %3398
    %v3400 = vsel %vm3093, %v3067, 0.0
    %3401 = vadd.xlane.f32.xlu0 %v3400
    %v3402 = vpop.xlane.xlu0 %3401
    %v3403 = vsel %vm3093, %v3068, 0.0
    %3404 = vadd.xlane.f32.xlu0 %v3403
    %v3405 = vpop.xlane.xlu0 %3404
    %v3406 = vsel %vm3093, %v3069, 0.0
    %3407 = vadd.xlane.f32.xlu0 %v3406
    %v3408 = vpop.xlane.xlu0 %3407
    %v3409 = vsel %vm3093, %v3070, 0.0
    %3410 = vadd.xlane.f32.xlu0 %v3409
    %v3411 = vpop.xlane.xlu0 %3410
    %v3412 = vsel %vm3093, %v3071, 0.0
    %3413 = vadd.xlane.f32.xlu0 %v3412
    %v3414 = vpop.xlane.xlu0 %3413
    %v3415 = vsel %vm3093, %v3072, 0.0
    %3416 = vadd.xlane.f32.xlu0 %v3415
    %v3417 = vpop.xlane.xlu0 %3416
    %v3418 = vsel %vm3093, %v3073, 0.0
    %3419 = vadd.xlane.f32.xlu0 %v3418
    %v3420 = vpop.xlane.xlu0 %3419
    %v3421 = vsel %vm3093, %v3074, 0.0
    %3422 = vadd.xlane.f32.xlu0 %v3421
    %v3423 = vpop.xlane.xlu0 %3422
    %v3424 = vsel %vm3093, %v3075, 0.0
    %3425 = vadd.xlane.f32.xlu0 %v3424
    %v3426 = vpop.xlane.xlu0 %3425
    %v3427 = vsel %vm3093, %v3076, 0.0
    %3428 = vadd.xlane.f32.xlu0 %v3427
    %v3429 = vpop.xlane.xlu0 %3428
    %v3430 = vsel %vm3093, %v3077, 0.0
    %3431 = vadd.xlane.f32.xlu0 %v3430
    %v3432 = vpop.xlane.xlu0 %3431
    %v3433 = vsel %vm3093, %v3078, 0.0
    %3434 = vadd.xlane.f32.xlu0 %v3433
    %v3435 = vpop.xlane.xlu0 %3434
    %v3436 = vsel %vm3093, %v3079, 0.0
    %3437 = vadd.xlane.f32.xlu0 %v3436
    %v3438 = vpop.xlane.xlu0 %3437
    %v3439 = vsel %vm3093, %v3080, 0.0
    %3440 = vadd.xlane.f32.xlu0 %v3439
    %v3441 = vpop.xlane.xlu0 %3440
    %v3442 = vsel %vm3093, %v3081, 0.0
    %3443 = vadd.xlane.f32.xlu0 %v3442
    %v3444 = vpop.xlane.xlu0 %3443
    %v3445 = vsel %vm3093, %v3082, 0.0
    %3446 = vadd.xlane.f32.xlu0 %v3445
    %v3447 = vpop.xlane.xlu0 %3446
    %v3448 = vsel %vm3093, %v3083, 0.0
    %3449 = vadd.xlane.f32.xlu0 %v3448
    %v3450 = vpop.xlane.xlu0 %3449
    %v3451 = vsel %vm3093, %v3084, 0.0
    %3452 = vadd.xlane.f32.xlu0 %v3451
    %v3453 = vpop.xlane.xlu0 %3452
    %v3454 = vsel %vm3093, %v3085, 0.0
    %3455 = vadd.xlane.f32.xlu0 %v3454
    %v3456 = vpop.xlane.xlu0 %3455
    %v3457 = vsel %vm3093, %v3086, 0.0
    %3458 = vadd.xlane.f32.xlu0 %v3457
    %v3459 = vpop.xlane.xlu0 %3458
    %v3460 = vsel %vm3093, %v3087, 0.0
    %3461 = vadd.xlane.f32.xlu0 %v3460
    %v3462 = vpop.xlane.xlu0 %3461
    %v3463 = vsel %vm3093, %v3088, 0.0
    %3464 = vadd.xlane.f32.xlu0 %v3463
    %v3465 = vpop.xlane.xlu0 %3464
    %v3466 = vsel %vm3093, %v3089, 0.0
    %3467 = vadd.xlane.f32.xlu0 %v3466
    %v3468 = vpop.xlane.xlu0 %3467
    %v3469 = vsel %vm3093, %v3090, 0.0
    %3470 = vadd.xlane.f32.xlu0 %v3469
    %v3471 = vpop.xlane.xlu0 %3470
    %v3472 = vsel %vm3093, %v3091, 0.0
    %3473 = vadd.xlane.f32.xlu0 %v3472
    %v3474 = vpop.xlane.xlu0 %3473
    %v3475 = vsel %vm3093, %v3092, 0.0
    %3476 = vadd.xlane.f32.xlu0 %v3475
    %v3477 = vpop.xlane.xlu0 %3476
    %3606 = vrot.lane.b32.xlu0 %v2965, 64
    %v3607 = vpop.permute.xlu0 %3606
    %3608 = vrot.lane.b32.xlu0 %v2966, 64
    %v3609 = vpop.permute.xlu0 %3608
    %3610 = vrot.lane.b32.xlu0 %v2967, 64
    %v3611 = vpop.permute.xlu0 %3610
    %3612 = vrot.lane.b32.xlu0 %v2968, 64
    %v3613 = vpop.permute.xlu0 %3612
    %3614 = vrot.lane.b32.xlu0 %v2969, 64
    %v3615 = vpop.permute.xlu0 %3614
    %3616 = vrot.lane.b32.xlu0 %v2970, 64
    %v3617 = vpop.permute.xlu0 %3616
    %3618 = vrot.lane.b32.xlu0 %v2971, 64
    %v3619 = vpop.permute.xlu0 %3618
    %3620 = vrot.lane.b32.xlu0 %v2972, 64
    %v3621 = vpop.permute.xlu0 %3620
    %3622 = vrot.lane.b32.xlu0 %v2973, 64
    %v3623 = vpop.permute.xlu0 %3622
    %3624 = vrot.lane.b32.xlu0 %v2974, 64
    %v3625 = vpop.permute.xlu0 %3624
    %3626 = vrot.lane.b32.xlu0 %v2975, 64
    %v3627 = vpop.permute.xlu0 %3626
    %3628 = vrot.lane.b32.xlu0 %v2976, 64
    %v3629 = vpop.permute.xlu0 %3628
    %3630 = vrot.lane.b32.xlu0 %v2977, 64
    %v3631 = vpop.permute.xlu0 %3630
    %3632 = vrot.lane.b32.xlu0 %v2978, 64
    %v3633 = vpop.permute.xlu0 %3632
    %3634 = vrot.lane.b32.xlu0 %v2979, 64
    %v3635 = vpop.permute.xlu0 %3634
    %3636 = vrot.lane.b32.xlu0 %v2980, 64
    %v3637 = vpop.permute.xlu0 %3636
    %3638 = vrot.lane.b32.xlu0 %v2981, 64
    %v3639 = vpop.permute.xlu0 %3638
    %3640 = vrot.lane.b32.xlu0 %v2982, 64
    %v3641 = vpop.permute.xlu0 %3640
    %3642 = vrot.lane.b32.xlu0 %v2983, 64
    %v3643 = vpop.permute.xlu0 %3642
    %3644 = vrot.lane.b32.xlu0 %v2984, 64
    %v3645 = vpop.permute.xlu0 %3644
    %3646 = vrot.lane.b32.xlu0 %v2985, 64
    %v3647 = vpop.permute.xlu0 %3646
    %3648 = vrot.lane.b32.xlu0 %v2986, 64
    %v3649 = vpop.permute.xlu0 %3648
    %3650 = vrot.lane.b32.xlu0 %v2987, 64
    %v3651 = vpop.permute.xlu0 %3650
    %3652 = vrot.lane.b32.xlu0 %v2988, 64
    %v3653 = vpop.permute.xlu0 %3652
    %3654 = vrot.lane.b32.xlu0 %v2989, 64
    %v3655 = vpop.permute.xlu0 %3654
    %3656 = vrot.lane.b32.xlu0 %v2990, 64
    %v3657 = vpop.permute.xlu0 %3656
    %3658 = vrot.lane.b32.xlu0 %v2991, 64
    %v3659 = vpop.permute.xlu0 %3658
    %3660 = vrot.lane.b32.xlu0 %v2992, 64
    %v3661 = vpop.permute.xlu0 %3660
    %3662 = vrot.lane.b32.xlu0 %v2993, 64
    %v3663 = vpop.permute.xlu0 %3662
    %3664 = vrot.lane.b32.xlu0 %v2994, 64
    %v3665 = vpop.permute.xlu0 %3664
    %3666 = vrot.lane.b32.xlu0 %v2995, 64
    %v3667 = vpop.permute.xlu0 %3666
    %3668 = vrot.lane.b32.xlu0 %v2996, 64
    %v3669 = vpop.permute.xlu0 %3668
    %3670 = vrot.lane.b32.xlu0 %v2997, 64
    %v3671 = vpop.permute.xlu0 %3670
    %3672 = vrot.lane.b32.xlu0 %v2998, 64
    %v3673 = vpop.permute.xlu0 %3672
    %3674 = vrot.lane.b32.xlu0 %v2999, 64
    %v3675 = vpop.permute.xlu0 %3674
    %3676 = vrot.lane.b32.xlu0 %v3000, 64
    %v3677 = vpop.permute.xlu0 %3676
    %3678 = vrot.lane.b32.xlu0 %v3001, 64
    %v3679 = vpop.permute.xlu0 %3678
    %3680 = vrot.lane.b32.xlu0 %v3002, 64
    %v3681 = vpop.permute.xlu0 %3680
    %3682 = vrot.lane.b32.xlu0 %v3003, 64
    %v3683 = vpop.permute.xlu0 %3682
    %3684 = vrot.lane.b32.xlu0 %v3004, 64
    %v3685 = vpop.permute.xlu0 %3684
    %3686 = vrot.lane.b32.xlu0 %v3005, 64
    %v3687 = vpop.permute.xlu0 %3686
    %3688 = vrot.lane.b32.xlu0 %v3006, 64
    %v3689 = vpop.permute.xlu0 %3688
    %3690 = vrot.lane.b32.xlu0 %v3007, 64
    %v3691 = vpop.permute.xlu0 %3690
    %3692 = vrot.lane.b32.xlu0 %v3008, 64
    %v3693 = vpop.permute.xlu0 %3692
    %3694 = vrot.lane.b32.xlu0 %v3009, 64
    %v3695 = vpop.permute.xlu0 %3694
    %3696 = vrot.lane.b32.xlu0 %v3010, 64
    %v3697 = vpop.permute.xlu0 %3696
    %3698 = vrot.lane.b32.xlu0 %v3011, 64
    %v3699 = vpop.permute.xlu0 %3698
    %3700 = vrot.lane.b32.xlu0 %v3012, 64
    %v3701 = vpop.permute.xlu0 %3700
    %3702 = vrot.lane.b32.xlu0 %v3013, 64
    %v3703 = vpop.permute.xlu0 %3702
    %3704 = vrot.lane.b32.xlu0 %v3014, 64
    %v3705 = vpop.permute.xlu0 %3704
    %3706 = vrot.lane.b32.xlu0 %v3015, 64
    %v3707 = vpop.permute.xlu0 %3706
    %3708 = vrot.lane.b32.xlu0 %v3016, 64
    %v3709 = vpop.permute.xlu0 %3708
    %3710 = vrot.lane.b32.xlu0 %v3017, 64
    %v3711 = vpop.permute.xlu0 %3710
    %3712 = vrot.lane.b32.xlu0 %v3018, 64
    %v3713 = vpop.permute.xlu0 %3712
    %3714 = vrot.lane.b32.xlu0 %v3019, 64
    %v3715 = vpop.permute.xlu0 %3714
    %3716 = vrot.lane.b32.xlu0 %v3020, 64
    %v3717 = vpop.permute.xlu0 %3716
    %3718 = vrot.lane.b32.xlu0 %v3021, 64
    %v3719 = vpop.permute.xlu0 %3718
    %3720 = vrot.lane.b32.xlu0 %v3022, 64
    %v3721 = vpop.permute.xlu0 %3720
    %3722 = vrot.lane.b32.xlu0 %v3023, 64
    %v3723 = vpop.permute.xlu0 %3722
    %3724 = vrot.lane.b32.xlu0 %v3024, 64
    %v3725 = vpop.permute.xlu0 %3724
    %3726 = vrot.lane.b32.xlu0 %v3025, 64
    %v3727 = vpop.permute.xlu0 %3726
    %3728 = vrot.lane.b32.xlu0 %v3026, 64
    %v3729 = vpop.permute.xlu0 %3728
    %3730 = vrot.lane.b32.xlu0 %v3027, 64
    %v3731 = vpop.permute.xlu0 %3730
    %3732 = vrot.lane.b32.xlu0 %v3028, 64
    %v3733 = vpop.permute.xlu0 %3732
    %3734 = vrot.lane.b32.xlu0 %v3029, 64
    %v3735 = vpop.permute.xlu0 %3734
    %3736 = vrot.lane.b32.xlu0 %v3030, 64
    %v3737 = vpop.permute.xlu0 %3736
    %3738 = vrot.lane.b32.xlu0 %v3031, 64
    %v3739 = vpop.permute.xlu0 %3738
    %3740 = vrot.lane.b32.xlu0 %v3032, 64
    %v3741 = vpop.permute.xlu0 %3740
    %3742 = vrot.lane.b32.xlu0 %v3033, 64
    %v3743 = vpop.permute.xlu0 %3742
    %3744 = vrot.lane.b32.xlu0 %v3034, 64
    %v3745 = vpop.permute.xlu0 %3744
    %3746 = vrot.lane.b32.xlu0 %v3035, 64
    %v3747 = vpop.permute.xlu0 %3746
    %3748 = vrot.lane.b32.xlu0 %v3036, 64
    %v3749 = vpop.permute.xlu0 %3748
    %3750 = vrot.lane.b32.xlu0 %v3037, 64
    %v3751 = vpop.permute.xlu0 %3750
    %3752 = vrot.lane.b32.xlu0 %v3038, 64
    %v3753 = vpop.permute.xlu0 %3752
    %3754 = vrot.lane.b32.xlu0 %v3039, 64
    %v3755 = vpop.permute.xlu0 %3754
    %3756 = vrot.lane.b32.xlu0 %v3040, 64
    %v3757 = vpop.permute.xlu0 %3756
    %3758 = vrot.lane.b32.xlu0 %v3041, 64
    %v3759 = vpop.permute.xlu0 %3758
    %3760 = vrot.lane.b32.xlu0 %v3042, 64
    %v3761 = vpop.permute.xlu0 %3760
    %3762 = vrot.lane.b32.xlu0 %v3043, 64
    %v3763 = vpop.permute.xlu0 %3762
    %3764 = vrot.lane.b32.xlu0 %v3044, 64
    %v3765 = vpop.permute.xlu0 %3764
    %3766 = vrot.lane.b32.xlu0 %v3045, 64
    %v3767 = vpop.permute.xlu0 %3766
    %3768 = vrot.lane.b32.xlu0 %v3046, 64
    %v3769 = vpop.permute.xlu0 %3768
    %3770 = vrot.lane.b32.xlu0 %v3047, 64
    %v3771 = vpop.permute.xlu0 %3770
    %3772 = vrot.lane.b32.xlu0 %v3048, 64
    %v3773 = vpop.permute.xlu0 %3772
    %3774 = vrot.lane.b32.xlu0 %v3049, 64
    %v3775 = vpop.permute.xlu0 %3774
    %3776 = vrot.lane.b32.xlu0 %v3050, 64
    %v3777 = vpop.permute.xlu0 %3776
    %3778 = vrot.lane.b32.xlu0 %v3051, 64
    %v3779 = vpop.permute.xlu0 %3778
    %3780 = vrot.lane.b32.xlu0 %v3052, 64
    %v3781 = vpop.permute.xlu0 %3780
    %3782 = vrot.lane.b32.xlu0 %v3053, 64
    %v3783 = vpop.permute.xlu0 %3782
    %3784 = vrot.lane.b32.xlu0 %v3054, 64
    %v3785 = vpop.permute.xlu0 %3784
    %3786 = vrot.lane.b32.xlu0 %v3055, 64
    %v3787 = vpop.permute.xlu0 %3786
    %3788 = vrot.lane.b32.xlu0 %v3056, 64
    %v3789 = vpop.permute.xlu0 %3788
    %3790 = vrot.lane.b32.xlu0 %v3057, 64
    %v3791 = vpop.permute.xlu0 %3790
    %3792 = vrot.lane.b32.xlu0 %v3058, 64
    %v3793 = vpop.permute.xlu0 %3792
    %3794 = vrot.lane.b32.xlu0 %v3059, 64
    %v3795 = vpop.permute.xlu0 %3794
    %3796 = vrot.lane.b32.xlu0 %v3060, 64
    %v3797 = vpop.permute.xlu0 %3796
    %3798 = vrot.lane.b32.xlu0 %v3061, 64
    %v3799 = vpop.permute.xlu0 %3798
    %3800 = vrot.lane.b32.xlu0 %v3062, 64
    %v3801 = vpop.permute.xlu0 %3800
    %3802 = vrot.lane.b32.xlu0 %v3063, 64
    %v3803 = vpop.permute.xlu0 %3802
    %3804 = vrot.lane.b32.xlu0 %v3064, 64
    %v3805 = vpop.permute.xlu0 %3804
    %3806 = vrot.lane.b32.xlu0 %v3065, 64
    %v3807 = vpop.permute.xlu0 %3806
    %3808 = vrot.lane.b32.xlu0 %v3066, 64
    %v3809 = vpop.permute.xlu0 %3808
    %3810 = vrot.lane.b32.xlu0 %v3067, 64
    %v3811 = vpop.permute.xlu0 %3810
    %3812 = vrot.lane.b32.xlu0 %v3068, 64
    %v3813 = vpop.permute.xlu0 %3812
    %3814 = vrot.lane.b32.xlu0 %v3069, 64
    %v3815 = vpop.permute.xlu0 %3814
    %3816 = vrot.lane.b32.xlu0 %v3070, 64
    %v3817 = vpop.permute.xlu0 %3816
    %3818 = vrot.lane.b32.xlu0 %v3071, 64
    %v3819 = vpop.permute.xlu0 %3818
    %3820 = vrot.lane.b32.xlu0 %v3072, 64
    %v3821 = vpop.permute.xlu0 %3820
    %3822 = vrot.lane.b32.xlu0 %v3073, 64
    %v3823 = vpop.permute.xlu0 %3822
    %3824 = vrot.lane.b32.xlu0 %v3074, 64
    %v3825 = vpop.permute.xlu0 %3824
    %3826 = vrot.lane.b32.xlu0 %v3075, 64
    %v3827 = vpop.permute.xlu0 %3826
    %3828 = vrot.lane.b32.xlu0 %v3076, 64
    %v3829 = vpop.permute.xlu0 %3828
    %3830 = vrot.lane.b32.xlu0 %v3077, 64
    %v3831 = vpop.permute.xlu0 %3830
    %3832 = vrot.lane.b32.xlu0 %v3078, 64
    %v3833 = vpop.permute.xlu0 %3832
    %3834 = vrot.lane.b32.xlu0 %v3079, 64
    %v3835 = vpop.permute.xlu0 %3834
    %3836 = vrot.lane.b32.xlu0 %v3080, 64
    %v3837 = vpop.permute.xlu0 %3836
    %3838 = vrot.lane.b32.xlu0 %v3081, 64
    %v3839 = vpop.permute.xlu0 %3838
    %3840 = vrot.lane.b32.xlu0 %v3082, 64
    %v3841 = vpop.permute.xlu0 %3840
    %3842 = vrot.lane.b32.xlu0 %v3083, 64
    %v3843 = vpop.permute.xlu0 %3842
    %3844 = vrot.lane.b32.xlu0 %v3084, 64
    %v3845 = vpop.permute.xlu0 %3844
    %3846 = vrot.lane.b32.xlu0 %v3085, 64
    %v3847 = vpop.permute.xlu0 %3846
    %3848 = vrot.lane.b32.xlu0 %v3086, 64
    %v3849 = vpop.permute.xlu0 %3848
    %3850 = vrot.lane.b32.xlu0 %v3087, 64
    %v3851 = vpop.permute.xlu0 %3850
    %3852 = vrot.lane.b32.xlu0 %v3088, 64
    %v3853 = vpop.permute.xlu0 %3852
    %3854 = vrot.lane.b32.xlu0 %v3089, 64
    %v3855 = vpop.permute.xlu0 %3854
    %3856 = vrot.lane.b32.xlu0 %v3090, 64
    %v3857 = vpop.permute.xlu0 %3856
    %3858 = vrot.lane.b32.xlu0 %v3091, 64
    %v3859 = vpop.permute.xlu0 %3858
    %3860 = vrot.lane.b32.xlu0 %v3092, 64
    %v3861 = vpop.permute.xlu0 %3860
    %v3990 = vsel %vm3093, %v3607, 0.0
    %3991 = vadd.xlane.f32.xlu0 %v3990
    %v3992 = vpop.xlane.xlu0 %3991
    %v3993 = vsel %vm3093, %v3609, 0.0
    %3994 = vadd.xlane.f32.xlu0 %v3993
    %v3995 = vpop.xlane.xlu0 %3994
    %v3996 = vsel %vm3093, %v3611, 0.0
    %3997 = vadd.xlane.f32.xlu0 %v3996
    %v3998 = vpop.xlane.xlu0 %3997
    %v3999 = vsel %vm3093, %v3613, 0.0
    %4000 = vadd.xlane.f32.xlu0 %v3999
    %v4001 = vpop.xlane.xlu0 %4000
    %v4002 = vsel %vm3093, %v3615, 0.0
    %4003 = vadd.xlane.f32.xlu0 %v4002
    %v4004 = vpop.xlane.xlu0 %4003
    %v4005 = vsel %vm3093, %v3617, 0.0
    %4006 = vadd.xlane.f32.xlu0 %v4005
    %v4007 = vpop.xlane.xlu0 %4006
    %v4008 = vsel %vm3093, %v3619, 0.0
    %4009 = vadd.xlane.f32.xlu0 %v4008
    %v4010 = vpop.xlane.xlu0 %4009
    %v4011 = vsel %vm3093, %v3621, 0.0
    %4012 = vadd.xlane.f32.xlu0 %v4011
    %v4013 = vpop.xlane.xlu0 %4012
    %v4014 = vsel %vm3093, %v3623, 0.0
    %4015 = vadd.xlane.f32.xlu0 %v4014
    %v4016 = vpop.xlane.xlu0 %4015
    %v4017 = vsel %vm3093, %v3625, 0.0
    %4018 = vadd.xlane.f32.xlu0 %v4017
    %v4019 = vpop.xlane.xlu0 %4018
    %v4020 = vsel %vm3093, %v3627, 0.0
    %4021 = vadd.xlane.f32.xlu0 %v4020
    %v4022 = vpop.xlane.xlu0 %4021
    %v4023 = vsel %vm3093, %v3629, 0.0
    %4024 = vadd.xlane.f32.xlu0 %v4023
    %v4025 = vpop.xlane.xlu0 %4024
    %v4026 = vsel %vm3093, %v3631, 0.0
    %4027 = vadd.xlane.f32.xlu0 %v4026
    %v4028 = vpop.xlane.xlu0 %4027
    %v4029 = vsel %vm3093, %v3633, 0.0
    %4030 = vadd.xlane.f32.xlu0 %v4029
    %v4031 = vpop.xlane.xlu0 %4030
    %v4032 = vsel %vm3093, %v3635, 0.0
    %4033 = vadd.xlane.f32.xlu0 %v4032
    %v4034 = vpop.xlane.xlu0 %4033
    %v4035 = vsel %vm3093, %v3637, 0.0
    %4036 = vadd.xlane.f32.xlu0 %v4035
    %v4037 = vpop.xlane.xlu0 %4036
    %v4038 = vsel %vm3093, %v3639, 0.0
    %4039 = vadd.xlane.f32.xlu0 %v4038
    %v4040 = vpop.xlane.xlu0 %4039
    %v4041 = vsel %vm3093, %v3641, 0.0
    %4042 = vadd.xlane.f32.xlu0 %v4041
    %v4043 = vpop.xlane.xlu0 %4042
    %v4044 = vsel %vm3093, %v3643, 0.0
    %4045 = vadd.xlane.f32.xlu0 %v4044
    %v4046 = vpop.xlane.xlu0 %4045
    %v4047 = vsel %vm3093, %v3645, 0.0
    %4048 = vadd.xlane.f32.xlu0 %v4047
    %v4049 = vpop.xlane.xlu0 %4048
    %v4050 = vsel %vm3093, %v3647, 0.0
    %4051 = vadd.xlane.f32.xlu0 %v4050
    %v4052 = vpop.xlane.xlu0 %4051
    %v4053 = vsel %vm3093, %v3649, 0.0
    %4054 = vadd.xlane.f32.xlu0 %v4053
    %v4055 = vpop.xlane.xlu0 %4054
    %v4056 = vsel %vm3093, %v3651, 0.0
    %4057 = vadd.xlane.f32.xlu0 %v4056
    %v4058 = vpop.xlane.xlu0 %4057
    %v4059 = vsel %vm3093, %v3653, 0.0
    %4060 = vadd.xlane.f32.xlu0 %v4059
    %v4061 = vpop.xlane.xlu0 %4060
    %v4062 = vsel %vm3093, %v3655, 0.0
    %4063 = vadd.xlane.f32.xlu0 %v4062
    %v4064 = vpop.xlane.xlu0 %4063
    %v4065 = vsel %vm3093, %v3657, 0.0
    %4066 = vadd.xlane.f32.xlu0 %v4065
    %v4067 = vpop.xlane.xlu0 %4066
    %v4068 = vsel %vm3093, %v3659, 0.0
    %4069 = vadd.xlane.f32.xlu0 %v4068
    %v4070 = vpop.xlane.xlu0 %4069
    %v4071 = vsel %vm3093, %v3661, 0.0
    %4072 = vadd.xlane.f32.xlu0 %v4071
    %v4073 = vpop.xlane.xlu0 %4072
    %v4074 = vsel %vm3093, %v3663, 0.0
    %4075 = vadd.xlane.f32.xlu0 %v4074
    %v4076 = vpop.xlane.xlu0 %4075
    %v4077 = vsel %vm3093, %v3665, 0.0
    %4078 = vadd.xlane.f32.xlu0 %v4077
    %v4079 = vpop.xlane.xlu0 %4078
    %v4080 = vsel %vm3093, %v3667, 0.0
    %4081 = vadd.xlane.f32.xlu0 %v4080
    %v4082 = vpop.xlane.xlu0 %4081
    %v4083 = vsel %vm3093, %v3669, 0.0
    %4084 = vadd.xlane.f32.xlu0 %v4083
    %v4085 = vpop.xlane.xlu0 %4084
    %v4086 = vsel %vm3093, %v3671, 0.0
    %4087 = vadd.xlane.f32.xlu0 %v4086
    %v4088 = vpop.xlane.xlu0 %4087
    %v4089 = vsel %vm3093, %v3673, 0.0
    %4090 = vadd.xlane.f32.xlu0 %v4089
    %v4091 = vpop.xlane.xlu0 %4090
    %v4092 = vsel %vm3093, %v3675, 0.0
    %4093 = vadd.xlane.f32.xlu0 %v4092
    %v4094 = vpop.xlane.xlu0 %4093
    %v4095 = vsel %vm3093, %v3677, 0.0
    %4096 = vadd.xlane.f32.xlu0 %v4095
    %v4097 = vpop.xlane.xlu0 %4096
    %v4098 = vsel %vm3093, %v3679, 0.0
    %4099 = vadd.xlane.f32.xlu0 %v4098
    %v4100 = vpop.xlane.xlu0 %4099
    %v4101 = vsel %vm3093, %v3681, 0.0
    %4102 = vadd.xlane.f32.xlu0 %v4101
    %v4103 = vpop.xlane.xlu0 %4102
    %v4104 = vsel %vm3093, %v3683, 0.0
    %4105 = vadd.xlane.f32.xlu0 %v4104
    %v4106 = vpop.xlane.xlu0 %4105
    %v4107 = vsel %vm3093, %v3685, 0.0
    %4108 = vadd.xlane.f32.xlu0 %v4107
    %v4109 = vpop.xlane.xlu0 %4108
    %v4110 = vsel %vm3093, %v3687, 0.0
    %4111 = vadd.xlane.f32.xlu0 %v4110
    %v4112 = vpop.xlane.xlu0 %4111
    %v4113 = vsel %vm3093, %v3689, 0.0
    %4114 = vadd.xlane.f32.xlu0 %v4113
    %v4115 = vpop.xlane.xlu0 %4114
    %v4116 = vsel %vm3093, %v3691, 0.0
    %4117 = vadd.xlane.f32.xlu0 %v4116
    %v4118 = vpop.xlane.xlu0 %4117
    %v4119 = vsel %vm3093, %v3693, 0.0
    %4120 = vadd.xlane.f32.xlu0 %v4119
    %v4121 = vpop.xlane.xlu0 %4120
    %v4122 = vsel %vm3093, %v3695, 0.0
    %4123 = vadd.xlane.f32.xlu0 %v4122
    %v4124 = vpop.xlane.xlu0 %4123
    %v4125 = vsel %vm3093, %v3697, 0.0
    %4126 = vadd.xlane.f32.xlu0 %v4125
    %v4127 = vpop.xlane.xlu0 %4126
    %v4128 = vsel %vm3093, %v3699, 0.0
    %4129 = vadd.xlane.f32.xlu0 %v4128
    %v4130 = vpop.xlane.xlu0 %4129
    %v4131 = vsel %vm3093, %v3701, 0.0
    %4132 = vadd.xlane.f32.xlu0 %v4131
    %v4133 = vpop.xlane.xlu0 %4132
    %v4134 = vsel %vm3093, %v3703, 0.0
    %4135 = vadd.xlane.f32.xlu0 %v4134
    %v4136 = vpop.xlane.xlu0 %4135
    %v4137 = vsel %vm3093, %v3705, 0.0
    %4138 = vadd.xlane.f32.xlu0 %v4137
    %v4139 = vpop.xlane.xlu0 %4138
    %v4140 = vsel %vm3093, %v3707, 0.0
    %4141 = vadd.xlane.f32.xlu0 %v4140
    %v4142 = vpop.xlane.xlu0 %4141
    %v4143 = vsel %vm3093, %v3709, 0.0
    %4144 = vadd.xlane.f32.xlu0 %v4143
    %v4145 = vpop.xlane.xlu0 %4144
    %v4146 = vsel %vm3093, %v3711, 0.0
    %4147 = vadd.xlane.f32.xlu0 %v4146
    %v4148 = vpop.xlane.xlu0 %4147
    %v4149 = vsel %vm3093, %v3713, 0.0
    %4150 = vadd.xlane.f32.xlu0 %v4149
    %v4151 = vpop.xlane.xlu0 %4150
    %v4152 = vsel %vm3093, %v3715, 0.0
    %4153 = vadd.xlane.f32.xlu0 %v4152
    %v4154 = vpop.xlane.xlu0 %4153
    %v4155 = vsel %vm3093, %v3717, 0.0
    %4156 = vadd.xlane.f32.xlu0 %v4155
    %v4157 = vpop.xlane.xlu0 %4156
    %v4158 = vsel %vm3093, %v3719, 0.0
    %4159 = vadd.xlane.f32.xlu0 %v4158
    %v4160 = vpop.xlane.xlu0 %4159
    %v4161 = vsel %vm3093, %v3721, 0.0
    %4162 = vadd.xlane.f32.xlu0 %v4161
    %v4163 = vpop.xlane.xlu0 %4162
    %v4164 = vsel %vm3093, %v3723, 0.0
    %4165 = vadd.xlane.f32.xlu0 %v4164
    %v4166 = vpop.xlane.xlu0 %4165
    %v4167 = vsel %vm3093, %v3725, 0.0
    %4168 = vadd.xlane.f32.xlu0 %v4167
    %v4169 = vpop.xlane.xlu0 %4168
    %v4170 = vsel %vm3093, %v3727, 0.0
    %4171 = vadd.xlane.f32.xlu0 %v4170
    %v4172 = vpop.xlane.xlu0 %4171
    %v4173 = vsel %vm3093, %v3729, 0.0
    %4174 = vadd.xlane.f32.xlu0 %v4173
    %v4175 = vpop.xlane.xlu0 %4174
    %v4176 = vsel %vm3093, %v3731, 0.0
    %4177 = vadd.xlane.f32.xlu0 %v4176
    %v4178 = vpop.xlane.xlu0 %4177
    %v4179 = vsel %vm3093, %v3733, 0.0
    %4180 = vadd.xlane.f32.xlu0 %v4179
    %v4181 = vpop.xlane.xlu0 %4180
    %v4182 = vsel %vm3093, %v3735, 0.0
    %4183 = vadd.xlane.f32.xlu0 %v4182
    %v4184 = vpop.xlane.xlu0 %4183
    %v4185 = vsel %vm3093, %v3737, 0.0
    %4186 = vadd.xlane.f32.xlu0 %v4185
    %v4187 = vpop.xlane.xlu0 %4186
    %v4188 = vsel %vm3093, %v3739, 0.0
    %4189 = vadd.xlane.f32.xlu0 %v4188
    %v4190 = vpop.xlane.xlu0 %4189
    %v4191 = vsel %vm3093, %v3741, 0.0
    %4192 = vadd.xlane.f32.xlu0 %v4191
    %v4193 = vpop.xlane.xlu0 %4192
    %v4194 = vsel %vm3093, %v3743, 0.0
    %4195 = vadd.xlane.f32.xlu0 %v4194
    %v4196 = vpop.xlane.xlu0 %4195
    %v4197 = vsel %vm3093, %v3745, 0.0
    %4198 = vadd.xlane.f32.xlu0 %v4197
    %v4199 = vpop.xlane.xlu0 %4198
    %v4200 = vsel %vm3093, %v3747, 0.0
    %4201 = vadd.xlane.f32.xlu0 %v4200
    %v4202 = vpop.xlane.xlu0 %4201
    %v4203 = vsel %vm3093, %v3749, 0.0
    %4204 = vadd.xlane.f32.xlu0 %v4203
    %v4205 = vpop.xlane.xlu0 %4204
    %v4206 = vsel %vm3093, %v3751, 0.0
    %4207 = vadd.xlane.f32.xlu0 %v4206
    %v4208 = vpop.xlane.xlu0 %4207
    %v4209 = vsel %vm3093, %v3753, 0.0
    %4210 = vadd.xlane.f32.xlu0 %v4209
    %v4211 = vpop.xlane.xlu0 %4210
    %v4212 = vsel %vm3093, %v3755, 0.0
    %4213 = vadd.xlane.f32.xlu0 %v4212
    %v4214 = vpop.xlane.xlu0 %4213
    %v4215 = vsel %vm3093, %v3757, 0.0
    %4216 = vadd.xlane.f32.xlu0 %v4215
    %v4217 = vpop.xlane.xlu0 %4216
    %v4218 = vsel %vm3093, %v3759, 0.0
    %4219 = vadd.xlane.f32.xlu0 %v4218
    %v4220 = vpop.xlane.xlu0 %4219
    %v4221 = vsel %vm3093, %v3761, 0.0
    %4222 = vadd.xlane.f32.xlu0 %v4221
    %v4223 = vpop.xlane.xlu0 %4222
    %v4224 = vsel %vm3093, %v3763, 0.0
    %4225 = vadd.xlane.f32.xlu0 %v4224
    %v4226 = vpop.xlane.xlu0 %4225
    %v4227 = vsel %vm3093, %v3765, 0.0
    %4228 = vadd.xlane.f32.xlu0 %v4227
    %v4229 = vpop.xlane.xlu0 %4228
    %v4230 = vsel %vm3093, %v3767, 0.0
    %4231 = vadd.xlane.f32.xlu0 %v4230
    %v4232 = vpop.xlane.xlu0 %4231
    %v4233 = vsel %vm3093, %v3769, 0.0
    %4234 = vadd.xlane.f32.xlu0 %v4233
    %v4235 = vpop.xlane.xlu0 %4234
    %v4236 = vsel %vm3093, %v3771, 0.0
    %4237 = vadd.xlane.f32.xlu0 %v4236
    %v4238 = vpop.xlane.xlu0 %4237
    %v4239 = vsel %vm3093, %v3773, 0.0
    %4240 = vadd.xlane.f32.xlu0 %v4239
    %v4241 = vpop.xlane.xlu0 %4240
    %v4242 = vsel %vm3093, %v3775, 0.0
    %4243 = vadd.xlane.f32.xlu0 %v4242
    %v4244 = vpop.xlane.xlu0 %4243
    %v4245 = vsel %vm3093, %v3777, 0.0
    %4246 = vadd.xlane.f32.xlu0 %v4245
    %v4247 = vpop.xlane.xlu0 %4246
    %v4248 = vsel %vm3093, %v3779, 0.0
    %4249 = vadd.xlane.f32.xlu0 %v4248
    %v4250 = vpop.xlane.xlu0 %4249
    %v4251 = vsel %vm3093, %v3781, 0.0
    %4252 = vadd.xlane.f32.xlu0 %v4251
    %v4253 = vpop.xlane.xlu0 %4252
    %v4254 = vsel %vm3093, %v3783, 0.0
    %4255 = vadd.xlane.f32.xlu0 %v4254
    %v4256 = vpop.xlane.xlu0 %4255
    %v4257 = vsel %vm3093, %v3785, 0.0
    %4258 = vadd.xlane.f32.xlu0 %v4257
    %v4259 = vpop.xlane.xlu0 %4258
    %v4260 = vsel %vm3093, %v3787, 0.0
    %4261 = vadd.xlane.f32.xlu0 %v4260
    %v4262 = vpop.xlane.xlu0 %4261
    %v4263 = vsel %vm3093, %v3789, 0.0
    %4264 = vadd.xlane.f32.xlu0 %v4263
    %v4265 = vpop.xlane.xlu0 %4264
    %v4266 = vsel %vm3093, %v3791, 0.0
    %4267 = vadd.xlane.f32.xlu0 %v4266
    %v4268 = vpop.xlane.xlu0 %4267
    %v4269 = vsel %vm3093, %v3793, 0.0
    %4270 = vadd.xlane.f32.xlu0 %v4269
    %v4271 = vpop.xlane.xlu0 %4270
    %v4272 = vsel %vm3093, %v3795, 0.0
    %4273 = vadd.xlane.f32.xlu0 %v4272
    %v4274 = vpop.xlane.xlu0 %4273
    %v4275 = vsel %vm3093, %v3797, 0.0
    %4276 = vadd.xlane.f32.xlu0 %v4275
    %v4277 = vpop.xlane.xlu0 %4276
    %v4278 = vsel %vm3093, %v3799, 0.0
    %4279 = vadd.xlane.f32.xlu0 %v4278
    %v4280 = vpop.xlane.xlu0 %4279
    %v4281 = vsel %vm3093, %v3801, 0.0
    %4282 = vadd.xlane.f32.xlu0 %v4281
    %v4283 = vpop.xlane.xlu0 %4282
    %v4284 = vsel %vm3093, %v3803, 0.0
    %4285 = vadd.xlane.f32.xlu0 %v4284
    %v4286 = vpop.xlane.xlu0 %4285
    %v4287 = vsel %vm3093, %v3805, 0.0
    %4288 = vadd.xlane.f32.xlu0 %v4287
    %v4289 = vpop.xlane.xlu0 %4288
    %v4290 = vsel %vm3093, %v3807, 0.0
    %4291 = vadd.xlane.f32.xlu0 %v4290
    %v4292 = vpop.xlane.xlu0 %4291
    %v4293 = vsel %vm3093, %v3809, 0.0
    %4294 = vadd.xlane.f32.xlu0 %v4293
    %v4295 = vpop.xlane.xlu0 %4294
    %v4296 = vsel %vm3093, %v3811, 0.0
    %4297 = vadd.xlane.f32.xlu0 %v4296
    %v4298 = vpop.xlane.xlu0 %4297
    %v4299 = vsel %vm3093, %v3813, 0.0
    %4300 = vadd.xlane.f32.xlu0 %v4299
    %v4301 = vpop.xlane.xlu0 %4300
    %v4302 = vsel %vm3093, %v3815, 0.0
    %4303 = vadd.xlane.f32.xlu0 %v4302
    %v4304 = vpop.xlane.xlu0 %4303
    %v4305 = vsel %vm3093, %v3817, 0.0
    %4306 = vadd.xlane.f32.xlu0 %v4305
    %v4307 = vpop.xlane.xlu0 %4306
    %v4308 = vsel %vm3093, %v3819, 0.0
    %4309 = vadd.xlane.f32.xlu0 %v4308
    %v4310 = vpop.xlane.xlu0 %4309
    %v4311 = vsel %vm3093, %v3821, 0.0
    %4312 = vadd.xlane.f32.xlu0 %v4311
    %v4313 = vpop.xlane.xlu0 %4312
    %v4314 = vsel %vm3093, %v3823, 0.0
    %4315 = vadd.xlane.f32.xlu0 %v4314
    %v4316 = vpop.xlane.xlu0 %4315
    %v4317 = vsel %vm3093, %v3825, 0.0
    %4318 = vadd.xlane.f32.xlu0 %v4317
    %v4319 = vpop.xlane.xlu0 %4318
    %v4320 = vsel %vm3093, %v3827, 0.0
    %4321 = vadd.xlane.f32.xlu0 %v4320
    %v4322 = vpop.xlane.xlu0 %4321
    %v4323 = vsel %vm3093, %v3829, 0.0
    %4324 = vadd.xlane.f32.xlu0 %v4323
    %v4325 = vpop.xlane.xlu0 %4324
    %v4326 = vsel %vm3093, %v3831, 0.0
    %4327 = vadd.xlane.f32.xlu0 %v4326
    %v4328 = vpop.xlane.xlu0 %4327
    %v4329 = vsel %vm3093, %v3833, 0.0
    %4330 = vadd.xlane.f32.xlu0 %v4329
    %v4331 = vpop.xlane.xlu0 %4330
    %v4332 = vsel %vm3093, %v3835, 0.0
    %4333 = vadd.xlane.f32.xlu0 %v4332
    %v4334 = vpop.xlane.xlu0 %4333
    %v4335 = vsel %vm3093, %v3837, 0.0
    %4336 = vadd.xlane.f32.xlu0 %v4335
    %v4337 = vpop.xlane.xlu0 %4336
    %v4338 = vsel %vm3093, %v3839, 0.0
    %4339 = vadd.xlane.f32.xlu0 %v4338
    %v4340 = vpop.xlane.xlu0 %4339
    %v4341 = vsel %vm3093, %v3841, 0.0
    %4342 = vadd.xlane.f32.xlu0 %v4341
    %v4343 = vpop.xlane.xlu0 %4342
    %v4344 = vsel %vm3093, %v3843, 0.0
    %4345 = vadd.xlane.f32.xlu0 %v4344
    %v4346 = vpop.xlane.xlu0 %4345
    %v4347 = vsel %vm3093, %v3845, 0.0
    %4348 = vadd.xlane.f32.xlu0 %v4347
    %v4349 = vpop.xlane.xlu0 %4348
    %v4350 = vsel %vm3093, %v3847, 0.0
    %4351 = vadd.xlane.f32.xlu0 %v4350
    %v4352 = vpop.xlane.xlu0 %4351
    %v4353 = vsel %vm3093, %v3849, 0.0
    %4354 = vadd.xlane.f32.xlu0 %v4353
    %v4355 = vpop.xlane.xlu0 %4354
    %v4356 = vsel %vm3093, %v3851, 0.0
    %4357 = vadd.xlane.f32.xlu0 %v4356
    %v4358 = vpop.xlane.xlu0 %4357
    %v4359 = vsel %vm3093, %v3853, 0.0
    %4360 = vadd.xlane.f32.xlu0 %v4359
    %v4361 = vpop.xlane.xlu0 %4360
    %v4362 = vsel %vm3093, %v3855, 0.0
    %4363 = vadd.xlane.f32.xlu0 %v4362
    %v4364 = vpop.xlane.xlu0 %4363
    %v4365 = vsel %vm3093, %v3857, 0.0
    %4366 = vadd.xlane.f32.xlu0 %v4365
    %v4367 = vpop.xlane.xlu0 %4366
    %v4368 = vsel %vm3093, %v3859, 0.0
    %4369 = vadd.xlane.f32.xlu0 %v4368
    %v4370 = vpop.xlane.xlu0 %4369
    %v4371 = vsel %vm3093, %v3861, 0.0
    %4372 = vadd.xlane.f32.xlu0 %v4371
    %v4373 = vpop.xlane.xlu0 %4372
    %v4374 = vlaneseq
    %v4375 = vshrl.u32 %v4374, 7
    %v4376 = vsub.s32 0, %v4375
    %v4377 = vrot.slane %v151, %v4376
    %4380 = vbcast.lane.b32.xlu0 %v4377, 256
    %v4381 = vpop.permute.xlu0 %4380
    %s4383 = sor.u32 256, 8
    %4384 = vbcast.lane.b32.xlu0 %v4377, %s4383
    %v4385 = vpop.permute.xlu0 %4384
    %s4387 = sor.u32 256, 16
    %4388 = vbcast.lane.b32.xlu0 %v4377, %s4387
    %v4389 = vpop.permute.xlu0 %4388
    %s4391 = sor.u32 256, 24
    %4392 = vbcast.lane.b32.xlu0 %v4377, %s4391
    %v4393 = vpop.permute.xlu0 %4392
    %s4395 = sor.u32 256, 32
    %4396 = vbcast.lane.b32.xlu0 %v4377, %s4395
    %v4397 = vpop.permute.xlu0 %4396
    %s4399 = sor.u32 256, 40
    %4400 = vbcast.lane.b32.xlu0 %v4377, %s4399
    %v4401 = vpop.permute.xlu0 %4400
    %s4403 = sor.u32 256, 48
    %4404 = vbcast.lane.b32.xlu0 %v4377, %s4403
    %v4405 = vpop.permute.xlu0 %4404
    %s4407 = sor.u32 256, 56
    %4408 = vbcast.lane.b32.xlu0 %v4377, %s4407
    %v4409 = vpop.permute.xlu0 %4408
    %s4411 = sor.u32 256, 64
    %4412 = vbcast.lane.b32.xlu0 %v4377, %s4411
    %v4413 = vpop.permute.xlu0 %4412
    %s4415 = sor.u32 256, 72
    %4416 = vbcast.lane.b32.xlu0 %v4377, %s4415
    %v4417 = vpop.permute.xlu0 %4416
    %s4419 = sor.u32 256, 80
    %4420 = vbcast.lane.b32.xlu0 %v4377, %s4419
    %v4421 = vpop.permute.xlu0 %4420
    %s4423 = sor.u32 256, 88
    %4424 = vbcast.lane.b32.xlu0 %v4377, %s4423
    %v4425 = vpop.permute.xlu0 %4424
    %s4427 = sor.u32 256, 96
    %4428 = vbcast.lane.b32.xlu0 %v4377, %s4427
    %v4429 = vpop.permute.xlu0 %4428
    %s4431 = sor.u32 256, 104
    %4432 = vbcast.lane.b32.xlu0 %v4377, %s4431
    %v4433 = vpop.permute.xlu0 %4432
    %s4435 = sor.u32 256, 112
    %4436 = vbcast.lane.b32.xlu0 %v4377, %s4435
    %v4437 = vpop.permute.xlu0 %4436
    %s4439 = sor.u32 256, 120
    %4440 = vbcast.lane.b32.xlu0 %v4377, %s4439
    %v4441 = vpop.permute.xlu0 %4440
    %v4458 = vadd.f32 %v3096, %v4381
    %v4459 = vadd.f32 %v3099, %v4385
    %v4460 = vadd.f32 %v3102, %v4389
    %v4461 = vadd.f32 %v3105, %v4393
    %v4462 = vadd.f32 %v3108, %v4397
    %v4463 = vadd.f32 %v3111, %v4401
    %v4464 = vadd.f32 %v3114, %v4405
    %v4465 = vadd.f32 %v3117, %v4409
    %v4466 = vadd.f32 %v3120, %v4413
    %v4467 = vadd.f32 %v3123, %v4417
    %v4468 = vadd.f32 %v3126, %v4421
    %v4469 = vadd.f32 %v3129, %v4425
    %v4470 = vadd.f32 %v3132, %v4429
    %v4471 = vadd.f32 %v3135, %v4433
    %v4472 = vadd.f32 %v3138, %v4437
    %v4473 = vadd.f32 %v3141, %v4441
    %v4474 = vadd.f32 %v3144, %v4381
    %v4475 = vadd.f32 %v3147, %v4385
    %v4476 = vadd.f32 %v3150, %v4389
    %v4477 = vadd.f32 %v3153, %v4393
    %v4478 = vadd.f32 %v3156, %v4397
    %v4479 = vadd.f32 %v3159, %v4401
    %v4480 = vadd.f32 %v3162, %v4405
    %v4481 = vadd.f32 %v3165, %v4409
    %v4482 = vadd.f32 %v3168, %v4413
    %v4483 = vadd.f32 %v3171, %v4417
    %v4484 = vadd.f32 %v3174, %v4421
    %v4485 = vadd.f32 %v3177, %v4425
    %v4486 = vadd.f32 %v3180, %v4429
    %v4487 = vadd.f32 %v3183, %v4433
    %v4488 = vadd.f32 %v3186, %v4437
    %v4489 = vadd.f32 %v3189, %v4441
    %v4490 = vadd.f32 %v3192, %v4381
    %v4491 = vadd.f32 %v3195, %v4385
    %v4492 = vadd.f32 %v3198, %v4389
    %v4493 = vadd.f32 %v3201, %v4393
    %v4494 = vadd.f32 %v3204, %v4397
    %v4495 = vadd.f32 %v3207, %v4401
    %v4496 = vadd.f32 %v3210, %v4405
    %v4497 = vadd.f32 %v3213, %v4409
    %v4498 = vadd.f32 %v3216, %v4413
    %v4499 = vadd.f32 %v3219, %v4417
    %v4500 = vadd.f32 %v3222, %v4421
    %v4501 = vadd.f32 %v3225, %v4425
    %v4502 = vadd.f32 %v3228, %v4429
    %v4503 = vadd.f32 %v3231, %v4433
    %v4504 = vadd.f32 %v3234, %v4437
    %v4505 = vadd.f32 %v3237, %v4441
    %v4506 = vadd.f32 %v3240, %v4381
    %v4507 = vadd.f32 %v3243, %v4385
    %v4508 = vadd.f32 %v3246, %v4389
    %v4509 = vadd.f32 %v3249, %v4393
    %v4510 = vadd.f32 %v3252, %v4397
    %v4511 = vadd.f32 %v3255, %v4401
    %v4512 = vadd.f32 %v3258, %v4405
    %v4513 = vadd.f32 %v3261, %v4409
    %v4514 = vadd.f32 %v3264, %v4413
    %v4515 = vadd.f32 %v3267, %v4417
    %v4516 = vadd.f32 %v3270, %v4421
    %v4517 = vadd.f32 %v3273, %v4425
    %v4518 = vadd.f32 %v3276, %v4429
    %v4519 = vadd.f32 %v3279, %v4433
    %v4520 = vadd.f32 %v3282, %v4437
    %v4521 = vadd.f32 %v3285, %v4441
    %v4522 = vadd.f32 %v3288, %v4381
    %v4523 = vadd.f32 %v3291, %v4385
    %v4524 = vadd.f32 %v3294, %v4389
    %v4525 = vadd.f32 %v3297, %v4393
    %v4526 = vadd.f32 %v3300, %v4397
    %v4527 = vadd.f32 %v3303, %v4401
    %v4528 = vadd.f32 %v3306, %v4405
    %v4529 = vadd.f32 %v3309, %v4409
    %v4530 = vadd.f32 %v3312, %v4413
    %v4531 = vadd.f32 %v3315, %v4417
    %v4532 = vadd.f32 %v3318, %v4421
    %v4533 = vadd.f32 %v3321, %v4425
    %v4534 = vadd.f32 %v3324, %v4429
    %v4535 = vadd.f32 %v3327, %v4433
    %v4536 = vadd.f32 %v3330, %v4437
    %v4537 = vadd.f32 %v3333, %v4441
    %v4538 = vadd.f32 %v3336, %v4381
    %v4539 = vadd.f32 %v3339, %v4385
    %v4540 = vadd.f32 %v3342, %v4389
    %v4541 = vadd.f32 %v3345, %v4393
    %v4542 = vadd.f32 %v3348, %v4397
    %v4543 = vadd.f32 %v3351, %v4401
    %v4544 = vadd.f32 %v3354, %v4405
    %v4545 = vadd.f32 %v3357, %v4409
    %v4546 = vadd.f32 %v3360, %v4413
    %v4547 = vadd.f32 %v3363, %v4417
    %v4548 = vadd.f32 %v3366, %v4421
    %v4549 = vadd.f32 %v3369, %v4425
    %v4550 = vadd.f32 %v3372, %v4429
    %v4551 = vadd.f32 %v3375, %v4433
    %v4552 = vadd.f32 %v3378, %v4437
    %v4553 = vadd.f32 %v3381, %v4441
    %v4554 = vadd.f32 %v3384, %v4381
    %v4555 = vadd.f32 %v3387, %v4385
    %v4556 = vadd.f32 %v3390, %v4389
    %v4557 = vadd.f32 %v3393, %v4393
    %v4558 = vadd.f32 %v3396, %v4397
    %v4559 = vadd.f32 %v3399, %v4401
    %v4560 = vadd.f32 %v3402, %v4405
    %v4561 = vadd.f32 %v3405, %v4409
    %v4562 = vadd.f32 %v3408, %v4413
    %v4563 = vadd.f32 %v3411, %v4417
    %v4564 = vadd.f32 %v3414, %v4421
    %v4565 = vadd.f32 %v3417, %v4425
    %v4566 = vadd.f32 %v3420, %v4429
    %v4567 = vadd.f32 %v3423, %v4433
    %v4568 = vadd.f32 %v3426, %v4437
    %v4569 = vadd.f32 %v3429, %v4441
    %v4570 = vadd.f32 %v3432, %v4381
    %v4571 = vadd.f32 %v3435, %v4385
    %v4572 = vadd.f32 %v3438, %v4389
    %v4573 = vadd.f32 %v3441, %v4393
    %v4574 = vadd.f32 %v3444, %v4397
    %v4575 = vadd.f32 %v3447, %v4401
    %v4576 = vadd.f32 %v3450, %v4405
    %v4577 = vadd.f32 %v3453, %v4409
    %v4578 = vadd.f32 %v3456, %v4413
    %v4579 = vadd.f32 %v3459, %v4417
    %v4580 = vadd.f32 %v3462, %v4421
    %v4581 = vadd.f32 %v3465, %v4425
    %v4582 = vadd.f32 %v3468, %v4429
    %v4583 = vadd.f32 %v3471, %v4433
    %v4584 = vadd.f32 %v3474, %v4437
    %v4585 = vadd.f32 %v3477, %v4441
    %4714 = vset.pattern.permute.xlu0 0
    %4715 = vperm.xlu0 %4714, %v4458
    %v4716 = vpop.permute.xlu0 %4715
    %4717 = vset.pattern.permute.xlu0 0
    %4718 = vperm.xlu0 %4717, %v4459
    %v4719 = vpop.permute.xlu0 %4718
    %4720 = vset.pattern.permute.xlu0 0
    %4721 = vperm.xlu0 %4720, %v4460
    %v4722 = vpop.permute.xlu0 %4721
    %4723 = vset.pattern.permute.xlu0 0
    %4724 = vperm.xlu0 %4723, %v4461
    %v4725 = vpop.permute.xlu0 %4724
    %4726 = vset.pattern.permute.xlu0 0
    %4727 = vperm.xlu0 %4726, %v4462
    %v4728 = vpop.permute.xlu0 %4727
    %4729 = vset.pattern.permute.xlu0 0
    %4730 = vperm.xlu0 %4729, %v4463
    %v4731 = vpop.permute.xlu0 %4730
    %4732 = vset.pattern.permute.xlu0 0
    %4733 = vperm.xlu0 %4732, %v4464
    %v4734 = vpop.permute.xlu0 %4733
    %4735 = vset.pattern.permute.xlu0 0
    %4736 = vperm.xlu0 %4735, %v4465
    %v4737 = vpop.permute.xlu0 %4736
    %4738 = vset.pattern.permute.xlu0 0
    %4739 = vperm.xlu0 %4738, %v4466
    %v4740 = vpop.permute.xlu0 %4739
    %4741 = vset.pattern.permute.xlu0 0
    %4742 = vperm.xlu0 %4741, %v4467
    %v4743 = vpop.permute.xlu0 %4742
    %4744 = vset.pattern.permute.xlu0 0
    %4745 = vperm.xlu0 %4744, %v4468
    %v4746 = vpop.permute.xlu0 %4745
    %4747 = vset.pattern.permute.xlu0 0
    %4748 = vperm.xlu0 %4747, %v4469
    %v4749 = vpop.permute.xlu0 %4748
    %4750 = vset.pattern.permute.xlu0 0
    %4751 = vperm.xlu0 %4750, %v4470
    %v4752 = vpop.permute.xlu0 %4751
    %4753 = vset.pattern.permute.xlu0 0
    %4754 = vperm.xlu0 %4753, %v4471
    %v4755 = vpop.permute.xlu0 %4754
    %4756 = vset.pattern.permute.xlu0 0
    %4757 = vperm.xlu0 %4756, %v4472
    %v4758 = vpop.permute.xlu0 %4757
    %4759 = vset.pattern.permute.xlu0 0
    %4760 = vperm.xlu0 %4759, %v4473
    %v4761 = vpop.permute.xlu0 %4760
    %4762 = vset.pattern.permute.xlu0 0
    %4763 = vperm.xlu0 %4762, %v4474
    %v4764 = vpop.permute.xlu0 %4763
    %4765 = vset.pattern.permute.xlu0 0
    %4766 = vperm.xlu0 %4765, %v4475
    %v4767 = vpop.permute.xlu0 %4766
    %4768 = vset.pattern.permute.xlu0 0
    %4769 = vperm.xlu0 %4768, %v4476
    %v4770 = vpop.permute.xlu0 %4769
    %4771 = vset.pattern.permute.xlu0 0
    %4772 = vperm.xlu0 %4771, %v4477
    %v4773 = vpop.permute.xlu0 %4772
    %4774 = vset.pattern.permute.xlu0 0
    %4775 = vperm.xlu0 %4774, %v4478
    %v4776 = vpop.permute.xlu0 %4775
    %4777 = vset.pattern.permute.xlu0 0
    %4778 = vperm.xlu0 %4777, %v4479
    %v4779 = vpop.permute.xlu0 %4778
    %4780 = vset.pattern.permute.xlu0 0
    %4781 = vperm.xlu0 %4780, %v4480
    %v4782 = vpop.permute.xlu0 %4781
    %4783 = vset.pattern.permute.xlu0 0
    %4784 = vperm.xlu0 %4783, %v4481
    %v4785 = vpop.permute.xlu0 %4784
    %4786 = vset.pattern.permute.xlu0 0
    %4787 = vperm.xlu0 %4786, %v4482
    %v4788 = vpop.permute.xlu0 %4787
    %4789 = vset.pattern.permute.xlu0 0
    %4790 = vperm.xlu0 %4789, %v4483
    %v4791 = vpop.permute.xlu0 %4790
    %4792 = vset.pattern.permute.xlu0 0
    %4793 = vperm.xlu0 %4792, %v4484
    %v4794 = vpop.permute.xlu0 %4793
    %4795 = vset.pattern.permute.xlu0 0
    %4796 = vperm.xlu0 %4795, %v4485
    %v4797 = vpop.permute.xlu0 %4796
    %4798 = vset.pattern.permute.xlu0 0
    %4799 = vperm.xlu0 %4798, %v4486
    %v4800 = vpop.permute.xlu0 %4799
    %4801 = vset.pattern.permute.xlu0 0
    %4802 = vperm.xlu0 %4801, %v4487
    %v4803 = vpop.permute.xlu0 %4802
    %4804 = vset.pattern.permute.xlu0 0
    %4805 = vperm.xlu0 %4804, %v4488
    %v4806 = vpop.permute.xlu0 %4805
    %4807 = vset.pattern.permute.xlu0 0
    %4808 = vperm.xlu0 %4807, %v4489
    %v4809 = vpop.permute.xlu0 %4808
    %4810 = vset.pattern.permute.xlu0 0
    %4811 = vperm.xlu0 %4810, %v4490
    %v4812 = vpop.permute.xlu0 %4811
    %4813 = vset.pattern.permute.xlu0 0
    %4814 = vperm.xlu0 %4813, %v4491
    %v4815 = vpop.permute.xlu0 %4814
    %4816 = vset.pattern.permute.xlu0 0
    %4817 = vperm.xlu0 %4816, %v4492
    %v4818 = vpop.permute.xlu0 %4817
    %4819 = vset.pattern.permute.xlu0 0
    %4820 = vperm.xlu0 %4819, %v4493
    %v4821 = vpop.permute.xlu0 %4820
    %4822 = vset.pattern.permute.xlu0 0
    %4823 = vperm.xlu0 %4822, %v4494
    %v4824 = vpop.permute.xlu0 %4823
    %4825 = vset.pattern.permute.xlu0 0
    %4826 = vperm.xlu0 %4825, %v4495
    %v4827 = vpop.permute.xlu0 %4826
    %4828 = vset.pattern.permute.xlu0 0
    %4829 = vperm.xlu0 %4828, %v4496
    %v4830 = vpop.permute.xlu0 %4829
    %4831 = vset.pattern.permute.xlu0 0
    %4832 = vperm.xlu0 %4831, %v4497
    %v4833 = vpop.permute.xlu0 %4832
    %4834 = vset.pattern.permute.xlu0 0
    %4835 = vperm.xlu0 %4834, %v4498
    %v4836 = vpop.permute.xlu0 %4835
    %4837 = vset.pattern.permute.xlu0 0
    %4838 = vperm.xlu0 %4837, %v4499
    %v4839 = vpop.permute.xlu0 %4838
    %4840 = vset.pattern.permute.xlu0 0
    %4841 = vperm.xlu0 %4840, %v4500
    %v4842 = vpop.permute.xlu0 %4841
    %4843 = vset.pattern.permute.xlu0 0
    %4844 = vperm.xlu0 %4843, %v4501
    %v4845 = vpop.permute.xlu0 %4844
    %4846 = vset.pattern.permute.xlu0 0
    %4847 = vperm.xlu0 %4846, %v4502
    %v4848 = vpop.permute.xlu0 %4847
    %4849 = vset.pattern.permute.xlu0 0
    %4850 = vperm.xlu0 %4849, %v4503
    %v4851 = vpop.permute.xlu0 %4850
    %4852 = vset.pattern.permute.xlu0 0
    %4853 = vperm.xlu0 %4852, %v4504
    %v4854 = vpop.permute.xlu0 %4853
    %4855 = vset.pattern.permute.xlu0 0
    %4856 = vperm.xlu0 %4855, %v4505
    %v4857 = vpop.permute.xlu0 %4856
    %4858 = vset.pattern.permute.xlu0 0
    %4859 = vperm.xlu0 %4858, %v4506
    %v4860 = vpop.permute.xlu0 %4859
    %4861 = vset.pattern.permute.xlu0 0
    %4862 = vperm.xlu0 %4861, %v4507
    %v4863 = vpop.permute.xlu0 %4862
    %4864 = vset.pattern.permute.xlu0 0
    %4865 = vperm.xlu0 %4864, %v4508
    %v4866 = vpop.permute.xlu0 %4865
    %4867 = vset.pattern.permute.xlu0 0
    %4868 = vperm.xlu0 %4867, %v4509
    %v4869 = vpop.permute.xlu0 %4868
    %4870 = vset.pattern.permute.xlu0 0
    %4871 = vperm.xlu0 %4870, %v4510
    %v4872 = vpop.permute.xlu0 %4871
    %4873 = vset.pattern.permute.xlu0 0
    %4874 = vperm.xlu0 %4873, %v4511
    %v4875 = vpop.permute.xlu0 %4874
    %4876 = vset.pattern.permute.xlu0 0
    %4877 = vperm.xlu0 %4876, %v4512
    %v4878 = vpop.permute.xlu0 %4877
    %4879 = vset.pattern.permute.xlu0 0
    %4880 = vperm.xlu0 %4879, %v4513
    %v4881 = vpop.permute.xlu0 %4880
    %4882 = vset.pattern.permute.xlu0 0
    %4883 = vperm.xlu0 %4882, %v4514
    %v4884 = vpop.permute.xlu0 %4883
    %4885 = vset.pattern.permute.xlu0 0
    %4886 = vperm.xlu0 %4885, %v4515
    %v4887 = vpop.permute.xlu0 %4886
    %4888 = vset.pattern.permute.xlu0 0
    %4889 = vperm.xlu0 %4888, %v4516
    %v4890 = vpop.permute.xlu0 %4889
    %4891 = vset.pattern.permute.xlu0 0
    %4892 = vperm.xlu0 %4891, %v4517
    %v4893 = vpop.permute.xlu0 %4892
    %4894 = vset.pattern.permute.xlu0 0
    %4895 = vperm.xlu0 %4894, %v4518
    %v4896 = vpop.permute.xlu0 %4895
    %4897 = vset.pattern.permute.xlu0 0
    %4898 = vperm.xlu0 %4897, %v4519
    %v4899 = vpop.permute.xlu0 %4898
    %4900 = vset.pattern.permute.xlu0 0
    %4901 = vperm.xlu0 %4900, %v4520
    %v4902 = vpop.permute.xlu0 %4901
    %4903 = vset.pattern.permute.xlu0 0
    %4904 = vperm.xlu0 %4903, %v4521
    %v4905 = vpop.permute.xlu0 %4904
    %4906 = vset.pattern.permute.xlu0 0
    %4907 = vperm.xlu0 %4906, %v4522
    %v4908 = vpop.permute.xlu0 %4907
    %4909 = vset.pattern.permute.xlu0 0
    %4910 = vperm.xlu0 %4909, %v4523
    %v4911 = vpop.permute.xlu0 %4910
    %4912 = vset.pattern.permute.xlu0 0
    %4913 = vperm.xlu0 %4912, %v4524
    %v4914 = vpop.permute.xlu0 %4913
    %4915 = vset.pattern.permute.xlu0 0
    %4916 = vperm.xlu0 %4915, %v4525
    %v4917 = vpop.permute.xlu0 %4916
    %4918 = vset.pattern.permute.xlu0 0
    %4919 = vperm.xlu0 %4918, %v4526
    %v4920 = vpop.permute.xlu0 %4919
    %4921 = vset.pattern.permute.xlu0 0
    %4922 = vperm.xlu0 %4921, %v4527
    %v4923 = vpop.permute.xlu0 %4922
    %4924 = vset.pattern.permute.xlu0 0
    %4925 = vperm.xlu0 %4924, %v4528
    %v4926 = vpop.permute.xlu0 %4925
    %4927 = vset.pattern.permute.xlu0 0
    %4928 = vperm.xlu0 %4927, %v4529
    %v4929 = vpop.permute.xlu0 %4928
    %4930 = vset.pattern.permute.xlu0 0
    %4931 = vperm.xlu0 %4930, %v4530
    %v4932 = vpop.permute.xlu0 %4931
    %4933 = vset.pattern.permute.xlu0 0
    %4934 = vperm.xlu0 %4933, %v4531
    %v4935 = vpop.permute.xlu0 %4934
    %4936 = vset.pattern.permute.xlu0 0
    %4937 = vperm.xlu0 %4936, %v4532
    %v4938 = vpop.permute.xlu0 %4937
    %4939 = vset.pattern.permute.xlu0 0
    %4940 = vperm.xlu0 %4939, %v4533
    %v4941 = vpop.permute.xlu0 %4940
    %4942 = vset.pattern.permute.xlu0 0
    %4943 = vperm.xlu0 %4942, %v4534
    %v4944 = vpop.permute.xlu0 %4943
    %4945 = vset.pattern.permute.xlu0 0
    %4946 = vperm.xlu0 %4945, %v4535
    %v4947 = vpop.permute.xlu0 %4946
    %4948 = vset.pattern.permute.xlu0 0
    %4949 = vperm.xlu0 %4948, %v4536
    %v4950 = vpop.permute.xlu0 %4949
    %4951 = vset.pattern.permute.xlu0 0
    %4952 = vperm.xlu0 %4951, %v4537
    %v4953 = vpop.permute.xlu0 %4952
    %4954 = vset.pattern.permute.xlu0 0
    %4955 = vperm.xlu0 %4954, %v4538
    %v4956 = vpop.permute.xlu0 %4955
    %4957 = vset.pattern.permute.xlu0 0
    %4958 = vperm.xlu0 %4957, %v4539
    %v4959 = vpop.permute.xlu0 %4958
    %4960 = vset.pattern.permute.xlu0 0
    %4961 = vperm.xlu0 %4960, %v4540
    %v4962 = vpop.permute.xlu0 %4961
    %4963 = vset.pattern.permute.xlu0 0
    %4964 = vperm.xlu0 %4963, %v4541
    %v4965 = vpop.permute.xlu0 %4964
    %4966 = vset.pattern.permute.xlu0 0
    %4967 = vperm.xlu0 %4966, %v4542
    %v4968 = vpop.permute.xlu0 %4967
    %4969 = vset.pattern.permute.xlu0 0
    %4970 = vperm.xlu0 %4969, %v4543
    %v4971 = vpop.permute.xlu0 %4970
    %4972 = vset.pattern.permute.xlu0 0
    %4973 = vperm.xlu0 %4972, %v4544
    %v4974 = vpop.permute.xlu0 %4973
    %4975 = vset.pattern.permute.xlu0 0
    %4976 = vperm.xlu0 %4975, %v4545
    %v4977 = vpop.permute.xlu0 %4976
    %4978 = vset.pattern.permute.xlu0 0
    %4979 = vperm.xlu0 %4978, %v4546
    %v4980 = vpop.permute.xlu0 %4979
    %4981 = vset.pattern.permute.xlu0 0
    %4982 = vperm.xlu0 %4981, %v4547
    %v4983 = vpop.permute.xlu0 %4982
    %4984 = vset.pattern.permute.xlu0 0
    %4985 = vperm.xlu0 %4984, %v4548
    %v4986 = vpop.permute.xlu0 %4985
    %4987 = vset.pattern.permute.xlu0 0
    %4988 = vperm.xlu0 %4987, %v4549
    %v4989 = vpop.permute.xlu0 %4988
    %4990 = vset.pattern.permute.xlu0 0
    %4991 = vperm.xlu0 %4990, %v4550
    %v4992 = vpop.permute.xlu0 %4991
    %4993 = vset.pattern.permute.xlu0 0
    %4994 = vperm.xlu0 %4993, %v4551
    %v4995 = vpop.permute.xlu0 %4994
    %4996 = vset.pattern.permute.xlu0 0
    %4997 = vperm.xlu0 %4996, %v4552
    %v4998 = vpop.permute.xlu0 %4997
    %4999 = vset.pattern.permute.xlu0 0
    %5000 = vperm.xlu0 %4999, %v4553
    %v5001 = vpop.permute.xlu0 %5000
    %5002 = vset.pattern.permute.xlu0 0
    %5003 = vperm.xlu0 %5002, %v4554
    %v5004 = vpop.permute.xlu0 %5003
    %5005 = vset.pattern.permute.xlu0 0
    %5006 = vperm.xlu0 %5005, %v4555
    %v5007 = vpop.permute.xlu0 %5006
    %5008 = vset.pattern.permute.xlu0 0
    %5009 = vperm.xlu0 %5008, %v4556
    %v5010 = vpop.permute.xlu0 %5009
    %5011 = vset.pattern.permute.xlu0 0
    %5012 = vperm.xlu0 %5011, %v4557
    %v5013 = vpop.permute.xlu0 %5012
    %5014 = vset.pattern.permute.xlu0 0
    %5015 = vperm.xlu0 %5014, %v4558
    %v5016 = vpop.permute.xlu0 %5015
    %5017 = vset.pattern.permute.xlu0 0
    %5018 = vperm.xlu0 %5017, %v4559
    %v5019 = vpop.permute.xlu0 %5018
    %5020 = vset.pattern.permute.xlu0 0
    %5021 = vperm.xlu0 %5020, %v4560
    %v5022 = vpop.permute.xlu0 %5021
    %5023 = vset.pattern.permute.xlu0 0
    %5024 = vperm.xlu0 %5023, %v4561
    %v5025 = vpop.permute.xlu0 %5024
    %5026 = vset.pattern.permute.xlu0 0
    %5027 = vperm.xlu0 %5026, %v4562
    %v5028 = vpop.permute.xlu0 %5027
    %5029 = vset.pattern.permute.xlu0 0
    %5030 = vperm.xlu0 %5029, %v4563
    %v5031 = vpop.permute.xlu0 %5030
    %5032 = vset.pattern.permute.xlu0 0
    %5033 = vperm.xlu0 %5032, %v4564
    %v5034 = vpop.permute.xlu0 %5033
    %5035 = vset.pattern.permute.xlu0 0
    %5036 = vperm.xlu0 %5035, %v4565
    %v5037 = vpop.permute.xlu0 %5036
    %5038 = vset.pattern.permute.xlu0 0
    %5039 = vperm.xlu0 %5038, %v4566
    %v5040 = vpop.permute.xlu0 %5039
    %5041 = vset.pattern.permute.xlu0 0
    %5042 = vperm.xlu0 %5041, %v4567
    %v5043 = vpop.permute.xlu0 %5042
    %5044 = vset.pattern.permute.xlu0 0
    %5045 = vperm.xlu0 %5044, %v4568
    %v5046 = vpop.permute.xlu0 %5045
    %5047 = vset.pattern.permute.xlu0 0
    %5048 = vperm.xlu0 %5047, %v4569
    %v5049 = vpop.permute.xlu0 %5048
    %5050 = vset.pattern.permute.xlu0 0
    %5051 = vperm.xlu0 %5050, %v4570
    %v5052 = vpop.permute.xlu0 %5051
    %5053 = vset.pattern.permute.xlu0 0
    %5054 = vperm.xlu0 %5053, %v4571
    %v5055 = vpop.permute.xlu0 %5054
    %5056 = vset.pattern.permute.xlu0 0
    %5057 = vperm.xlu0 %5056, %v4572
    %v5058 = vpop.permute.xlu0 %5057
    %5059 = vset.pattern.permute.xlu0 0
    %5060 = vperm.xlu0 %5059, %v4573
    %v5061 = vpop.permute.xlu0 %5060
    %5062 = vset.pattern.permute.xlu0 0
    %5063 = vperm.xlu0 %5062, %v4574
    %v5064 = vpop.permute.xlu0 %5063
    %5065 = vset.pattern.permute.xlu0 0
    %5066 = vperm.xlu0 %5065, %v4575
    %v5067 = vpop.permute.xlu0 %5066
    %5068 = vset.pattern.permute.xlu0 0
    %5069 = vperm.xlu0 %5068, %v4576
    %v5070 = vpop.permute.xlu0 %5069
    %5071 = vset.pattern.permute.xlu0 0
    %5072 = vperm.xlu0 %5071, %v4577
    %v5073 = vpop.permute.xlu0 %5072
    %5074 = vset.pattern.permute.xlu0 0
    %5075 = vperm.xlu0 %5074, %v4578
    %v5076 = vpop.permute.xlu0 %5075
    %5077 = vset.pattern.permute.xlu0 0
    %5078 = vperm.xlu0 %5077, %v4579
    %v5079 = vpop.permute.xlu0 %5078
    %5080 = vset.pattern.permute.xlu0 0
    %5081 = vperm.xlu0 %5080, %v4580
    %v5082 = vpop.permute.xlu0 %5081
    %5083 = vset.pattern.permute.xlu0 0
    %5084 = vperm.xlu0 %5083, %v4581
    %v5085 = vpop.permute.xlu0 %5084
    %5086 = vset.pattern.permute.xlu0 0
    %5087 = vperm.xlu0 %5086, %v4582
    %v5088 = vpop.permute.xlu0 %5087
    %5089 = vset.pattern.permute.xlu0 0
    %5090 = vperm.xlu0 %5089, %v4583
    %v5091 = vpop.permute.xlu0 %5090
    %5092 = vset.pattern.permute.xlu0 0
    %5093 = vperm.xlu0 %5092, %v4584
    %v5094 = vpop.permute.xlu0 %5093
    %5095 = vset.pattern.permute.xlu0 0
    %5096 = vperm.xlu0 %5095, %v4585
    %v5097 = vpop.permute.xlu0 %5096
    %v5098 = vlaneseq
    %v5099 = vand.u32 %v5098, 127
    %v5100 = vlaneseq
    %v5101 = vshrl.u32 %v5100, 7
    %v5102 = vsub.s32 %v5099, %v5101
    %v5103 = vrot.slane %v4716, %v5102
    %v5104 = vadd.s32 %v5099, 4294967288
    %v5105 = vlaneseq
    %v5106 = vshrl.u32 %v5105, 7
    %v5107 = vsub.s32 %v5104, %v5106
    %v5108 = vrot.slane %v4719, %v5107
    %vm5109 = vcmask 130112
    %v5110 = vsel %vm5109, %v5108, %v5103
    %v5111 = vadd.s32 %v5099, 4294967280
    %v5112 = vlaneseq
    %v5113 = vshrl.u32 %v5112, 7
    %v5114 = vsub.s32 %v5111, %v5113
    %v5115 = vrot.slane %v4722, %v5114
    %vm5116 = vcmask 195712
    %v5117 = vsel %vm5116, %v5115, %v5110
    %v5118 = vadd.s32 %v5099, 4294967272
    %v5119 = vlaneseq
    %v5120 = vshrl.u32 %v5119, 7
    %v5121 = vsub.s32 %v5118, %v5120
    %v5122 = vrot.slane %v4725, %v5121
    %vm5123 = vcmask 261312
    %v5124 = vsel %vm5123, %v5122, %v5117
    %v5125 = vadd.s32 %v5099, 4294967264
    %v5126 = vlaneseq
    %v5127 = vshrl.u32 %v5126, 7
    %v5128 = vsub.s32 %v5125, %v5127
    %v5129 = vrot.slane %v4728, %v5128
    %vm5130 = vcmask 326912
    %v5131 = vsel %vm5130, %v5129, %v5124
    %v5132 = vadd.s32 %v5099, 4294967256
    %v5133 = vlaneseq
    %v5134 = vshrl.u32 %v5133, 7
    %v5135 = vsub.s32 %v5132, %v5134
    %v5136 = vrot.slane %v4731, %v5135
    %vm5137 = vcmask 392512
    %v5138 = vsel %vm5137, %v5136, %v5131
    %v5139 = vadd.s32 %v5099, 4294967248
    %v5140 = vlaneseq
    %v5141 = vshrl.u32 %v5140, 7
    %v5142 = vsub.s32 %v5139, %v5141
    %v5143 = vrot.slane %v4734, %v5142
    %vm5144 = vcmask 458112
    %v5145 = vsel %vm5144, %v5143, %v5138
    %v5146 = vadd.s32 %v5099, 4294967240
    %v5147 = vlaneseq
    %v5148 = vshrl.u32 %v5147, 7
    %v5149 = vsub.s32 %v5146, %v5148
    %v5150 = vrot.slane %v4737, %v5149
    %vm5151 = vcmask 523712
    %v5152 = vsel %vm5151, %v5150, %v5145
    %v5153 = vadd.s32 %v5099, 4294967232
    %v5154 = vlaneseq
    %v5155 = vshrl.u32 %v5154, 7
    %v5156 = vsub.s32 %v5153, %v5155
    %v5157 = vrot.slane %v4740, %v5156
    %vm5158 = vcmask 589312
    %v5159 = vsel %vm5158, %v5157, %v5152
    %v5160 = vadd.s32 %v5099, 4294967224
    %v5161 = vlaneseq
    %v5162 = vshrl.u32 %v5161, 7
    %v5163 = vsub.s32 %v5160, %v5162
    %v5164 = vrot.slane %v4743, %v5163
    %vm5165 = vcmask 654912
    %v5166 = vsel %vm5165, %v5164, %v5159
    %v5167 = vadd.s32 %v5099, 4294967216
    %v5168 = vlaneseq
    %v5169 = vshrl.u32 %v5168, 7
    %v5170 = vsub.s32 %v5167, %v5169
    %v5171 = vrot.slane %v4746, %v5170
    %vm5172 = vcmask 720512
    %v5173 = vsel %vm5172, %v5171, %v5166
    %v5174 = vadd.s32 %v5099, 4294967208
    %v5175 = vlaneseq
    %v5176 = vshrl.u32 %v5175, 7
    %v5177 = vsub.s32 %v5174, %v5176
    %v5178 = vrot.slane %v4749, %v5177
    %vm5179 = vcmask 786112
    %v5180 = vsel %vm5179, %v5178, %v5173
    %v5181 = vadd.s32 %v5099, 4294967200
    %v5182 = vlaneseq
    %v5183 = vshrl.u32 %v5182, 7
    %v5184 = vsub.s32 %v5181, %v5183
    %v5185 = vrot.slane %v4752, %v5184
    %vm5186 = vcmask 851712
    %v5187 = vsel %vm5186, %v5185, %v5180
    %v5188 = vadd.s32 %v5099, 4294967192
    %v5189 = vlaneseq
    %v5190 = vshrl.u32 %v5189, 7
    %v5191 = vsub.s32 %v5188, %v5190
    %v5192 = vrot.slane %v4755, %v5191
    %vm5193 = vcmask 917312
    %v5194 = vsel %vm5193, %v5192, %v5187
    %v5195 = vadd.s32 %v5099, 4294967184
    %v5196 = vlaneseq
    %v5197 = vshrl.u32 %v5196, 7
    %v5198 = vsub.s32 %v5195, %v5197
    %v5199 = vrot.slane %v4758, %v5198
    %vm5200 = vcmask 982912
    %v5201 = vsel %vm5200, %v5199, %v5194
    %v5202 = vadd.s32 %v5099, 4294967176
    %v5203 = vlaneseq
    %v5204 = vshrl.u32 %v5203, 7
    %v5205 = vsub.s32 %v5202, %v5204
    %v5206 = vrot.slane %v4761, %v5205
    %vm5207 = vcmask 1048512
    %v5208 = vsel %vm5207, %v5206, %v5201
    %v5209 = vlaneseq
    %v5210 = vshrl.u32 %v5209, 7
    %v5211 = vsub.s32 %v5099, %v5210
    %v5212 = vrot.slane %v4764, %v5211
    %v5213 = vlaneseq
    %v5214 = vshrl.u32 %v5213, 7
    %v5215 = vsub.s32 %v5104, %v5214
    %v5216 = vrot.slane %v4767, %v5215
    %v5217 = vsel %vm5109, %v5216, %v5212
    %v5218 = vlaneseq
    %v5219 = vshrl.u32 %v5218, 7
    %v5220 = vsub.s32 %v5111, %v5219
    %v5221 = vrot.slane %v4770, %v5220
    %v5222 = vsel %vm5116, %v5221, %v5217
    %v5223 = vlaneseq
    %v5224 = vshrl.u32 %v5223, 7
    %v5225 = vsub.s32 %v5118, %v5224
    %v5226 = vrot.slane %v4773, %v5225
    %v5227 = vsel %vm5123, %v5226, %v5222
    %v5228 = vlaneseq
    %v5229 = vshrl.u32 %v5228, 7
    %v5230 = vsub.s32 %v5125, %v5229
    %v5231 = vrot.slane %v4776, %v5230
    %v5232 = vsel %vm5130, %v5231, %v5227
    %v5233 = vlaneseq
    %v5234 = vshrl.u32 %v5233, 7
    %v5235 = vsub.s32 %v5132, %v5234
    %v5236 = vrot.slane %v4779, %v5235
    %v5237 = vsel %vm5137, %v5236, %v5232
    %v5238 = vlaneseq
    %v5239 = vshrl.u32 %v5238, 7
    %v5240 = vsub.s32 %v5139, %v5239
    %v5241 = vrot.slane %v4782, %v5240
    %v5242 = vsel %vm5144, %v5241, %v5237
    %v5243 = vlaneseq
    %v5244 = vshrl.u32 %v5243, 7
    %v5245 = vsub.s32 %v5146, %v5244
    %v5246 = vrot.slane %v4785, %v5245
    %v5247 = vsel %vm5151, %v5246, %v5242
    %v5248 = vlaneseq
    %v5249 = vshrl.u32 %v5248, 7
    %v5250 = vsub.s32 %v5153, %v5249
    %v5251 = vrot.slane %v4788, %v5250
    %v5252 = vsel %vm5158, %v5251, %v5247
    %v5253 = vlaneseq
    %v5254 = vshrl.u32 %v5253, 7
    %v5255 = vsub.s32 %v5160, %v5254
    %v5256 = vrot.slane %v4791, %v5255
    %v5257 = vsel %vm5165, %v5256, %v5252
    %v5258 = vlaneseq
    %v5259 = vshrl.u32 %v5258, 7
    %v5260 = vsub.s32 %v5167, %v5259
    %v5261 = vrot.slane %v4794, %v5260
    %v5262 = vsel %vm5172, %v5261, %v5257
    %v5263 = vlaneseq
    %v5264 = vshrl.u32 %v5263, 7
    %v5265 = vsub.s32 %v5174, %v5264
    %v5266 = vrot.slane %v4797, %v5265
    %v5267 = vsel %vm5179, %v5266, %v5262
    %v5268 = vlaneseq
    %v5269 = vshrl.u32 %v5268, 7
    %v5270 = vsub.s32 %v5181, %v5269
    %v5271 = vrot.slane %v4800, %v5270
    %v5272 = vsel %vm5186, %v5271, %v5267
    %v5273 = vlaneseq
    %v5274 = vshrl.u32 %v5273, 7
    %v5275 = vsub.s32 %v5188, %v5274
    %v5276 = vrot.slane %v4803, %v5275
    %v5277 = vsel %vm5193, %v5276, %v5272
    %v5278 = vlaneseq
    %v5279 = vshrl.u32 %v5278, 7
    %v5280 = vsub.s32 %v5195, %v5279
    %v5281 = vrot.slane %v4806, %v5280
    %v5282 = vsel %vm5200, %v5281, %v5277
    %v5283 = vlaneseq
    %v5284 = vshrl.u32 %v5283, 7
    %v5285 = vsub.s32 %v5202, %v5284
    %v5286 = vrot.slane %v4809, %v5285
    %v5287 = vsel %vm5207, %v5286, %v5282
    %v5288 = vlaneseq
    %v5289 = vshrl.u32 %v5288, 7
    %v5290 = vsub.s32 %v5099, %v5289
    %v5291 = vrot.slane %v4812, %v5290
    %v5292 = vlaneseq
    %v5293 = vshrl.u32 %v5292, 7
    %v5294 = vsub.s32 %v5104, %v5293
    %v5295 = vrot.slane %v4815, %v5294
    %v5296 = vsel %vm5109, %v5295, %v5291
    %v5297 = vlaneseq
    %v5298 = vshrl.u32 %v5297, 7
    %v5299 = vsub.s32 %v5111, %v5298
    %v5300 = vrot.slane %v4818, %v5299
    %v5301 = vsel %vm5116, %v5300, %v5296
    %v5302 = vlaneseq
    %v5303 = vshrl.u32 %v5302, 7
    %v5304 = vsub.s32 %v5118, %v5303
    %v5305 = vrot.slane %v4821, %v5304
    %v5306 = vsel %vm5123, %v5305, %v5301
    %v5307 = vlaneseq
    %v5308 = vshrl.u32 %v5307, 7
    %v5309 = vsub.s32 %v5125, %v5308
    %v5310 = vrot.slane %v4824, %v5309
    %v5311 = vsel %vm5130, %v5310, %v5306
    %v5312 = vlaneseq
    %v5313 = vshrl.u32 %v5312, 7
    %v5314 = vsub.s32 %v5132, %v5313
    %v5315 = vrot.slane %v4827, %v5314
    %v5316 = vsel %vm5137, %v5315, %v5311
    %v5317 = vlaneseq
    %v5318 = vshrl.u32 %v5317, 7
    %v5319 = vsub.s32 %v5139, %v5318
    %v5320 = vrot.slane %v4830, %v5319
    %v5321 = vsel %vm5144, %v5320, %v5316
    %v5322 = vlaneseq
    %v5323 = vshrl.u32 %v5322, 7
    %v5324 = vsub.s32 %v5146, %v5323
    %v5325 = vrot.slane %v4833, %v5324
    %v5326 = vsel %vm5151, %v5325, %v5321
    %v5327 = vlaneseq
    %v5328 = vshrl.u32 %v5327, 7
    %v5329 = vsub.s32 %v5153, %v5328
    %v5330 = vrot.slane %v4836, %v5329
    %v5331 = vsel %vm5158, %v5330, %v5326
    %v5332 = vlaneseq
    %v5333 = vshrl.u32 %v5332, 7
    %v5334 = vsub.s32 %v5160, %v5333
    %v5335 = vrot.slane %v4839, %v5334
    %v5336 = vsel %vm5165, %v5335, %v5331
    %v5337 = vlaneseq
    %v5338 = vshrl.u32 %v5337, 7
    %v5339 = vsub.s32 %v5167, %v5338
    %v5340 = vrot.slane %v4842, %v5339
    %v5341 = vsel %vm5172, %v5340, %v5336
    %v5342 = vlaneseq
    %v5343 = vshrl.u32 %v5342, 7
    %v5344 = vsub.s32 %v5174, %v5343
    %v5345 = vrot.slane %v4845, %v5344
    %v5346 = vsel %vm5179, %v5345, %v5341
    %v5347 = vlaneseq
    %v5348 = vshrl.u32 %v5347, 7
    %v5349 = vsub.s32 %v5181, %v5348
    %v5350 = vrot.slane %v4848, %v5349
    %v5351 = vsel %vm5186, %v5350, %v5346
    %v5352 = vlaneseq
    %v5353 = vshrl.u32 %v5352, 7
    %v5354 = vsub.s32 %v5188, %v5353
    %v5355 = vrot.slane %v4851, %v5354
    %v5356 = vsel %vm5193, %v5355, %v5351
    %v5357 = vlaneseq
    %v5358 = vshrl.u32 %v5357, 7
    %v5359 = vsub.s32 %v5195, %v5358
    %v5360 = vrot.slane %v4854, %v5359
    %v5361 = vsel %vm5200, %v5360, %v5356
    %v5362 = vlaneseq
    %v5363 = vshrl.u32 %v5362, 7
    %v5364 = vsub.s32 %v5202, %v5363
    %v5365 = vrot.slane %v4857, %v5364
    %v5366 = vsel %vm5207, %v5365, %v5361
    %v5367 = vlaneseq
    %v5368 = vshrl.u32 %v5367, 7
    %v5369 = vsub.s32 %v5099, %v5368
    %v5370 = vrot.slane %v4860, %v5369
    %v5371 = vlaneseq
    %v5372 = vshrl.u32 %v5371, 7
    %v5373 = vsub.s32 %v5104, %v5372
    %v5374 = vrot.slane %v4863, %v5373
    %v5375 = vsel %vm5109, %v5374, %v5370
    %v5376 = vlaneseq
    %v5377 = vshrl.u32 %v5376, 7
    %v5378 = vsub.s32 %v5111, %v5377
    %v5379 = vrot.slane %v4866, %v5378
    %v5380 = vsel %vm5116, %v5379, %v5375
    %v5381 = vlaneseq
    %v5382 = vshrl.u32 %v5381, 7
    %v5383 = vsub.s32 %v5118, %v5382
    %v5384 = vrot.slane %v4869, %v5383
    %v5385 = vsel %vm5123, %v5384, %v5380
    %v5386 = vlaneseq
    %v5387 = vshrl.u32 %v5386, 7
    %v5388 = vsub.s32 %v5125, %v5387
    %v5389 = vrot.slane %v4872, %v5388
    %v5390 = vsel %vm5130, %v5389, %v5385
    %v5391 = vlaneseq
    %v5392 = vshrl.u32 %v5391, 7
    %v5393 = vsub.s32 %v5132, %v5392
    %v5394 = vrot.slane %v4875, %v5393
    %v5395 = vsel %vm5137, %v5394, %v5390
    %v5396 = vlaneseq
    %v5397 = vshrl.u32 %v5396, 7
    %v5398 = vsub.s32 %v5139, %v5397
    %v5399 = vrot.slane %v4878, %v5398
    %v5400 = vsel %vm5144, %v5399, %v5395
    %v5401 = vlaneseq
    %v5402 = vshrl.u32 %v5401, 7
    %v5403 = vsub.s32 %v5146, %v5402
    %v5404 = vrot.slane %v4881, %v5403
    %v5405 = vsel %vm5151, %v5404, %v5400
    %v5406 = vlaneseq
    %v5407 = vshrl.u32 %v5406, 7
    %v5408 = vsub.s32 %v5153, %v5407
    %v5409 = vrot.slane %v4884, %v5408
    %v5410 = vsel %vm5158, %v5409, %v5405
    %v5411 = vlaneseq
    %v5412 = vshrl.u32 %v5411, 7
    %v5413 = vsub.s32 %v5160, %v5412
    %v5414 = vrot.slane %v4887, %v5413
    %v5415 = vsel %vm5165, %v5414, %v5410
    %v5416 = vlaneseq
    %v5417 = vshrl.u32 %v5416, 7
    %v5418 = vsub.s32 %v5167, %v5417
    %v5419 = vrot.slane %v4890, %v5418
    %v5420 = vsel %vm5172, %v5419, %v5415
    %v5421 = vlaneseq
    %v5422 = vshrl.u32 %v5421, 7
    %v5423 = vsub.s32 %v5174, %v5422
    %v5424 = vrot.slane %v4893, %v5423
    %v5425 = vsel %vm5179, %v5424, %v5420
    %v5426 = vlaneseq
    %v5427 = vshrl.u32 %v5426, 7
    %v5428 = vsub.s32 %v5181, %v5427
    %v5429 = vrot.slane %v4896, %v5428
    %v5430 = vsel %vm5186, %v5429, %v5425
    %v5431 = vlaneseq
    %v5432 = vshrl.u32 %v5431, 7
    %v5433 = vsub.s32 %v5188, %v5432
    %v5434 = vrot.slane %v4899, %v5433
    %v5435 = vsel %vm5193, %v5434, %v5430
    %v5436 = vlaneseq
    %v5437 = vshrl.u32 %v5436, 7
    %v5438 = vsub.s32 %v5195, %v5437
    %v5439 = vrot.slane %v4902, %v5438
    %v5440 = vsel %vm5200, %v5439, %v5435
    %v5441 = vlaneseq
    %v5442 = vshrl.u32 %v5441, 7
    %v5443 = vsub.s32 %v5202, %v5442
    %v5444 = vrot.slane %v4905, %v5443
    %v5445 = vsel %vm5207, %v5444, %v5440
    %v5446 = vlaneseq
    %v5447 = vshrl.u32 %v5446, 7
    %v5448 = vsub.s32 %v5099, %v5447
    %v5449 = vrot.slane %v4908, %v5448
    %v5450 = vlaneseq
    %v5451 = vshrl.u32 %v5450, 7
    %v5452 = vsub.s32 %v5104, %v5451
    %v5453 = vrot.slane %v4911, %v5452
    %v5454 = vsel %vm5109, %v5453, %v5449
    %v5455 = vlaneseq
    %v5456 = vshrl.u32 %v5455, 7
    %v5457 = vsub.s32 %v5111, %v5456
    %v5458 = vrot.slane %v4914, %v5457
    %v5459 = vsel %vm5116, %v5458, %v5454
    %v5460 = vlaneseq
    %v5461 = vshrl.u32 %v5460, 7
    %v5462 = vsub.s32 %v5118, %v5461
    %v5463 = vrot.slane %v4917, %v5462
    %v5464 = vsel %vm5123, %v5463, %v5459
    %v5465 = vlaneseq
    %v5466 = vshrl.u32 %v5465, 7
    %v5467 = vsub.s32 %v5125, %v5466
    %v5468 = vrot.slane %v4920, %v5467
    %v5469 = vsel %vm5130, %v5468, %v5464
    %v5470 = vlaneseq
    %v5471 = vshrl.u32 %v5470, 7
    %v5472 = vsub.s32 %v5132, %v5471
    %v5473 = vrot.slane %v4923, %v5472
    %v5474 = vsel %vm5137, %v5473, %v5469
    %v5475 = vlaneseq
    %v5476 = vshrl.u32 %v5475, 7
    %v5477 = vsub.s32 %v5139, %v5476
    %v5478 = vrot.slane %v4926, %v5477
    %v5479 = vsel %vm5144, %v5478, %v5474
    %v5480 = vlaneseq
    %v5481 = vshrl.u32 %v5480, 7
    %v5482 = vsub.s32 %v5146, %v5481
    %v5483 = vrot.slane %v4929, %v5482
    %v5484 = vsel %vm5151, %v5483, %v5479
    %v5485 = vlaneseq
    %v5486 = vshrl.u32 %v5485, 7
    %v5487 = vsub.s32 %v5153, %v5486
    %v5488 = vrot.slane %v4932, %v5487
    %v5489 = vsel %vm5158, %v5488, %v5484
    %v5490 = vlaneseq
    %v5491 = vshrl.u32 %v5490, 7
    %v5492 = vsub.s32 %v5160, %v5491
    %v5493 = vrot.slane %v4935, %v5492
    %v5494 = vsel %vm5165, %v5493, %v5489
    %v5495 = vlaneseq
    %v5496 = vshrl.u32 %v5495, 7
    %v5497 = vsub.s32 %v5167, %v5496
    %v5498 = vrot.slane %v4938, %v5497
    %v5499 = vsel %vm5172, %v5498, %v5494
    %v5500 = vlaneseq
    %v5501 = vshrl.u32 %v5500, 7
    %v5502 = vsub.s32 %v5174, %v5501
    %v5503 = vrot.slane %v4941, %v5502
    %v5504 = vsel %vm5179, %v5503, %v5499
    %v5505 = vlaneseq
    %v5506 = vshrl.u32 %v5505, 7
    %v5507 = vsub.s32 %v5181, %v5506
    %v5508 = vrot.slane %v4944, %v5507
    %v5509 = vsel %vm5186, %v5508, %v5504
    %v5510 = vlaneseq
    %v5511 = vshrl.u32 %v5510, 7
    %v5512 = vsub.s32 %v5188, %v5511
    %v5513 = vrot.slane %v4947, %v5512
    %v5514 = vsel %vm5193, %v5513, %v5509
    %v5515 = vlaneseq
    %v5516 = vshrl.u32 %v5515, 7
    %v5517 = vsub.s32 %v5195, %v5516
    %v5518 = vrot.slane %v4950, %v5517
    %v5519 = vsel %vm5200, %v5518, %v5514
    %v5520 = vlaneseq
    %v5521 = vshrl.u32 %v5520, 7
    %v5522 = vsub.s32 %v5202, %v5521
    %v5523 = vrot.slane %v4953, %v5522
    %v5524 = vsel %vm5207, %v5523, %v5519
    %v5525 = vlaneseq
    %v5526 = vshrl.u32 %v5525, 7
    %v5527 = vsub.s32 %v5099, %v5526
    %v5528 = vrot.slane %v4956, %v5527
    %v5529 = vlaneseq
    %v5530 = vshrl.u32 %v5529, 7
    %v5531 = vsub.s32 %v5104, %v5530
    %v5532 = vrot.slane %v4959, %v5531
    %v5533 = vsel %vm5109, %v5532, %v5528
    %v5534 = vlaneseq
    %v5535 = vshrl.u32 %v5534, 7
    %v5536 = vsub.s32 %v5111, %v5535
    %v5537 = vrot.slane %v4962, %v5536
    %v5538 = vsel %vm5116, %v5537, %v5533
    %v5539 = vlaneseq
    %v5540 = vshrl.u32 %v5539, 7
    %v5541 = vsub.s32 %v5118, %v5540
    %v5542 = vrot.slane %v4965, %v5541
    %v5543 = vsel %vm5123, %v5542, %v5538
    %v5544 = vlaneseq
    %v5545 = vshrl.u32 %v5544, 7
    %v5546 = vsub.s32 %v5125, %v5545
    %v5547 = vrot.slane %v4968, %v5546
    %v5548 = vsel %vm5130, %v5547, %v5543
    %v5549 = vlaneseq
    %v5550 = vshrl.u32 %v5549, 7
    %v5551 = vsub.s32 %v5132, %v5550
    %v5552 = vrot.slane %v4971, %v5551
    %v5553 = vsel %vm5137, %v5552, %v5548
    %v5554 = vlaneseq
    %v5555 = vshrl.u32 %v5554, 7
    %v5556 = vsub.s32 %v5139, %v5555
    %v5557 = vrot.slane %v4974, %v5556
    %v5558 = vsel %vm5144, %v5557, %v5553
    %v5559 = vlaneseq
    %v5560 = vshrl.u32 %v5559, 7
    %v5561 = vsub.s32 %v5146, %v5560
    %v5562 = vrot.slane %v4977, %v5561
    %v5563 = vsel %vm5151, %v5562, %v5558
    %v5564 = vlaneseq
    %v5565 = vshrl.u32 %v5564, 7
    %v5566 = vsub.s32 %v5153, %v5565
    %v5567 = vrot.slane %v4980, %v5566
    %v5568 = vsel %vm5158, %v5567, %v5563
    %v5569 = vlaneseq
    %v5570 = vshrl.u32 %v5569, 7
    %v5571 = vsub.s32 %v5160, %v5570
    %v5572 = vrot.slane %v4983, %v5571
    %v5573 = vsel %vm5165, %v5572, %v5568
    %v5574 = vlaneseq
    %v5575 = vshrl.u32 %v5574, 7
    %v5576 = vsub.s32 %v5167, %v5575
    %v5577 = vrot.slane %v4986, %v5576
    %v5578 = vsel %vm5172, %v5577, %v5573
    %v5579 = vlaneseq
    %v5580 = vshrl.u32 %v5579, 7
    %v5581 = vsub.s32 %v5174, %v5580
    %v5582 = vrot.slane %v4989, %v5581
    %v5583 = vsel %vm5179, %v5582, %v5578
    %v5584 = vlaneseq
    %v5585 = vshrl.u32 %v5584, 7
    %v5586 = vsub.s32 %v5181, %v5585
    %v5587 = vrot.slane %v4992, %v5586
    %v5588 = vsel %vm5186, %v5587, %v5583
    %v5589 = vlaneseq
    %v5590 = vshrl.u32 %v5589, 7
    %v5591 = vsub.s32 %v5188, %v5590
    %v5592 = vrot.slane %v4995, %v5591
    %v5593 = vsel %vm5193, %v5592, %v5588
    %v5594 = vlaneseq
    %v5595 = vshrl.u32 %v5594, 7
    %v5596 = vsub.s32 %v5195, %v5595
    %v5597 = vrot.slane %v4998, %v5596
    %v5598 = vsel %vm5200, %v5597, %v5593
    %v5599 = vlaneseq
    %v5600 = vshrl.u32 %v5599, 7
    %v5601 = vsub.s32 %v5202, %v5600
    %v5602 = vrot.slane %v5001, %v5601
    %v5603 = vsel %vm5207, %v5602, %v5598
    %v5604 = vlaneseq
    %v5605 = vshrl.u32 %v5604, 7
    %v5606 = vsub.s32 %v5099, %v5605
    %v5607 = vrot.slane %v5004, %v5606
    %v5608 = vlaneseq
    %v5609 = vshrl.u32 %v5608, 7
    %v5610 = vsub.s32 %v5104, %v5609
    %v5611 = vrot.slane %v5007, %v5610
    %v5612 = vsel %vm5109, %v5611, %v5607
    %v5613 = vlaneseq
    %v5614 = vshrl.u32 %v5613, 7
    %v5615 = vsub.s32 %v5111, %v5614
    %v5616 = vrot.slane %v5010, %v5615
    %v5617 = vsel %vm5116, %v5616, %v5612
    %v5618 = vlaneseq
    %v5619 = vshrl.u32 %v5618, 7
    %v5620 = vsub.s32 %v5118, %v5619
    %v5621 = vrot.slane %v5013, %v5620
    %v5622 = vsel %vm5123, %v5621, %v5617
    %v5623 = vlaneseq
    %v5624 = vshrl.u32 %v5623, 7
    %v5625 = vsub.s32 %v5125, %v5624
    %v5626 = vrot.slane %v5016, %v5625
    %v5627 = vsel %vm5130, %v5626, %v5622
    %v5628 = vlaneseq
    %v5629 = vshrl.u32 %v5628, 7
    %v5630 = vsub.s32 %v5132, %v5629
    %v5631 = vrot.slane %v5019, %v5630
    %v5632 = vsel %vm5137, %v5631, %v5627
    %v5633 = vlaneseq
    %v5634 = vshrl.u32 %v5633, 7
    %v5635 = vsub.s32 %v5139, %v5634
    %v5636 = vrot.slane %v5022, %v5635
    %v5637 = vsel %vm5144, %v5636, %v5632
    %v5638 = vlaneseq
    %v5639 = vshrl.u32 %v5638, 7
    %v5640 = vsub.s32 %v5146, %v5639
    %v5641 = vrot.slane %v5025, %v5640
    %v5642 = vsel %vm5151, %v5641, %v5637
    %v5643 = vlaneseq
    %v5644 = vshrl.u32 %v5643, 7
    %v5645 = vsub.s32 %v5153, %v5644
    %v5646 = vrot.slane %v5028, %v5645
    %v5647 = vsel %vm5158, %v5646, %v5642
    %v5648 = vlaneseq
    %v5649 = vshrl.u32 %v5648, 7
    %v5650 = vsub.s32 %v5160, %v5649
    %v5651 = vrot.slane %v5031, %v5650
    %v5652 = vsel %vm5165, %v5651, %v5647
    %v5653 = vlaneseq
    %v5654 = vshrl.u32 %v5653, 7
    %v5655 = vsub.s32 %v5167, %v5654
    %v5656 = vrot.slane %v5034, %v5655
    %v5657 = vsel %vm5172, %v5656, %v5652
    %v5658 = vlaneseq
    %v5659 = vshrl.u32 %v5658, 7
    %v5660 = vsub.s32 %v5174, %v5659
    %v5661 = vrot.slane %v5037, %v5660
    %v5662 = vsel %vm5179, %v5661, %v5657
    %v5663 = vlaneseq
    %v5664 = vshrl.u32 %v5663, 7
    %v5665 = vsub.s32 %v5181, %v5664
    %v5666 = vrot.slane %v5040, %v5665
    %v5667 = vsel %vm5186, %v5666, %v5662
    %v5668 = vlaneseq
    %v5669 = vshrl.u32 %v5668, 7
    %v5670 = vsub.s32 %v5188, %v5669
    %v5671 = vrot.slane %v5043, %v5670
    %v5672 = vsel %vm5193, %v5671, %v5667
    %v5673 = vlaneseq
    %v5674 = vshrl.u32 %v5673, 7
    %v5675 = vsub.s32 %v5195, %v5674
    %v5676 = vrot.slane %v5046, %v5675
    %v5677 = vsel %vm5200, %v5676, %v5672
    %v5678 = vlaneseq
    %v5679 = vshrl.u32 %v5678, 7
    %v5680 = vsub.s32 %v5202, %v5679
    %v5681 = vrot.slane %v5049, %v5680
    %v5682 = vsel %vm5207, %v5681, %v5677
    %v5683 = vlaneseq
    %v5684 = vshrl.u32 %v5683, 7
    %v5685 = vsub.s32 %v5099, %v5684
    %v5686 = vrot.slane %v5052, %v5685
    %v5687 = vlaneseq
    %v5688 = vshrl.u32 %v5687, 7
    %v5689 = vsub.s32 %v5104, %v5688
    %v5690 = vrot.slane %v5055, %v5689
    %v5691 = vsel %vm5109, %v5690, %v5686
    %v5692 = vlaneseq
    %v5693 = vshrl.u32 %v5692, 7
    %v5694 = vsub.s32 %v5111, %v5693
    %v5695 = vrot.slane %v5058, %v5694
    %v5696 = vsel %vm5116, %v5695, %v5691
    %v5697 = vlaneseq
    %v5698 = vshrl.u32 %v5697, 7
    %v5699 = vsub.s32 %v5118, %v5698
    %v5700 = vrot.slane %v5061, %v5699
    %v5701 = vsel %vm5123, %v5700, %v5696
    %v5702 = vlaneseq
    %v5703 = vshrl.u32 %v5702, 7
    %v5704 = vsub.s32 %v5125, %v5703
    %v5705 = vrot.slane %v5064, %v5704
    %v5706 = vsel %vm5130, %v5705, %v5701
    %v5707 = vlaneseq
    %v5708 = vshrl.u32 %v5707, 7
    %v5709 = vsub.s32 %v5132, %v5708
    %v5710 = vrot.slane %v5067, %v5709
    %v5711 = vsel %vm5137, %v5710, %v5706
    %v5712 = vlaneseq
    %v5713 = vshrl.u32 %v5712, 7
    %v5714 = vsub.s32 %v5139, %v5713
    %v5715 = vrot.slane %v5070, %v5714
    %v5716 = vsel %vm5144, %v5715, %v5711
    %v5717 = vlaneseq
    %v5718 = vshrl.u32 %v5717, 7
    %v5719 = vsub.s32 %v5146, %v5718
    %v5720 = vrot.slane %v5073, %v5719
    %v5721 = vsel %vm5151, %v5720, %v5716
    %v5722 = vlaneseq
    %v5723 = vshrl.u32 %v5722, 7
    %v5724 = vsub.s32 %v5153, %v5723
    %v5725 = vrot.slane %v5076, %v5724
    %v5726 = vsel %vm5158, %v5725, %v5721
    %v5727 = vlaneseq
    %v5728 = vshrl.u32 %v5727, 7
    %v5729 = vsub.s32 %v5160, %v5728
    %v5730 = vrot.slane %v5079, %v5729
    %v5731 = vsel %vm5165, %v5730, %v5726
    %v5732 = vlaneseq
    %v5733 = vshrl.u32 %v5732, 7
    %v5734 = vsub.s32 %v5167, %v5733
    %v5735 = vrot.slane %v5082, %v5734
    %v5736 = vsel %vm5172, %v5735, %v5731
    %v5737 = vlaneseq
    %v5738 = vshrl.u32 %v5737, 7
    %v5739 = vsub.s32 %v5174, %v5738
    %v5740 = vrot.slane %v5085, %v5739
    %v5741 = vsel %vm5179, %v5740, %v5736
    %v5742 = vlaneseq
    %v5743 = vshrl.u32 %v5742, 7
    %v5744 = vsub.s32 %v5181, %v5743
    %v5745 = vrot.slane %v5088, %v5744
    %v5746 = vsel %vm5186, %v5745, %v5741
    %v5747 = vlaneseq
    %v5748 = vshrl.u32 %v5747, 7
    %v5749 = vsub.s32 %v5188, %v5748
    %v5750 = vrot.slane %v5091, %v5749
    %v5751 = vsel %vm5193, %v5750, %v5746
    %v5752 = vlaneseq
    %v5753 = vshrl.u32 %v5752, 7
    %v5754 = vsub.s32 %v5195, %v5753
    %v5755 = vrot.slane %v5094, %v5754
    %v5756 = vsel %vm5200, %v5755, %v5751
    %v5757 = vlaneseq
    %v5758 = vshrl.u32 %v5757, 7
    %v5759 = vsub.s32 %v5202, %v5758
    %v5760 = vrot.slane %v5097, %v5759
    %v5761 = vsel %vm5207, %v5760, %v5756
    %vm5762 = vcmask 1041409
    %v5763 = vsel %vm5762, %v5287, %v5208
    %vm5764 = vcmask 1042434
    %v5765 = vsel %vm5764, %v5366, %v5763
    %vm5766 = vcmask 1043459
    %v5767 = vsel %vm5766, %v5445, %v5765
    %vm5768 = vcmask 1044484
    %v5769 = vsel %vm5768, %v5524, %v5767
    %vm5770 = vcmask 1045509
    %v5771 = vsel %vm5770, %v5603, %v5769
    %vm5772 = vcmask 1046534
    %v5773 = vsel %vm5772, %v5682, %v5771
    %vm5774 = vcmask 1047559
    %v5775 = vsel %vm5774, %v5761, %v5773
    %5777 = vst [vmem:[#allocation2] sm:$0xff] %v5775
    %v5778 = vadd.f32 %v3992, %v4381
    %v5779 = vadd.f32 %v3995, %v4385
    %v5780 = vadd.f32 %v3998, %v4389
    %v5781 = vadd.f32 %v4001, %v4393
    %v5782 = vadd.f32 %v4004, %v4397
    %v5783 = vadd.f32 %v4007, %v4401
    %v5784 = vadd.f32 %v4010, %v4405
    %v5785 = vadd.f32 %v4013, %v4409
    %v5786 = vadd.f32 %v4016, %v4413
    %v5787 = vadd.f32 %v4019, %v4417
    %v5788 = vadd.f32 %v4022, %v4421
    %v5789 = vadd.f32 %v4025, %v4425
    %v5790 = vadd.f32 %v4028, %v4429
    %v5791 = vadd.f32 %v4031, %v4433
    %v5792 = vadd.f32 %v4034, %v4437
    %v5793 = vadd.f32 %v4037, %v4441
    %v5794 = vadd.f32 %v4040, %v4381
    %v5795 = vadd.f32 %v4043, %v4385
    %v5796 = vadd.f32 %v4046, %v4389
    %v5797 = vadd.f32 %v4049, %v4393
    %v5798 = vadd.f32 %v4052, %v4397
    %v5799 = vadd.f32 %v4055, %v4401
    %v5800 = vadd.f32 %v4058, %v4405
    %v5801 = vadd.f32 %v4061, %v4409
    %v5802 = vadd.f32 %v4064, %v4413
    %v5803 = vadd.f32 %v4067, %v4417
    %v5804 = vadd.f32 %v4070, %v4421
    %v5805 = vadd.f32 %v4073, %v4425
    %v5806 = vadd.f32 %v4076, %v4429
    %v5807 = vadd.f32 %v4079, %v4433
    %v5808 = vadd.f32 %v4082, %v4437
    %v5809 = vadd.f32 %v4085, %v4441
    %v5810 = vadd.f32 %v4088, %v4381
    %v5811 = vadd.f32 %v4091, %v4385
    %v5812 = vadd.f32 %v4094, %v4389
    %v5813 = vadd.f32 %v4097, %v4393
    %v5814 = vadd.f32 %v4100, %v4397
    %v5815 = vadd.f32 %v4103, %v4401
    %v5816 = vadd.f32 %v4106, %v4405
    %v5817 = vadd.f32 %v4109, %v4409
    %v5818 = vadd.f32 %v4112, %v4413
    %v5819 = vadd.f32 %v4115, %v4417
    %v5820 = vadd.f32 %v4118, %v4421
    %v5821 = vadd.f32 %v4121, %v4425
    %v5822 = vadd.f32 %v4124, %v4429
    %v5823 = vadd.f32 %v4127, %v4433
    %v5824 = vadd.f32 %v4130, %v4437
    %v5825 = vadd.f32 %v4133, %v4441
    %v5826 = vadd.f32 %v4136, %v4381
    %v5827 = vadd.f32 %v4139, %v4385
    %v5828 = vadd.f32 %v4142, %v4389
    %v5829 = vadd.f32 %v4145, %v4393
    %v5830 = vadd.f32 %v4148, %v4397
    %v5831 = vadd.f32 %v4151, %v4401
    %v5832 = vadd.f32 %v4154, %v4405
    %v5833 = vadd.f32 %v4157, %v4409
    %v5834 = vadd.f32 %v4160, %v4413
    %v5835 = vadd.f32 %v4163, %v4417
    %v5836 = vadd.f32 %v4166, %v4421
    %v5837 = vadd.f32 %v4169, %v4425
    %v5838 = vadd.f32 %v4172, %v4429
    %v5839 = vadd.f32 %v4175, %v4433
    %v5840 = vadd.f32 %v4178, %v4437
    %v5841 = vadd.f32 %v4181, %v4441
    %v5842 = vadd.f32 %v4184, %v4381
    %v5843 = vadd.f32 %v4187, %v4385
    %v5844 = vadd.f32 %v4190, %v4389
    %v5845 = vadd.f32 %v4193, %v4393
    %v5846 = vadd.f32 %v4196, %v4397
    %v5847 = vadd.f32 %v4199, %v4401
    %v5848 = vadd.f32 %v4202, %v4405
    %v5849 = vadd.f32 %v4205, %v4409
    %v5850 = vadd.f32 %v4208, %v4413
    %v5851 = vadd.f32 %v4211, %v4417
    %v5852 = vadd.f32 %v4214, %v4421
    %v5853 = vadd.f32 %v4217, %v4425
    %v5854 = vadd.f32 %v4220, %v4429
    %v5855 = vadd.f32 %v4223, %v4433
    %v5856 = vadd.f32 %v4226, %v4437
    %v5857 = vadd.f32 %v4229, %v4441
    %v5858 = vadd.f32 %v4232, %v4381
    %v5859 = vadd.f32 %v4235, %v4385
    %v5860 = vadd.f32 %v4238, %v4389
    %v5861 = vadd.f32 %v4241, %v4393
    %v5862 = vadd.f32 %v4244, %v4397
    %v5863 = vadd.f32 %v4247, %v4401
    %v5864 = vadd.f32 %v4250, %v4405
    %v5865 = vadd.f32 %v4253, %v4409
    %v5866 = vadd.f32 %v4256, %v4413
    %v5867 = vadd.f32 %v4259, %v4417
    %v5868 = vadd.f32 %v4262, %v4421
    %v5869 = vadd.f32 %v4265, %v4425
    %v5870 = vadd.f32 %v4268, %v4429
    %v5871 = vadd.f32 %v4271, %v4433
    %v5872 = vadd.f32 %v4274, %v4437
    %v5873 = vadd.f32 %v4277, %v4441
    %v5874 = vadd.f32 %v4280, %v4381
    %v5875 = vadd.f32 %v4283, %v4385
    %v5876 = vadd.f32 %v4286, %v4389
    %v5877 = vadd.f32 %v4289, %v4393
    %v5878 = vadd.f32 %v4292, %v4397
    %v5879 = vadd.f32 %v4295, %v4401
    %v5880 = vadd.f32 %v4298, %v4405
    %v5881 = vadd.f32 %v4301, %v4409
    %v5882 = vadd.f32 %v4304, %v4413
    %v5883 = vadd.f32 %v4307, %v4417
    %v5884 = vadd.f32 %v4310, %v4421
    %v5885 = vadd.f32 %v4313, %v4425
    %v5886 = vadd.f32 %v4316, %v4429
    %v5887 = vadd.f32 %v4319, %v4433
    %v5888 = vadd.f32 %v4322, %v4437
    %v5889 = vadd.f32 %v4325, %v4441
    %v5890 = vadd.f32 %v4328, %v4381
    %v5891 = vadd.f32 %v4331, %v4385
    %v5892 = vadd.f32 %v4334, %v4389
    %v5893 = vadd.f32 %v4337, %v4393
    %v5894 = vadd.f32 %v4340, %v4397
    %v5895 = vadd.f32 %v4343, %v4401
    %v5896 = vadd.f32 %v4346, %v4405
    %v5897 = vadd.f32 %v4349, %v4409
    %v5898 = vadd.f32 %v4352, %v4413
    %v5899 = vadd.f32 %v4355, %v4417
    %v5900 = vadd.f32 %v4358, %v4421
    %v5901 = vadd.f32 %v4361, %v4425
    %v5902 = vadd.f32 %v4364, %v4429
    %v5903 = vadd.f32 %v4367, %v4433
    %v5904 = vadd.f32 %v4370, %v4437
    %v5905 = vadd.f32 %v4373, %v4441
    %6034 = vset.pattern.permute.xlu0 0
    %6035 = vperm.xlu0 %6034, %v5778
    %v6036 = vpop.permute.xlu0 %6035
    %6037 = vset.pattern.permute.xlu0 0
    %6038 = vperm.xlu0 %6037, %v5779
    %v6039 = vpop.permute.xlu0 %6038
    %6040 = vset.pattern.permute.xlu0 0
    %6041 = vperm.xlu0 %6040, %v5780
    %v6042 = vpop.permute.xlu0 %6041
    %6043 = vset.pattern.permute.xlu0 0
    %6044 = vperm.xlu0 %6043, %v5781
    %v6045 = vpop.permute.xlu0 %6044
    %6046 = vset.pattern.permute.xlu0 0
    %6047 = vperm.xlu0 %6046, %v5782
    %v6048 = vpop.permute.xlu0 %6047
    %6049 = vset.pattern.permute.xlu0 0
    %6050 = vperm.xlu0 %6049, %v5783
    %v6051 = vpop.permute.xlu0 %6050
    %6052 = vset.pattern.permute.xlu0 0
    %6053 = vperm.xlu0 %6052, %v5784
    %v6054 = vpop.permute.xlu0 %6053
    %6055 = vset.pattern.permute.xlu0 0
    %6056 = vperm.xlu0 %6055, %v5785
    %v6057 = vpop.permute.xlu0 %6056
    %6058 = vset.pattern.permute.xlu0 0
    %6059 = vperm.xlu0 %6058, %v5786
    %v6060 = vpop.permute.xlu0 %6059
    %6061 = vset.pattern.permute.xlu0 0
    %6062 = vperm.xlu0 %6061, %v5787
    %v6063 = vpop.permute.xlu0 %6062
    %6064 = vset.pattern.permute.xlu0 0
    %6065 = vperm.xlu0 %6064, %v5788
    %v6066 = vpop.permute.xlu0 %6065
    %6067 = vset.pattern.permute.xlu0 0
    %6068 = vperm.xlu0 %6067, %v5789
    %v6069 = vpop.permute.xlu0 %6068
    %6070 = vset.pattern.permute.xlu0 0
    %6071 = vperm.xlu0 %6070, %v5790
    %v6072 = vpop.permute.xlu0 %6071
    %6073 = vset.pattern.permute.xlu0 0
    %6074 = vperm.xlu0 %6073, %v5791
    %v6075 = vpop.permute.xlu0 %6074
    %6076 = vset.pattern.permute.xlu0 0
    %6077 = vperm.xlu0 %6076, %v5792
    %v6078 = vpop.permute.xlu0 %6077
    %6079 = vset.pattern.permute.xlu0 0
    %6080 = vperm.xlu0 %6079, %v5793
    %v6081 = vpop.permute.xlu0 %6080
    %6082 = vset.pattern.permute.xlu0 0
    %6083 = vperm.xlu0 %6082, %v5794
    %v6084 = vpop.permute.xlu0 %6083
    %6085 = vset.pattern.permute.xlu0 0
    %6086 = vperm.xlu0 %6085, %v5795
    %v6087 = vpop.permute.xlu0 %6086
    %6088 = vset.pattern.permute.xlu0 0
    %6089 = vperm.xlu0 %6088, %v5796
    %v6090 = vpop.permute.xlu0 %6089
    %6091 = vset.pattern.permute.xlu0 0
    %6092 = vperm.xlu0 %6091, %v5797
    %v6093 = vpop.permute.xlu0 %6092
    %6094 = vset.pattern.permute.xlu0 0
    %6095 = vperm.xlu0 %6094, %v5798
    %v6096 = vpop.permute.xlu0 %6095
    %6097 = vset.pattern.permute.xlu0 0
    %6098 = vperm.xlu0 %6097, %v5799
    %v6099 = vpop.permute.xlu0 %6098
    %6100 = vset.pattern.permute.xlu0 0
    %6101 = vperm.xlu0 %6100, %v5800
    %v6102 = vpop.permute.xlu0 %6101
    %6103 = vset.pattern.permute.xlu0 0
    %6104 = vperm.xlu0 %6103, %v5801
    %v6105 = vpop.permute.xlu0 %6104
    %6106 = vset.pattern.permute.xlu0 0
    %6107 = vperm.xlu0 %6106, %v5802
    %v6108 = vpop.permute.xlu0 %6107
    %6109 = vset.pattern.permute.xlu0 0
    %6110 = vperm.xlu0 %6109, %v5803
    %v6111 = vpop.permute.xlu0 %6110
    %6112 = vset.pattern.permute.xlu0 0
    %6113 = vperm.xlu0 %6112, %v5804
    %v6114 = vpop.permute.xlu0 %6113
    %6115 = vset.pattern.permute.xlu0 0
    %6116 = vperm.xlu0 %6115, %v5805
    %v6117 = vpop.permute.xlu0 %6116
    %6118 = vset.pattern.permute.xlu0 0
    %6119 = vperm.xlu0 %6118, %v5806
    %v6120 = vpop.permute.xlu0 %6119
    %6121 = vset.pattern.permute.xlu0 0
    %6122 = vperm.xlu0 %6121, %v5807
    %v6123 = vpop.permute.xlu0 %6122
    %6124 = vset.pattern.permute.xlu0 0
    %6125 = vperm.xlu0 %6124, %v5808
    %v6126 = vpop.permute.xlu0 %6125
    %6127 = vset.pattern.permute.xlu0 0
    %6128 = vperm.xlu0 %6127, %v5809
    %v6129 = vpop.permute.xlu0 %6128
    %6130 = vset.pattern.permute.xlu0 0
    %6131 = vperm.xlu0 %6130, %v5810
    %v6132 = vpop.permute.xlu0 %6131
    %6133 = vset.pattern.permute.xlu0 0
    %6134 = vperm.xlu0 %6133, %v5811
    %v6135 = vpop.permute.xlu0 %6134
    %6136 = vset.pattern.permute.xlu0 0
    %6137 = vperm.xlu0 %6136, %v5812
    %v6138 = vpop.permute.xlu0 %6137
    %6139 = vset.pattern.permute.xlu0 0
    %6140 = vperm.xlu0 %6139, %v5813
    %v6141 = vpop.permute.xlu0 %6140
    %6142 = vset.pattern.permute.xlu0 0
    %6143 = vperm.xlu0 %6142, %v5814
    %v6144 = vpop.permute.xlu0 %6143
    %6145 = vset.pattern.permute.xlu0 0
    %6146 = vperm.xlu0 %6145, %v5815
    %v6147 = vpop.permute.xlu0 %6146
    %6148 = vset.pattern.permute.xlu0 0
    %6149 = vperm.xlu0 %6148, %v5816
    %v6150 = vpop.permute.xlu0 %6149
    %6151 = vset.pattern.permute.xlu0 0
    %6152 = vperm.xlu0 %6151, %v5817
    %v6153 = vpop.permute.xlu0 %6152
    %6154 = vset.pattern.permute.xlu0 0
    %6155 = vperm.xlu0 %6154, %v5818
    %v6156 = vpop.permute.xlu0 %6155
    %6157 = vset.pattern.permute.xlu0 0
    %6158 = vperm.xlu0 %6157, %v5819
    %v6159 = vpop.permute.xlu0 %6158
    %6160 = vset.pattern.permute.xlu0 0
    %6161 = vperm.xlu0 %6160, %v5820
    %v6162 = vpop.permute.xlu0 %6161
    %6163 = vset.pattern.permute.xlu0 0
    %6164 = vperm.xlu0 %6163, %v5821
    %v6165 = vpop.permute.xlu0 %6164
    %6166 = vset.pattern.permute.xlu0 0
    %6167 = vperm.xlu0 %6166, %v5822
    %v6168 = vpop.permute.xlu0 %6167
    %6169 = vset.pattern.permute.xlu0 0
    %6170 = vperm.xlu0 %6169, %v5823
    %v6171 = vpop.permute.xlu0 %6170
    %6172 = vset.pattern.permute.xlu0 0
    %6173 = vperm.xlu0 %6172, %v5824
    %v6174 = vpop.permute.xlu0 %6173
    %6175 = vset.pattern.permute.xlu0 0
    %6176 = vperm.xlu0 %6175, %v5825
    %v6177 = vpop.permute.xlu0 %6176
    %6178 = vset.pattern.permute.xlu0 0
    %6179 = vperm.xlu0 %6178, %v5826
    %v6180 = vpop.permute.xlu0 %6179
    %6181 = vset.pattern.permute.xlu0 0
    %6182 = vperm.xlu0 %6181, %v5827
    %v6183 = vpop.permute.xlu0 %6182
    %6184 = vset.pattern.permute.xlu0 0
    %6185 = vperm.xlu0 %6184, %v5828
    %v6186 = vpop.permute.xlu0 %6185
    %6187 = vset.pattern.permute.xlu0 0
    %6188 = vperm.xlu0 %6187, %v5829
    %v6189 = vpop.permute.xlu0 %6188
    %6190 = vset.pattern.permute.xlu0 0
    %6191 = vperm.xlu0 %6190, %v5830
    %v6192 = vpop.permute.xlu0 %6191
    %6193 = vset.pattern.permute.xlu0 0
    %6194 = vperm.xlu0 %6193, %v5831
    %v6195 = vpop.permute.xlu0 %6194
    %6196 = vset.pattern.permute.xlu0 0
    %6197 = vperm.xlu0 %6196, %v5832
    %v6198 = vpop.permute.xlu0 %6197
    %6199 = vset.pattern.permute.xlu0 0
    %6200 = vperm.xlu0 %6199, %v5833
    %v6201 = vpop.permute.xlu0 %6200
    %6202 = vset.pattern.permute.xlu0 0
    %6203 = vperm.xlu0 %6202, %v5834
    %v6204 = vpop.permute.xlu0 %6203
    %6205 = vset.pattern.permute.xlu0 0
    %6206 = vperm.xlu0 %6205, %v5835
    %v6207 = vpop.permute.xlu0 %6206
    %6208 = vset.pattern.permute.xlu0 0
    %6209 = vperm.xlu0 %6208, %v5836
    %v6210 = vpop.permute.xlu0 %6209
    %6211 = vset.pattern.permute.xlu0 0
    %6212 = vperm.xlu0 %6211, %v5837
    %v6213 = vpop.permute.xlu0 %6212
    %6214 = vset.pattern.permute.xlu0 0
    %6215 = vperm.xlu0 %6214, %v5838
    %v6216 = vpop.permute.xlu0 %6215
    %6217 = vset.pattern.permute.xlu0 0
    %6218 = vperm.xlu0 %6217, %v5839
    %v6219 = vpop.permute.xlu0 %6218
    %6220 = vset.pattern.permute.xlu0 0
    %6221 = vperm.xlu0 %6220, %v5840
    %v6222 = vpop.permute.xlu0 %6221
    %6223 = vset.pattern.permute.xlu0 0
    %6224 = vperm.xlu0 %6223, %v5841
    %v6225 = vpop.permute.xlu0 %6224
    %6226 = vset.pattern.permute.xlu0 0
    %6227 = vperm.xlu0 %6226, %v5842
    %v6228 = vpop.permute.xlu0 %6227
    %6229 = vset.pattern.permute.xlu0 0
    %6230 = vperm.xlu0 %6229, %v5843
    %v6231 = vpop.permute.xlu0 %6230
    %6232 = vset.pattern.permute.xlu0 0
    %6233 = vperm.xlu0 %6232, %v5844
    %v6234 = vpop.permute.xlu0 %6233
    %6235 = vset.pattern.permute.xlu0 0
    %6236 = vperm.xlu0 %6235, %v5845
    %v6237 = vpop.permute.xlu0 %6236
    %6238 = vset.pattern.permute.xlu0 0
    %6239 = vperm.xlu0 %6238, %v5846
    %v6240 = vpop.permute.xlu0 %6239
    %6241 = vset.pattern.permute.xlu0 0
    %6242 = vperm.xlu0 %6241, %v5847
    %v6243 = vpop.permute.xlu0 %6242
    %6244 = vset.pattern.permute.xlu0 0
    %6245 = vperm.xlu0 %6244, %v5848
    %v6246 = vpop.permute.xlu0 %6245
    %6247 = vset.pattern.permute.xlu0 0
    %6248 = vperm.xlu0 %6247, %v5849
    %v6249 = vpop.permute.xlu0 %6248
    %6250 = vset.pattern.permute.xlu0 0
    %6251 = vperm.xlu0 %6250, %v5850
    %v6252 = vpop.permute.xlu0 %6251
    %6253 = vset.pattern.permute.xlu0 0
    %6254 = vperm.xlu0 %6253, %v5851
    %v6255 = vpop.permute.xlu0 %6254
    %6256 = vset.pattern.permute.xlu0 0
    %6257 = vperm.xlu0 %6256, %v5852
    %v6258 = vpop.permute.xlu0 %6257
    %6259 = vset.pattern.permute.xlu0 0
    %6260 = vperm.xlu0 %6259, %v5853
    %v6261 = vpop.permute.xlu0 %6260
    %6262 = vset.pattern.permute.xlu0 0
    %6263 = vperm.xlu0 %6262, %v5854
    %v6264 = vpop.permute.xlu0 %6263
    %6265 = vset.pattern.permute.xlu0 0
    %6266 = vperm.xlu0 %6265, %v5855
    %v6267 = vpop.permute.xlu0 %6266
    %6268 = vset.pattern.permute.xlu0 0
    %6269 = vperm.xlu0 %6268, %v5856
    %v6270 = vpop.permute.xlu0 %6269
    %6271 = vset.pattern.permute.xlu0 0
    %6272 = vperm.xlu0 %6271, %v5857
    %v6273 = vpop.permute.xlu0 %6272
    %6274 = vset.pattern.permute.xlu0 0
    %6275 = vperm.xlu0 %6274, %v5858
    %v6276 = vpop.permute.xlu0 %6275
    %6277 = vset.pattern.permute.xlu0 0
    %6278 = vperm.xlu0 %6277, %v5859
    %v6279 = vpop.permute.xlu0 %6278
    %6280 = vset.pattern.permute.xlu0 0
    %6281 = vperm.xlu0 %6280, %v5860
    %v6282 = vpop.permute.xlu0 %6281
    %6283 = vset.pattern.permute.xlu0 0
    %6284 = vperm.xlu0 %6283, %v5861
    %v6285 = vpop.permute.xlu0 %6284
    %6286 = vset.pattern.permute.xlu0 0
    %6287 = vperm.xlu0 %6286, %v5862
    %v6288 = vpop.permute.xlu0 %6287
    %6289 = vset.pattern.permute.xlu0 0
    %6290 = vperm.xlu0 %6289, %v5863
    %v6291 = vpop.permute.xlu0 %6290
    %6292 = vset.pattern.permute.xlu0 0
    %6293 = vperm.xlu0 %6292, %v5864
    %v6294 = vpop.permute.xlu0 %6293
    %6295 = vset.pattern.permute.xlu0 0
    %6296 = vperm.xlu0 %6295, %v5865
    %v6297 = vpop.permute.xlu0 %6296
    %6298 = vset.pattern.permute.xlu0 0
    %6299 = vperm.xlu0 %6298, %v5866
    %v6300 = vpop.permute.xlu0 %6299
    %6301 = vset.pattern.permute.xlu0 0
    %6302 = vperm.xlu0 %6301, %v5867
    %v6303 = vpop.permute.xlu0 %6302
    %6304 = vset.pattern.permute.xlu0 0
    %6305 = vperm.xlu0 %6304, %v5868
    %v6306 = vpop.permute.xlu0 %6305
    %6307 = vset.pattern.permute.xlu0 0
    %6308 = vperm.xlu0 %6307, %v5869
    %v6309 = vpop.permute.xlu0 %6308
    %6310 = vset.pattern.permute.xlu0 0
    %6311 = vperm.xlu0 %6310, %v5870
    %v6312 = vpop.permute.xlu0 %6311
    %6313 = vset.pattern.permute.xlu0 0
    %6314 = vperm.xlu0 %6313, %v5871
    %v6315 = vpop.permute.xlu0 %6314
    %6316 = vset.pattern.permute.xlu0 0
    %6317 = vperm.xlu0 %6316, %v5872
    %v6318 = vpop.permute.xlu0 %6317
    %6319 = vset.pattern.permute.xlu0 0
    %6320 = vperm.xlu0 %6319, %v5873
    %v6321 = vpop.permute.xlu0 %6320
    %6322 = vset.pattern.permute.xlu0 0
    %6323 = vperm.xlu0 %6322, %v5874
    %v6324 = vpop.permute.xlu0 %6323
    %6325 = vset.pattern.permute.xlu0 0
    %6326 = vperm.xlu0 %6325, %v5875
    %v6327 = vpop.permute.xlu0 %6326
    %6328 = vset.pattern.permute.xlu0 0
    %6329 = vperm.xlu0 %6328, %v5876
    %v6330 = vpop.permute.xlu0 %6329
    %6331 = vset.pattern.permute.xlu0 0
    %6332 = vperm.xlu0 %6331, %v5877
    %v6333 = vpop.permute.xlu0 %6332
    %6334 = vset.pattern.permute.xlu0 0
    %6335 = vperm.xlu0 %6334, %v5878
    %v6336 = vpop.permute.xlu0 %6335
    %6337 = vset.pattern.permute.xlu0 0
    %6338 = vperm.xlu0 %6337, %v5879
    %v6339 = vpop.permute.xlu0 %6338
    %6340 = vset.pattern.permute.xlu0 0
    %6341 = vperm.xlu0 %6340, %v5880
    %v6342 = vpop.permute.xlu0 %6341
    %6343 = vset.pattern.permute.xlu0 0
    %6344 = vperm.xlu0 %6343, %v5881
    %v6345 = vpop.permute.xlu0 %6344
    %6346 = vset.pattern.permute.xlu0 0
    %6347 = vperm.xlu0 %6346, %v5882
    %v6348 = vpop.permute.xlu0 %6347
    %6349 = vset.pattern.permute.xlu0 0
    %6350 = vperm.xlu0 %6349, %v5883
    %v6351 = vpop.permute.xlu0 %6350
    %6352 = vset.pattern.permute.xlu0 0
    %6353 = vperm.xlu0 %6352, %v5884
    %v6354 = vpop.permute.xlu0 %6353
    %6355 = vset.pattern.permute.xlu0 0
    %6356 = vperm.xlu0 %6355, %v5885
    %v6357 = vpop.permute.xlu0 %6356
    %6358 = vset.pattern.permute.xlu0 0
    %6359 = vperm.xlu0 %6358, %v5886
    %v6360 = vpop.permute.xlu0 %6359
    %6361 = vset.pattern.permute.xlu0 0
    %6362 = vperm.xlu0 %6361, %v5887
    %v6363 = vpop.permute.xlu0 %6362
    %6364 = vset.pattern.permute.xlu0 0
    %6365 = vperm.xlu0 %6364, %v5888
    %v6366 = vpop.permute.xlu0 %6365
    %6367 = vset.pattern.permute.xlu0 0
    %6368 = vperm.xlu0 %6367, %v5889
    %v6369 = vpop.permute.xlu0 %6368
    %6370 = vset.pattern.permute.xlu0 0
    %6371 = vperm.xlu0 %6370, %v5890
    %v6372 = vpop.permute.xlu0 %6371
    %6373 = vset.pattern.permute.xlu0 0
    %6374 = vperm.xlu0 %6373, %v5891
    %v6375 = vpop.permute.xlu0 %6374
    %6376 = vset.pattern.permute.xlu0 0
    %6377 = vperm.xlu0 %6376, %v5892
    %v6378 = vpop.permute.xlu0 %6377
    %6379 = vset.pattern.permute.xlu0 0
    %6380 = vperm.xlu0 %6379, %v5893
    %v6381 = vpop.permute.xlu0 %6380
    %6382 = vset.pattern.permute.xlu0 0
    %6383 = vperm.xlu0 %6382, %v5894
    %v6384 = vpop.permute.xlu0 %6383
    %6385 = vset.pattern.permute.xlu0 0
    %6386 = vperm.xlu0 %6385, %v5895
    %v6387 = vpop.permute.xlu0 %6386
    %6388 = vset.pattern.permute.xlu0 0
    %6389 = vperm.xlu0 %6388, %v5896
    %v6390 = vpop.permute.xlu0 %6389
    %6391 = vset.pattern.permute.xlu0 0
    %6392 = vperm.xlu0 %6391, %v5897
    %v6393 = vpop.permute.xlu0 %6392
    %6394 = vset.pattern.permute.xlu0 0
    %6395 = vperm.xlu0 %6394, %v5898
    %v6396 = vpop.permute.xlu0 %6395
    %6397 = vset.pattern.permute.xlu0 0
    %6398 = vperm.xlu0 %6397, %v5899
    %v6399 = vpop.permute.xlu0 %6398
    %6400 = vset.pattern.permute.xlu0 0
    %6401 = vperm.xlu0 %6400, %v5900
    %v6402 = vpop.permute.xlu0 %6401
    %6403 = vset.pattern.permute.xlu0 0
    %6404 = vperm.xlu0 %6403, %v5901
    %v6405 = vpop.permute.xlu0 %6404
    %6406 = vset.pattern.permute.xlu0 0
    %6407 = vperm.xlu0 %6406, %v5902
    %v6408 = vpop.permute.xlu0 %6407
    %6409 = vset.pattern.permute.xlu0 0
    %6410 = vperm.xlu0 %6409, %v5903
    %v6411 = vpop.permute.xlu0 %6410
    %6412 = vset.pattern.permute.xlu0 0
    %6413 = vperm.xlu0 %6412, %v5904
    %v6414 = vpop.permute.xlu0 %6413
    %6415 = vset.pattern.permute.xlu0 0
    %6416 = vperm.xlu0 %6415, %v5905
    %v6417 = vpop.permute.xlu0 %6416
    %v6418 = vlaneseq
    %v6419 = vshrl.u32 %v6418, 7
    %v6420 = vsub.s32 %v5099, %v6419
    %v6421 = vrot.slane %v6036, %v6420
    %v6422 = vlaneseq
    %v6423 = vshrl.u32 %v6422, 7
    %v6424 = vsub.s32 %v5104, %v6423
    %v6425 = vrot.slane %v6039, %v6424
    %v6426 = vsel %vm5109, %v6425, %v6421
    %v6427 = vlaneseq
    %v6428 = vshrl.u32 %v6427, 7
    %v6429 = vsub.s32 %v5111, %v6428
    %v6430 = vrot.slane %v6042, %v6429
    %v6431 = vsel %vm5116, %v6430, %v6426
    %v6432 = vlaneseq
    %v6433 = vshrl.u32 %v6432, 7
    %v6434 = vsub.s32 %v5118, %v6433
    %v6435 = vrot.slane %v6045, %v6434
    %v6436 = vsel %vm5123, %v6435, %v6431
    %v6437 = vlaneseq
    %v6438 = vshrl.u32 %v6437, 7
    %v6439 = vsub.s32 %v5125, %v6438
    %v6440 = vrot.slane %v6048, %v6439
    %v6441 = vsel %vm5130, %v6440, %v6436
    %v6442 = vlaneseq
    %v6443 = vshrl.u32 %v6442, 7
    %v6444 = vsub.s32 %v5132, %v6443
    %v6445 = vrot.slane %v6051, %v6444
    %v6446 = vsel %vm5137, %v6445, %v6441
    %v6447 = vlaneseq
    %v6448 = vshrl.u32 %v6447, 7
    %v6449 = vsub.s32 %v5139, %v6448
    %v6450 = vrot.slane %v6054, %v6449
    %v6451 = vsel %vm5144, %v6450, %v6446
    %v6452 = vlaneseq
    %v6453 = vshrl.u32 %v6452, 7
    %v6454 = vsub.s32 %v5146, %v6453
    %v6455 = vrot.slane %v6057, %v6454
    %v6456 = vsel %vm5151, %v6455, %v6451
    %v6457 = vlaneseq
    %v6458 = vshrl.u32 %v6457, 7
    %v6459 = vsub.s32 %v5153, %v6458
    %v6460 = vrot.slane %v6060, %v6459
    %v6461 = vsel %vm5158, %v6460, %v6456
    %v6462 = vlaneseq
    %v6463 = vshrl.u32 %v6462, 7
    %v6464 = vsub.s32 %v5160, %v6463
    %v6465 = vrot.slane %v6063, %v6464
    %v6466 = vsel %vm5165, %v6465, %v6461
    %v6467 = vlaneseq
    %v6468 = vshrl.u32 %v6467, 7
    %v6469 = vsub.s32 %v5167, %v6468
    %v6470 = vrot.slane %v6066, %v6469
    %v6471 = vsel %vm5172, %v6470, %v6466
    %v6472 = vlaneseq
    %v6473 = vshrl.u32 %v6472, 7
    %v6474 = vsub.s32 %v5174, %v6473
    %v6475 = vrot.slane %v6069, %v6474
    %v6476 = vsel %vm5179, %v6475, %v6471
    %v6477 = vlaneseq
    %v6478 = vshrl.u32 %v6477, 7
    %v6479 = vsub.s32 %v5181, %v6478
    %v6480 = vrot.slane %v6072, %v6479
    %v6481 = vsel %vm5186, %v6480, %v6476
    %v6482 = vlaneseq
    %v6483 = vshrl.u32 %v6482, 7
    %v6484 = vsub.s32 %v5188, %v6483
    %v6485 = vrot.slane %v6075, %v6484
    %v6486 = vsel %vm5193, %v6485, %v6481
    %v6487 = vlaneseq
    %v6488 = vshrl.u32 %v6487, 7
    %v6489 = vsub.s32 %v5195, %v6488
    %v6490 = vrot.slane %v6078, %v6489
    %v6491 = vsel %vm5200, %v6490, %v6486
    %v6492 = vlaneseq
    %v6493 = vshrl.u32 %v6492, 7
    %v6494 = vsub.s32 %v5202, %v6493
    %v6495 = vrot.slane %v6081, %v6494
    %v6496 = vsel %vm5207, %v6495, %v6491
    %v6497 = vlaneseq
    %v6498 = vshrl.u32 %v6497, 7
    %v6499 = vsub.s32 %v5099, %v6498
    %v6500 = vrot.slane %v6084, %v6499
    %v6501 = vlaneseq
    %v6502 = vshrl.u32 %v6501, 7
    %v6503 = vsub.s32 %v5104, %v6502
    %v6504 = vrot.slane %v6087, %v6503
    %v6505 = vsel %vm5109, %v6504, %v6500
    %v6506 = vlaneseq
    %v6507 = vshrl.u32 %v6506, 7
    %v6508 = vsub.s32 %v5111, %v6507
    %v6509 = vrot.slane %v6090, %v6508
    %v6510 = vsel %vm5116, %v6509, %v6505
    %v6511 = vlaneseq
    %v6512 = vshrl.u32 %v6511, 7
    %v6513 = vsub.s32 %v5118, %v6512
    %v6514 = vrot.slane %v6093, %v6513
    %v6515 = vsel %vm5123, %v6514, %v6510
    %v6516 = vlaneseq
    %v6517 = vshrl.u32 %v6516, 7
    %v6518 = vsub.s32 %v5125, %v6517
    %v6519 = vrot.slane %v6096, %v6518
    %v6520 = vsel %vm5130, %v6519, %v6515
    %v6521 = vlaneseq
    %v6522 = vshrl.u32 %v6521, 7
    %v6523 = vsub.s32 %v5132, %v6522
    %v6524 = vrot.slane %v6099, %v6523
    %v6525 = vsel %vm5137, %v6524, %v6520
    %v6526 = vlaneseq
    %v6527 = vshrl.u32 %v6526, 7
    %v6528 = vsub.s32 %v5139, %v6527
    %v6529 = vrot.slane %v6102, %v6528
    %v6530 = vsel %vm5144, %v6529, %v6525
    %v6531 = vlaneseq
    %v6532 = vshrl.u32 %v6531, 7
    %v6533 = vsub.s32 %v5146, %v6532
    %v6534 = vrot.slane %v6105, %v6533
    %v6535 = vsel %vm5151, %v6534, %v6530
    %v6536 = vlaneseq
    %v6537 = vshrl.u32 %v6536, 7
    %v6538 = vsub.s32 %v5153, %v6537
    %v6539 = vrot.slane %v6108, %v6538
    %v6540 = vsel %vm5158, %v6539, %v6535
    %v6541 = vlaneseq
    %v6542 = vshrl.u32 %v6541, 7
    %v6543 = vsub.s32 %v5160, %v6542
    %v6544 = vrot.slane %v6111, %v6543
    %v6545 = vsel %vm5165, %v6544, %v6540
    %v6546 = vlaneseq
    %v6547 = vshrl.u32 %v6546, 7
    %v6548 = vsub.s32 %v5167, %v6547
    %v6549 = vrot.slane %v6114, %v6548
    %v6550 = vsel %vm5172, %v6549, %v6545
    %v6551 = vlaneseq
    %v6552 = vshrl.u32 %v6551, 7
    %v6553 = vsub.s32 %v5174, %v6552
    %v6554 = vrot.slane %v6117, %v6553
    %v6555 = vsel %vm5179, %v6554, %v6550
    %v6556 = vlaneseq
    %v6557 = vshrl.u32 %v6556, 7
    %v6558 = vsub.s32 %v5181, %v6557
    %v6559 = vrot.slane %v6120, %v6558
    %v6560 = vsel %vm5186, %v6559, %v6555
    %v6561 = vlaneseq
    %v6562 = vshrl.u32 %v6561, 7
    %v6563 = vsub.s32 %v5188, %v6562
    %v6564 = vrot.slane %v6123, %v6563
    %v6565 = vsel %vm5193, %v6564, %v6560
    %v6566 = vlaneseq
    %v6567 = vshrl.u32 %v6566, 7
    %v6568 = vsub.s32 %v5195, %v6567
    %v6569 = vrot.slane %v6126, %v6568
    %v6570 = vsel %vm5200, %v6569, %v6565
    %v6571 = vlaneseq
    %v6572 = vshrl.u32 %v6571, 7
    %v6573 = vsub.s32 %v5202, %v6572
    %v6574 = vrot.slane %v6129, %v6573
    %v6575 = vsel %vm5207, %v6574, %v6570
    %v6576 = vlaneseq
    %v6577 = vshrl.u32 %v6576, 7
    %v6578 = vsub.s32 %v5099, %v6577
    %v6579 = vrot.slane %v6132, %v6578
    %v6580 = vlaneseq
    %v6581 = vshrl.u32 %v6580, 7
    %v6582 = vsub.s32 %v5104, %v6581
    %v6583 = vrot.slane %v6135, %v6582
    %v6584 = vsel %vm5109, %v6583, %v6579
    %v6585 = vlaneseq
    %v6586 = vshrl.u32 %v6585, 7
    %v6587 = vsub.s32 %v5111, %v6586
    %v6588 = vrot.slane %v6138, %v6587
    %v6589 = vsel %vm5116, %v6588, %v6584
    %v6590 = vlaneseq
    %v6591 = vshrl.u32 %v6590, 7
    %v6592 = vsub.s32 %v5118, %v6591
    %v6593 = vrot.slane %v6141, %v6592
    %v6594 = vsel %vm5123, %v6593, %v6589
    %v6595 = vlaneseq
    %v6596 = vshrl.u32 %v6595, 7
    %v6597 = vsub.s32 %v5125, %v6596
    %v6598 = vrot.slane %v6144, %v6597
    %v6599 = vsel %vm5130, %v6598, %v6594
    %v6600 = vlaneseq
    %v6601 = vshrl.u32 %v6600, 7
    %v6602 = vsub.s32 %v5132, %v6601
    %v6603 = vrot.slane %v6147, %v6602
    %v6604 = vsel %vm5137, %v6603, %v6599
    %v6605 = vlaneseq
    %v6606 = vshrl.u32 %v6605, 7
    %v6607 = vsub.s32 %v5139, %v6606
    %v6608 = vrot.slane %v6150, %v6607
    %v6609 = vsel %vm5144, %v6608, %v6604
    %v6610 = vlaneseq
    %v6611 = vshrl.u32 %v6610, 7
    %v6612 = vsub.s32 %v5146, %v6611
    %v6613 = vrot.slane %v6153, %v6612
    %v6614 = vsel %vm5151, %v6613, %v6609
    %v6615 = vlaneseq
    %v6616 = vshrl.u32 %v6615, 7
    %v6617 = vsub.s32 %v5153, %v6616
    %v6618 = vrot.slane %v6156, %v6617
    %v6619 = vsel %vm5158, %v6618, %v6614
    %v6620 = vlaneseq
    %v6621 = vshrl.u32 %v6620, 7
    %v6622 = vsub.s32 %v5160, %v6621
    %v6623 = vrot.slane %v6159, %v6622
    %v6624 = vsel %vm5165, %v6623, %v6619
    %v6625 = vlaneseq
    %v6626 = vshrl.u32 %v6625, 7
    %v6627 = vsub.s32 %v5167, %v6626
    %v6628 = vrot.slane %v6162, %v6627
    %v6629 = vsel %vm5172, %v6628, %v6624
    %v6630 = vlaneseq
    %v6631 = vshrl.u32 %v6630, 7
    %v6632 = vsub.s32 %v5174, %v6631
    %v6633 = vrot.slane %v6165, %v6632
    %v6634 = vsel %vm5179, %v6633, %v6629
    %v6635 = vlaneseq
    %v6636 = vshrl.u32 %v6635, 7
    %v6637 = vsub.s32 %v5181, %v6636
    %v6638 = vrot.slane %v6168, %v6637
    %v6639 = vsel %vm5186, %v6638, %v6634
    %v6640 = vlaneseq
    %v6641 = vshrl.u32 %v6640, 7
    %v6642 = vsub.s32 %v5188, %v6641
    %v6643 = vrot.slane %v6171, %v6642
    %v6644 = vsel %vm5193, %v6643, %v6639
    %v6645 = vlaneseq
    %v6646 = vshrl.u32 %v6645, 7
    %v6647 = vsub.s32 %v5195, %v6646
    %v6648 = vrot.slane %v6174, %v6647
    %v6649 = vsel %vm5200, %v6648, %v6644
    %v6650 = vlaneseq
    %v6651 = vshrl.u32 %v6650, 7
    %v6652 = vsub.s32 %v5202, %v6651
    %v6653 = vrot.slane %v6177, %v6652
    %v6654 = vsel %vm5207, %v6653, %v6649
    %v6655 = vlaneseq
    %v6656 = vshrl.u32 %v6655, 7
    %v6657 = vsub.s32 %v5099, %v6656
    %v6658 = vrot.slane %v6180, %v6657
    %v6659 = vlaneseq
    %v6660 = vshrl.u32 %v6659, 7
    %v6661 = vsub.s32 %v5104, %v6660
    %v6662 = vrot.slane %v6183, %v6661
    %v6663 = vsel %vm5109, %v6662, %v6658
    %v6664 = vlaneseq
    %v6665 = vshrl.u32 %v6664, 7
    %v6666 = vsub.s32 %v5111, %v6665
    %v6667 = vrot.slane %v6186, %v6666
    %v6668 = vsel %vm5116, %v6667, %v6663
    %v6669 = vlaneseq
    %v6670 = vshrl.u32 %v6669, 7
    %v6671 = vsub.s32 %v5118, %v6670
    %v6672 = vrot.slane %v6189, %v6671
    %v6673 = vsel %vm5123, %v6672, %v6668
    %v6674 = vlaneseq
    %v6675 = vshrl.u32 %v6674, 7
    %v6676 = vsub.s32 %v5125, %v6675
    %v6677 = vrot.slane %v6192, %v6676
    %v6678 = vsel %vm5130, %v6677, %v6673
    %v6679 = vlaneseq
    %v6680 = vshrl.u32 %v6679, 7
    %v6681 = vsub.s32 %v5132, %v6680
    %v6682 = vrot.slane %v6195, %v6681
    %v6683 = vsel %vm5137, %v6682, %v6678
    %v6684 = vlaneseq
    %v6685 = vshrl.u32 %v6684, 7
    %v6686 = vsub.s32 %v5139, %v6685
    %v6687 = vrot.slane %v6198, %v6686
    %v6688 = vsel %vm5144, %v6687, %v6683
    %v6689 = vlaneseq
    %v6690 = vshrl.u32 %v6689, 7
    %v6691 = vsub.s32 %v5146, %v6690
    %v6692 = vrot.slane %v6201, %v6691
    %v6693 = vsel %vm5151, %v6692, %v6688
    %v6694 = vlaneseq
    %v6695 = vshrl.u32 %v6694, 7
    %v6696 = vsub.s32 %v5153, %v6695
    %v6697 = vrot.slane %v6204, %v6696
    %v6698 = vsel %vm5158, %v6697, %v6693
    %v6699 = vlaneseq
    %v6700 = vshrl.u32 %v6699, 7
    %v6701 = vsub.s32 %v5160, %v6700
    %v6702 = vrot.slane %v6207, %v6701
    %v6703 = vsel %vm5165, %v6702, %v6698
    %v6704 = vlaneseq
    %v6705 = vshrl.u32 %v6704, 7
    %v6706 = vsub.s32 %v5167, %v6705
    %v6707 = vrot.slane %v6210, %v6706
    %v6708 = vsel %vm5172, %v6707, %v6703
    %v6709 = vlaneseq
    %v6710 = vshrl.u32 %v6709, 7
    %v6711 = vsub.s32 %v5174, %v6710
    %v6712 = vrot.slane %v6213, %v6711
    %v6713 = vsel %vm5179, %v6712, %v6708
    %v6714 = vlaneseq
    %v6715 = vshrl.u32 %v6714, 7
    %v6716 = vsub.s32 %v5181, %v6715
    %v6717 = vrot.slane %v6216, %v6716
    %v6718 = vsel %vm5186, %v6717, %v6713
    %v6719 = vlaneseq
    %v6720 = vshrl.u32 %v6719, 7
    %v6721 = vsub.s32 %v5188, %v6720
    %v6722 = vrot.slane %v6219, %v6721
    %v6723 = vsel %vm5193, %v6722, %v6718
    %v6724 = vlaneseq
    %v6725 = vshrl.u32 %v6724, 7
    %v6726 = vsub.s32 %v5195, %v6725
    %v6727 = vrot.slane %v6222, %v6726
    %v6728 = vsel %vm5200, %v6727, %v6723
    %v6729 = vlaneseq
    %v6730 = vshrl.u32 %v6729, 7
    %v6731 = vsub.s32 %v5202, %v6730
    %v6732 = vrot.slane %v6225, %v6731
    %v6733 = vsel %vm5207, %v6732, %v6728
    %v6734 = vlaneseq
    %v6735 = vshrl.u32 %v6734, 7
    %v6736 = vsub.s32 %v5099, %v6735
    %v6737 = vrot.slane %v6228, %v6736
    %v6738 = vlaneseq
    %v6739 = vshrl.u32 %v6738, 7
    %v6740 = vsub.s32 %v5104, %v6739
    %v6741 = vrot.slane %v6231, %v6740
    %v6742 = vsel %vm5109, %v6741, %v6737
    %v6743 = vlaneseq
    %v6744 = vshrl.u32 %v6743, 7
    %v6745 = vsub.s32 %v5111, %v6744
    %v6746 = vrot.slane %v6234, %v6745
    %v6747 = vsel %vm5116, %v6746, %v6742
    %v6748 = vlaneseq
    %v6749 = vshrl.u32 %v6748, 7
    %v6750 = vsub.s32 %v5118, %v6749
    %v6751 = vrot.slane %v6237, %v6750
    %v6752 = vsel %vm5123, %v6751, %v6747
    %v6753 = vlaneseq
    %v6754 = vshrl.u32 %v6753, 7
    %v6755 = vsub.s32 %v5125, %v6754
    %v6756 = vrot.slane %v6240, %v6755
    %v6757 = vsel %vm5130, %v6756, %v6752
    %v6758 = vlaneseq
    %v6759 = vshrl.u32 %v6758, 7
    %v6760 = vsub.s32 %v5132, %v6759
    %v6761 = vrot.slane %v6243, %v6760
    %v6762 = vsel %vm5137, %v6761, %v6757
    %v6763 = vlaneseq
    %v6764 = vshrl.u32 %v6763, 7
    %v6765 = vsub.s32 %v5139, %v6764
    %v6766 = vrot.slane %v6246, %v6765
    %v6767 = vsel %vm5144, %v6766, %v6762
    %v6768 = vlaneseq
    %v6769 = vshrl.u32 %v6768, 7
    %v6770 = vsub.s32 %v5146, %v6769
    %v6771 = vrot.slane %v6249, %v6770
    %v6772 = vsel %vm5151, %v6771, %v6767
    %v6773 = vlaneseq
    %v6774 = vshrl.u32 %v6773, 7
    %v6775 = vsub.s32 %v5153, %v6774
    %v6776 = vrot.slane %v6252, %v6775
    %v6777 = vsel %vm5158, %v6776, %v6772
    %v6778 = vlaneseq
    %v6779 = vshrl.u32 %v6778, 7
    %v6780 = vsub.s32 %v5160, %v6779
    %v6781 = vrot.slane %v6255, %v6780
    %v6782 = vsel %vm5165, %v6781, %v6777
    %v6783 = vlaneseq
    %v6784 = vshrl.u32 %v6783, 7
    %v6785 = vsub.s32 %v5167, %v6784
    %v6786 = vrot.slane %v6258, %v6785
    %v6787 = vsel %vm5172, %v6786, %v6782
    %v6788 = vlaneseq
    %v6789 = vshrl.u32 %v6788, 7
    %v6790 = vsub.s32 %v5174, %v6789
    %v6791 = vrot.slane %v6261, %v6790
    %v6792 = vsel %vm5179, %v6791, %v6787
    %v6793 = vlaneseq
    %v6794 = vshrl.u32 %v6793, 7
    %v6795 = vsub.s32 %v5181, %v6794
    %v6796 = vrot.slane %v6264, %v6795
    %v6797 = vsel %vm5186, %v6796, %v6792
    %v6798 = vlaneseq
    %v6799 = vshrl.u32 %v6798, 7
    %v6800 = vsub.s32 %v5188, %v6799
    %v6801 = vrot.slane %v6267, %v6800
    %v6802 = vsel %vm5193, %v6801, %v6797
    %v6803 = vlaneseq
    %v6804 = vshrl.u32 %v6803, 7
    %v6805 = vsub.s32 %v5195, %v6804
    %v6806 = vrot.slane %v6270, %v6805
    %v6807 = vsel %vm5200, %v6806, %v6802
    %v6808 = vlaneseq
    %v6809 = vshrl.u32 %v6808, 7
    %v6810 = vsub.s32 %v5202, %v6809
    %v6811 = vrot.slane %v6273, %v6810
    %v6812 = vsel %vm5207, %v6811, %v6807
    %v6813 = vlaneseq
    %v6814 = vshrl.u32 %v6813, 7
    %v6815 = vsub.s32 %v5099, %v6814
    %v6816 = vrot.slane %v6276, %v6815
    %v6817 = vlaneseq
    %v6818 = vshrl.u32 %v6817, 7
    %v6819 = vsub.s32 %v5104, %v6818
    %v6820 = vrot.slane %v6279, %v6819
    %v6821 = vsel %vm5109, %v6820, %v6816
    %v6822 = vlaneseq
    %v6823 = vshrl.u32 %v6822, 7
    %v6824 = vsub.s32 %v5111, %v6823
    %v6825 = vrot.slane %v6282, %v6824
    %v6826 = vsel %vm5116, %v6825, %v6821
    %v6827 = vlaneseq
    %v6828 = vshrl.u32 %v6827, 7
    %v6829 = vsub.s32 %v5118, %v6828
    %v6830 = vrot.slane %v6285, %v6829
    %v6831 = vsel %vm5123, %v6830, %v6826
    %v6832 = vlaneseq
    %v6833 = vshrl.u32 %v6832, 7
    %v6834 = vsub.s32 %v5125, %v6833
    %v6835 = vrot.slane %v6288, %v6834
    %v6836 = vsel %vm5130, %v6835, %v6831
    %v6837 = vlaneseq
    %v6838 = vshrl.u32 %v6837, 7
    %v6839 = vsub.s32 %v5132, %v6838
    %v6840 = vrot.slane %v6291, %v6839
    %v6841 = vsel %vm5137, %v6840, %v6836
    %v6842 = vlaneseq
    %v6843 = vshrl.u32 %v6842, 7
    %v6844 = vsub.s32 %v5139, %v6843
    %v6845 = vrot.slane %v6294, %v6844
    %v6846 = vsel %vm5144, %v6845, %v6841
    %v6847 = vlaneseq
    %v6848 = vshrl.u32 %v6847, 7
    %v6849 = vsub.s32 %v5146, %v6848
    %v6850 = vrot.slane %v6297, %v6849
    %v6851 = vsel %vm5151, %v6850, %v6846
    %v6852 = vlaneseq
    %v6853 = vshrl.u32 %v6852, 7
    %v6854 = vsub.s32 %v5153, %v6853
    %v6855 = vrot.slane %v6300, %v6854
    %v6856 = vsel %vm5158, %v6855, %v6851
    %v6857 = vlaneseq
    %v6858 = vshrl.u32 %v6857, 7
    %v6859 = vsub.s32 %v5160, %v6858
    %v6860 = vrot.slane %v6303, %v6859
    %v6861 = vsel %vm5165, %v6860, %v6856
    %v6862 = vlaneseq
    %v6863 = vshrl.u32 %v6862, 7
    %v6864 = vsub.s32 %v5167, %v6863
    %v6865 = vrot.slane %v6306, %v6864
    %v6866 = vsel %vm5172, %v6865, %v6861
    %v6867 = vlaneseq
    %v6868 = vshrl.u32 %v6867, 7
    %v6869 = vsub.s32 %v5174, %v6868
    %v6870 = vrot.slane %v6309, %v6869
    %v6871 = vsel %vm5179, %v6870, %v6866
    %v6872 = vlaneseq
    %v6873 = vshrl.u32 %v6872, 7
    %v6874 = vsub.s32 %v5181, %v6873
    %v6875 = vrot.slane %v6312, %v6874
    %v6876 = vsel %vm5186, %v6875, %v6871
    %v6877 = vlaneseq
    %v6878 = vshrl.u32 %v6877, 7
    %v6879 = vsub.s32 %v5188, %v6878
    %v6880 = vrot.slane %v6315, %v6879
    %v6881 = vsel %vm5193, %v6880, %v6876
    %v6882 = vlaneseq
    %v6883 = vshrl.u32 %v6882, 7
    %v6884 = vsub.s32 %v5195, %v6883
    %v6885 = vrot.slane %v6318, %v6884
    %v6886 = vsel %vm5200, %v6885, %v6881
    %v6887 = vlaneseq
    %v6888 = vshrl.u32 %v6887, 7
    %v6889 = vsub.s32 %v5202, %v6888
    %v6890 = vrot.slane %v6321, %v6889
    %v6891 = vsel %vm5207, %v6890, %v6886
    %v6892 = vlaneseq
    %v6893 = vshrl.u32 %v6892, 7
    %v6894 = vsub.s32 %v5099, %v6893
    %v6895 = vrot.slane %v6324, %v6894
    %v6896 = vlaneseq
    %v6897 = vshrl.u32 %v6896, 7
    %v6898 = vsub.s32 %v5104, %v6897
    %v6899 = vrot.slane %v6327, %v6898
    %v6900 = vsel %vm5109, %v6899, %v6895
    %v6901 = vlaneseq
    %v6902 = vshrl.u32 %v6901, 7
    %v6903 = vsub.s32 %v5111, %v6902
    %v6904 = vrot.slane %v6330, %v6903
    %v6905 = vsel %vm5116, %v6904, %v6900
    %v6906 = vlaneseq
    %v6907 = vshrl.u32 %v6906, 7
    %v6908 = vsub.s32 %v5118, %v6907
    %v6909 = vrot.slane %v6333, %v6908
    %v6910 = vsel %vm5123, %v6909, %v6905
    %v6911 = vlaneseq
    %v6912 = vshrl.u32 %v6911, 7
    %v6913 = vsub.s32 %v5125, %v6912
    %v6914 = vrot.slane %v6336, %v6913
    %v6915 = vsel %vm5130, %v6914, %v6910
    %v6916 = vlaneseq
    %v6917 = vshrl.u32 %v6916, 7
    %v6918 = vsub.s32 %v5132, %v6917
    %v6919 = vrot.slane %v6339, %v6918
    %v6920 = vsel %vm5137, %v6919, %v6915
    %v6921 = vlaneseq
    %v6922 = vshrl.u32 %v6921, 7
    %v6923 = vsub.s32 %v5139, %v6922
    %v6924 = vrot.slane %v6342, %v6923
    %v6925 = vsel %vm5144, %v6924, %v6920
    %v6926 = vlaneseq
    %v6927 = vshrl.u32 %v6926, 7
    %v6928 = vsub.s32 %v5146, %v6927
    %v6929 = vrot.slane %v6345, %v6928
    %v6930 = vsel %vm5151, %v6929, %v6925
    %v6931 = vlaneseq
    %v6932 = vshrl.u32 %v6931, 7
    %v6933 = vsub.s32 %v5153, %v6932
    %v6934 = vrot.slane %v6348, %v6933
    %v6935 = vsel %vm5158, %v6934, %v6930
    %v6936 = vlaneseq
    %v6937 = vshrl.u32 %v6936, 7
    %v6938 = vsub.s32 %v5160, %v6937
    %v6939 = vrot.slane %v6351, %v6938
    %v6940 = vsel %vm5165, %v6939, %v6935
    %v6941 = vlaneseq
    %v6942 = vshrl.u32 %v6941, 7
    %v6943 = vsub.s32 %v5167, %v6942
    %v6944 = vrot.slane %v6354, %v6943
    %v6945 = vsel %vm5172, %v6944, %v6940
    %v6946 = vlaneseq
    %v6947 = vshrl.u32 %v6946, 7
    %v6948 = vsub.s32 %v5174, %v6947
    %v6949 = vrot.slane %v6357, %v6948
    %v6950 = vsel %vm5179, %v6949, %v6945
    %v6951 = vlaneseq
    %v6952 = vshrl.u32 %v6951, 7
    %v6953 = vsub.s32 %v5181, %v6952
    %v6954 = vrot.slane %v6360, %v6953
    %v6955 = vsel %vm5186, %v6954, %v6950
    %v6956 = vlaneseq
    %v6957 = vshrl.u32 %v6956, 7
    %v6958 = vsub.s32 %v5188, %v6957
    %v6959 = vrot.slane %v6363, %v6958
    %v6960 = vsel %vm5193, %v6959, %v6955
    %v6961 = vlaneseq
    %v6962 = vshrl.u32 %v6961, 7
    %v6963 = vsub.s32 %v5195, %v6962
    %v6964 = vrot.slane %v6366, %v6963
    %v6965 = vsel %vm5200, %v6964, %v6960
    %v6966 = vlaneseq
    %v6967 = vshrl.u32 %v6966, 7
    %v6968 = vsub.s32 %v5202, %v6967
    %v6969 = vrot.slane %v6369, %v6968
    %v6970 = vsel %vm5207, %v6969, %v6965
    %v6971 = vlaneseq
    %v6972 = vshrl.u32 %v6971, 7
    %v6973 = vsub.s32 %v5099, %v6972
    %v6974 = vrot.slane %v6372, %v6973
    %v6975 = vlaneseq
    %v6976 = vshrl.u32 %v6975, 7
    %v6977 = vsub.s32 %v5104, %v6976
    %v6978 = vrot.slane %v6375, %v6977
    %v6979 = vsel %vm5109, %v6978, %v6974
    %v6980 = vlaneseq
    %v6981 = vshrl.u32 %v6980, 7
    %v6982 = vsub.s32 %v5111, %v6981
    %v6983 = vrot.slane %v6378, %v6982
    %v6984 = vsel %vm5116, %v6983, %v6979
    %v6985 = vlaneseq
    %v6986 = vshrl.u32 %v6985, 7
    %v6987 = vsub.s32 %v5118, %v6986
    %v6988 = vrot.slane %v6381, %v6987
    %v6989 = vsel %vm5123, %v6988, %v6984
    %v6990 = vlaneseq
    %v6991 = vshrl.u32 %v6990, 7
    %v6992 = vsub.s32 %v5125, %v6991
    %v6993 = vrot.slane %v6384, %v6992
    %v6994 = vsel %vm5130, %v6993, %v6989
    %v6995 = vlaneseq
    %v6996 = vshrl.u32 %v6995, 7
    %v6997 = vsub.s32 %v5132, %v6996
    %v6998 = vrot.slane %v6387, %v6997
    %v6999 = vsel %vm5137, %v6998, %v6994
    %v7000 = vlaneseq
    %v7001 = vshrl.u32 %v7000, 7
    %v7002 = vsub.s32 %v5139, %v7001
    %v7003 = vrot.slane %v6390, %v7002
    %v7004 = vsel %vm5144, %v7003, %v6999
    %v7005 = vlaneseq
    %v7006 = vshrl.u32 %v7005, 7
    %v7007 = vsub.s32 %v5146, %v7006
    %v7008 = vrot.slane %v6393, %v7007
    %v7009 = vsel %vm5151, %v7008, %v7004
    %v7010 = vlaneseq
    %v7011 = vshrl.u32 %v7010, 7
    %v7012 = vsub.s32 %v5153, %v7011
    %v7013 = vrot.slane %v6396, %v7012
    %v7014 = vsel %vm5158, %v7013, %v7009
    %v7015 = vlaneseq
    %v7016 = vshrl.u32 %v7015, 7
    %v7017 = vsub.s32 %v5160, %v7016
    %v7018 = vrot.slane %v6399, %v7017
    %v7019 = vsel %vm5165, %v7018, %v7014
    %v7020 = vlaneseq
    %v7021 = vshrl.u32 %v7020, 7
    %v7022 = vsub.s32 %v5167, %v7021
    %v7023 = vrot.slane %v6402, %v7022
    %v7024 = vsel %vm5172, %v7023, %v7019
    %v7025 = vlaneseq
    %v7026 = vshrl.u32 %v7025, 7
    %v7027 = vsub.s32 %v5174, %v7026
    %v7028 = vrot.slane %v6405, %v7027
    %v7029 = vsel %vm5179, %v7028, %v7024
    %v7030 = vlaneseq
    %v7031 = vshrl.u32 %v7030, 7
    %v7032 = vsub.s32 %v5181, %v7031
    %v7033 = vrot.slane %v6408, %v7032
    %v7034 = vsel %vm5186, %v7033, %v7029
    %v7035 = vlaneseq
    %v7036 = vshrl.u32 %v7035, 7
    %v7037 = vsub.s32 %v5188, %v7036
    %v7038 = vrot.slane %v6411, %v7037
    %v7039 = vsel %vm5193, %v7038, %v7034
    %v7040 = vlaneseq
    %v7041 = vshrl.u32 %v7040, 7
    %v7042 = vsub.s32 %v5195, %v7041
    %v7043 = vrot.slane %v6414, %v7042
    %v7044 = vsel %vm5200, %v7043, %v7039
    %v7045 = vlaneseq
    %v7046 = vshrl.u32 %v7045, 7
    %v7047 = vsub.s32 %v5202, %v7046
    %v7048 = vrot.slane %v6417, %v7047
    %v7049 = vsel %vm5207, %v7048, %v7044
    %v7050 = vsel %vm5762, %v6575, %v6496
    %v7051 = vsel %vm5764, %v6654, %v7050
    %v7052 = vsel %vm5766, %v6733, %v7051
    %v7053 = vsel %vm5768, %v6812, %v7052
    %v7054 = vsel %vm5770, %v6891, %v7053
    %v7055 = vsel %vm5772, %v6970, %v7054
    %v7056 = vsel %vm5774, %v7049, %v7055
    %s7058 = scalar_lea.vmem [#allocation2], 8
    %7059 = vst [vmem:[%s7058] sm:$0xff] %v7056
    // Predicated region
    $region18: #{tpu_custom_call.1} parent=1 // pred_check
      _
    $region19: #{tpu_custom_call.1} parent=1 // pred_check_branch
      %7061 = sbr.rel (0) target = $region21
    $region20: #{tpu_custom_call.1} parent=1 // pred_region
      %s7063 = ssub.s32 256, 256
      %7064 = vsyncadd [#allocation3], %s7063
      %s7065 = sshll.u32 [#allocation2], 4
      %s7066 = int_to_ptr.vmem [resolvable:$true] %s7065
      %7071 = dma.vmem_to_hbm [thread:$0]  %s7066, 256, %s4, [#allocation3], 128, 128, 8
    $region21: #{tpu_custom_call.1} parent=1 // pred_fallthru
      _
    // Predicated region
    $region22: #{tpu_custom_call.1} parent=1 // pred_check
      _
    $region23: #{tpu_custom_call.1} parent=1 // pred_check_branch
      %7073 = sbr.rel (0) target = $region25
    $region24: #{tpu_custom_call.1} parent=1 // pred_region
      %7074 = dma.done [#allocation3], 256
    $region25: #{tpu_custom_call.1} parent=1 // pred_fallthru
      _
    %7075 = vsyncpa [#allocation3], 1

</llo_original>
